<compile_context>
chip_gen: v6e
topology: v6e:2x2x1
jax: 0.10.0
libtpu: 0.0.40
codegen_flags: <defaults>
</compile_context>

<pallas_src>
import jax
import jax.numpy as jnp
from jax.experimental import pallas as pl
from jax.experimental.pallas import tpu as pltpu

NUM_MODALS = 4  # fixed by the module (image / depth / event / lidar branches)


def _gelu_tanh(x):
    # GELU, tanh approximation (matches torch.nn.GELU(approximate="tanh")).
    c0 = 0.7978845608028654  # sqrt(2/pi)
    return 0.5 * x * (1.0 + jnp.tanh(c0 * (x + 0.044715 * x * x * x)))


def _delta_weight(w, a, b):
    # HiRA effective delta weight in x @ W layout:
    #   torch: delta = fc.weight * (B_w @ A_w);  branch = x @ delta.T
    #   here:  delta.T = fc.weight.T * (A_w.T @ B_w.T) = w * (a @ b)
    return w * jnp.matmul(a, b, precision=jax.lax.Precision.HIGHEST)


def _mlp_fusion_hira_kernel(
    # inputs
    x_ref,      # (M, TILE_N, c)    bf16  (sample dim squeezed)
    msrc_ref,   # (1, M)            f32   modality mask, source layout
    mdst_ref,   # (M, 1)            f32   modality mask, destination layout
    wfc1_ref,   # (c, TILE_H)       bf16  fc1 weight slab
    bfc1_ref,   # (1, TILE_H)       f32
    wfc2_ref,   # (TILE_H, c)       bf16  fc2 weight slab
    bfc2_ref,   # (1, c)            f32
    wg_ref,     # (M, c, M)         bf16  per-modality gate weights
    bg_ref,     # (M, 1, M)         f32
    dw1_ref,    # (M, c, TILE_H)    bf16  HiRA delta slab for fc1 (x @ dW layout)
    dw2_ref,    # (M, TILE_H, c)    bf16  HiRA delta slab for fc2
    # outputs
    out_ref,    # (M, TILE_N, c)    f32   resident across the hidden axis (accumulator)
    # scratch
    w_scr,      # (M, TILE_N, M)    f32   normalized fusion weights (dest, token, src)
):
    M, tn, c = x_ref.shape
    th = wfc1_ref.shape[1]
    k = pl.program_id(2)          # hidden-slab index (innermost, "arbitrary")

    xv = x_ref[...]               # (M, tn, c) bf16
    x_flat = xv.reshape(M * tn, c)

    # ---- routing softmax + normalized fusion weights: once per (sample, token-tile) ----
    @pl.when(k == 0)
    def _():
        logits = jnp.einsum(
            "mtc,mcg->mtg", xv, wg_ref[...], preferred_element_type=jnp.float32
        ) + bg_ref[...]                                        # (M, tn, M)
        logits = logits - jnp.max(logits, axis=-1, keepdims=True)
        e = jnp.exp(logits)
        rw = e * pl.reciprocal(jnp.sum(e, axis=-1, keepdims=True), approx=True)
        wm = rw * msrc_ref[...]                                # mask source modalities
        wm = wm / (jnp.sum(wm, axis=-1, keepdims=True) + 1e-6)  # exact renormalization
        wm = wm * mdst_ref[...][:, :, None]                    # gate destination modality
        w_scr[...] = wm

    w_all = w_scr[...]                                         # (M, tn, M) f32

    # ---- fc1 slab + HiRA fc1 delta slab (batched over modalities) -----------------
    h = jnp.dot(x_flat, wfc1_ref[...], preferred_element_type=jnp.float32)
    h = (h + bfc1_ref[...]).reshape(M, tn, th)                 # (M, tn, th) f32
    l1 = jnp.einsum(
        "mtc,mch->mth", xv, dw1_ref[...], preferred_element_type=jnp.float32
    )
    fused1 = w_all[:, :, 0:1] * l1[0][None]
    for m in range(1, M):
        fused1 = fused1 + w_all[:, :, m:m + 1] * l1[m][None]
    h = h + fused1                                             # single fused value

    # ---- activation + fc2 slab + HiRA fc2 delta slab -------------------------------
    g = _gelu_tanh(h).astype(jnp.bfloat16)                     # (M, tn, th)
    y = jnp.dot(
        g.reshape(M * tn, th), wfc2_ref[...], preferred_element_type=jnp.float32
    ).reshape(M, tn, c)
    l2 = jnp.einsum(
        "mth,mhc->mtc", g, dw2_ref[...], preferred_element_type=jnp.float32
    )
    fused2 = w_all[:, :, 0:1] * l2[0][None]
    for m in range(1, M):
        fused2 = fused2 + w_all[:, :, m:m + 1] * l2[m][None]
    contrib = y + fused2                                       # (M, tn, c) f32

    @pl.when(k == 0)
    def _():
        out_ref[...] = contrib + bfc2_ref[...]

    @pl.when(k != 0)
    def _():
        out_ref[...] = out_ref[...] + contrib


def _pick_tile(dim, requested, preferred, align):
    if requested is None:
        t = dim
        for cand in preferred:
            if dim % cand == 0:
                t = cand
                break
    else:
        t = requested
    assert dim % t == 0, f"tile {t} must divide {dim}"
    assert t == dim or t % align == 0, f"tile {t} must be a multiple of {align}"
    return t


def mlp_fusion_hira(x, params, modality_mask, num_modals=NUM_MODALS,
                    tile_n=None, tile_h=None):
    """x: (bs_m, n, c) f32; modality_mask: (M, B) int. Returns (bs_m, n, c) f32."""
    M = num_modals
    bs_m, n, c = x.shape
    assert bs_m % M == 0
    B = bs_m // M
    hidden = params["w_fc1"].shape[1]

    # Token tile (sweepable; prefer 512/256 to amortize per-step overhead) and
    # hidden slab (512-1024 preferred; bounds weight VMEM independent of hidden).
    tile_n = _pick_tile(n, tile_n, (512, 256, 128), 8)
    tile_h = _pick_tile(hidden, tile_h, (512, 1024, 256, 128), 128)
    nt, nh = n // tile_n, hidden // tile_h

    # Precompute dense HiRA delta weights (f32, HIGHEST), then cast to bf16.
    dw1 = jnp.stack(
        [_delta_weight(params["w_fc1"], params["wa1"][i], params["wb1"][i]) for i in range(M)]
    )  # (M, c, hidden)
    dw2 = jnp.stack(
        [_delta_weight(params["w_fc2"], params["wa2"][i], params["wb2"][i]) for i in range(M)]
    )  # (M, hidden, c)

    bf16 = jnp.bfloat16
    x4 = x.reshape(M, B, n, c).astype(bf16)
    maskf = modality_mask.astype(jnp.float32)          # (M, B)
    mask_src = maskf.T.reshape(B, 1, M)                 # per-sample source-mask row
    mask_dst = maskf.T.reshape(B, M, 1)                 # per-sample destination gate

    grid_spec = pltpu.PrefetchScalarGridSpec(
        num_scalar_prefetch=0,
        grid=(B, nt, nh),
        in_specs=[
            pl.BlockSpec((M, pl.Squeezed(), tile_n, c), lambda j, t, k: (0, j, t, 0)),
            pl.BlockSpec((pl.Squeezed(), 1, M), lambda j, t, k: (j, 0, 0)),
            pl.BlockSpec((pl.Squeezed(), M, 1), lambda j, t, k: (j, 0, 0)),
            pl.BlockSpec((c, tile_h), lambda j, t, k: (0, k)),
            pl.BlockSpec((1, tile_h), lambda j, t, k: (0, k)),
            pl.BlockSpec((tile_h, c), lambda j, t, k: (k, 0)),
            pl.BlockSpec((1, c), lambda j, t, k: (0, 0)),
            pl.BlockSpec((M, c, M), lambda j, t, k: (0, 0, 0)),
            pl.BlockSpec((M, 1, M), lambda j, t, k: (0, 0, 0)),
            pl.BlockSpec((M, c, tile_h), lambda j, t, k: (0, 0, k)),
            pl.BlockSpec((M, tile_h, c), lambda j, t, k: (0, k, 0)),
        ],
        out_specs=pl.BlockSpec((M, pl.Squeezed(), tile_n, c), lambda j, t, k: (0, j, t, 0)),
        scratch_shapes=[pltpu.VMEM((M, tile_n, M), jnp.float32)],
    )

    # Derive the VMEM limit from the actual chip (75% of capacity: ~48 MiB on v7x,
    # ~96 MiB on v5e/v6e) instead of hardcoding 64 MiB.
    try:
        vmem_cap = pltpu.get_tpu_info().vmem_capacity_bytes
    except Exception:
        vmem_cap = 64 * 1024 * 1024
    vmem_limit = int(vmem_cap * 3 // 4)

    out = pl.pallas_call(
        _mlp_fusion_hira_kernel,
        grid_spec=grid_spec,
        out_shape=jax.ShapeDtypeStruct((M, B, n, c), jnp.float32),
        compiler_params=pltpu.CompilerParams(
            dimension_semantics=("parallel", "parallel", "arbitrary"),
            vmem_limit_bytes=vmem_limit,
        ),
    )(
        x4, mask_src, mask_dst,
        params["w_fc1"].astype(bf16), params["b_fc1"].astype(jnp.float32),
        params["w_fc2"].astype(bf16), params["b_fc2"].astype(jnp.float32),
        params["wg"].astype(bf16), params["bg"].astype(jnp.float32),
        dw1.astype(bf16), dw2.astype(bf16),
    )
    return out.reshape(bs_m, n, c)


# ----------------------- pure-JAX reference (for checking) -----------------------
def _bf16_mm(a, b):
    # Emulates the kernel's bf16-input / f32-accumulate MXU matmuls.
    a = a.astype(jnp.bfloat16).astype(jnp.float32)
    b = b.astype(jnp.bfloat16).astype(jnp.float32)
    return jnp.matmul(a, b, precision=jax.lax.Precision.HIGHEST)


def reference(x, p, mask, M=NUM_MODALS):
    bs_m, n, c = x.shape
    B = bs_m // M
    hidden = p["w_fc1"].shape[1]
    maskf = mask.astype(jnp.float32)

    x1 = _bf16_mm(x, p["w_fc1"]) + p["b_fc1"]             # mlp.fc1
    x1 = x1.reshape(M, B, n, hidden)
    x4 = x.reshape(M, B, n, c)

    rw, l1 = [], []
    for i in range(M):
        logits = _bf16_mm(x4[i].reshape(-1, c), p["wg"][i]) + p["bg"][i].reshape(-1)
        rw.append(jax.nn.softmax(logits, axis=-1).reshape(B, n, M))
        dw1_i = _delta_weight(p["w_fc1"], p["wa1"][i], p["wb1"][i])
        l1.append(_bf16_mm(x4[i], dw1_i))
    rw = jnp.stack(rw)
    l1 = jnp.stack(l1)

    def fuse(lora, like):
        fused = jnp.zeros_like(like)
        for i in range(M):
            for j in range(B):
                w = rw[i, j] * maskf[:, j][None, :]
                w = w / (w.sum(-1, keepdims=True) + 1e-6)
                val = (lora[:, j] * jnp.transpose(w)[:, :, None]).sum(0)
                fused = fused.at[i, j].set(jnp.where(mask[i, j] == 1, val, 0.0))
        return fused

    x1 = x1 + fuse(l1, x1)
    g = _gelu_tanh(x1)                                     # mlp.act (drop = identity)
    x2 = _bf16_mm(g, p["w_fc2"]) + p["b_fc2"]              # mlp.fc2
    l2 = jnp.stack(
        [_bf16_mm(g[i], _delta_weight(p["w_fc2"], p["wa2"][i], p["wb2"][i]))
         for i in range(M)]
    )
    x2 = x2 + fuse(l2, x2)
    return x2.reshape(bs_m, n, c)


# ------------------------------------ main ----------------------------------------
if __name__ == "__main__":
    M = NUM_MODALS
    B, n, c = 2, 16, 32
    hidden, r = 8 * c, 4          # hidden=256 -> two hidden slabs with tile_h=128
    bs_m = M * B

    key = jax.random.PRNGKey(0)
    ks = jax.random.split(key, 12)

    params = {
        "w_fc1": 0.1 * jax.random.normal(ks[0], (c, hidden), jnp.float32),
        "b_fc1": 0.1 * jax.random.normal(ks[1], (1, hidden), jnp.float32),
        "w_fc2": 0.1 * jax.random.normal(ks[2], (hidden, c), jnp.float32),
        "b_fc2": 0.1 * jax.random.normal(ks[3], (1, c), jnp.float32),
        "wg":    0.1 * jax.random.normal(ks[4], (M, c, M), jnp.float32),
        "bg":    0.1 * jax.random.normal(ks[5], (M, 1, M), jnp.float32),
        "wa1":   0.1 * jax.random.normal(ks[6], (M, c, r), jnp.float32),
        "wb1":   0.1 * jax.random.normal(ks[7], (M, r, hidden), jnp.float32),
        "wa2":   0.1 * jax.random.normal(ks[8], (M, hidden, r), jnp.float32),
        "wb2":   0.1 * jax.random.normal(ks[9], (M, r, c), jnp.float32),
    }

    x = jax.random.normal(ks[10], (bs_m, n, c), jnp.float32)
    # modality_mask[i, j] == 1 -> modality i active for sample j (has inactive slots).
    modality_mask = jnp.array([[1, 1], [1, 0], [0, 1], [1, 1]], dtype=jnp.int32)

    # tile_n=8, tile_h=128 -> grid (B=2, nt=2, nh=2) exercises token tiling AND the
    # hidden-slab accumulation path.
    out = jax.block_until_ready(
        mlp_fusion_hira(x, params, modality_mask, M, tile_n=8, tile_h=128)
    )
    ref = jax.block_until_ready(reference(x, params, modality_mask, M))

    max_err = float(jnp.max(jnp.abs(out - ref)))
    assert out.shape == (bs_m, n, c)
    assert max_err < 1e-2, f"mismatch vs reference: {max_err}"

    print("KERNEL_OK")
</pallas_src>

<mosaic_0001>
module attributes {stable_mosaic.version = 11 : i64} {
  func.func @_mlp_fusion_hira_kernel(%arg0: i32, %arg1: i32, %arg2: i32, %arg3: memref<4x1x8x32xbf16, #tpu.memory_space<vmem>>, %arg4: memref<1x1x4xf32, #tpu.memory_space<vmem>>, %arg5: memref<1x4x1xf32, #tpu.memory_space<vmem>>, %arg6: memref<32x128xbf16, #tpu.memory_space<vmem>>, %arg7: memref<1x128xf32, #tpu.memory_space<vmem>>, %arg8: memref<128x32xbf16, #tpu.memory_space<vmem>>, %arg9: memref<1x32xf32, #tpu.memory_space<vmem>>, %arg10: memref<4x32x4xbf16, #tpu.memory_space<vmem>>, %arg11: memref<4x1x4xf32, #tpu.memory_space<vmem>>, %arg12: memref<4x32x128xbf16, #tpu.memory_space<vmem>>, %arg13: memref<4x128x32xbf16, #tpu.memory_space<vmem>>, %arg14: memref<4x1x8x32xf32, #tpu.memory_space<vmem>>, %arg15: memref<4x8x4xf32, #tpu.memory_space<vmem>>) attributes {dimension_semantics = [#tpu.dimension_semantics<parallel>, #tpu.dimension_semantics<parallel>, #tpu.dimension_semantics<arbitrary>], iteration_bounds = array<i64: 2, 2, 2>, scalar_prefetch = 0 : i64, scratch_operands = 1 : i64, tpu.core_type = #tpu.core_type<tc>, window_params = [{transform_indices = @transform_0, window_bounds = array<i64: 4, 1, 8, 32>}, {transform_indices = @transform_1, window_bounds = array<i64: 1, 1, 4>}, {transform_indices = @transform_2, window_bounds = array<i64: 1, 4, 1>}, {transform_indices = @transform_3, window_bounds = array<i64: 32, 128>}, {transform_indices = @transform_4, window_bounds = array<i64: 1, 128>}, {transform_indices = @transform_5, window_bounds = array<i64: 128, 32>}, {pipeline_mode = #tpu.pipeline_mode<synchronous>, transform_indices = @transform_6, window_bounds = array<i64: 1, 32>}, {pipeline_mode = #tpu.pipeline_mode<synchronous>, transform_indices = @transform_7, window_bounds = array<i64: 4, 32, 4>}, {pipeline_mode = #tpu.pipeline_mode<synchronous>, transform_indices = @transform_8, window_bounds = array<i64: 4, 1, 4>}, {transform_indices = @transform_9, window_bounds = array<i64: 4, 32, 128>}, {transform_indices = @transform_10, window_bounds = array<i64: 4, 128, 32>}, {transform_indices = @transform_11, window_bounds = array<i64: 4, 1, 8, 32>}]} {
    %c0 = arith.constant 0 : index
    %c0_0 = arith.constant 0 : index
    %c0_1 = arith.constant 0 : index
    %c0_2 = arith.constant 0 : index
    %0 = vector.load %arg3[%c0, %c0_0, %c0_1, %c0_2] : memref<4x1x8x32xbf16, #tpu.memory_space<vmem>>, vector<4x1x8x32xbf16>
    %1 = vector.shape_cast %0 : vector<4x1x8x32xbf16> to vector<4x8x32xbf16>
    %2 = vector.shape_cast %1 : vector<4x8x32xbf16> to vector<32x32xbf16>
    %c0_i32 = arith.constant 0 : i32
    %3 = arith.cmpi eq, %arg2, %c0_i32 : i32
    %4 = arith.extui %3 : i1 to i32
    %c0_i32_3 = arith.constant 0 : i32
    %5 = arith.cmpi ne, %4, %c0_i32_3 : i32
    scf.if %5 {
      %c0_30 = arith.constant 0 : index
      %c0_31 = arith.constant 0 : index
      %c0_32 = arith.constant 0 : index
      %105 = vector.load %arg10[%c0_30, %c0_31, %c0_32] : memref<4x32x4xbf16, #tpu.memory_space<vmem>>, vector<4x32x4xbf16>
      "tpu.trace_start"() <{level = 10 : i32, message = "mtc,mcg->mtg"}> : () -> ()
      %cst_33 = arith.constant dense<0.000000e+00> : vector<4x8x4xf32>
      %106 = tpu.matmul %1, %105, %cst_33 {dimension_numbers = #tpu.dot_dimension_numbers<[2], [1], [1], [2], [0, 0, 0, 1, 1, 2], [0], [0]>} : vector<4x8x32xbf16>, vector<4x32x4xbf16>, vector<4x8x4xf32> -> vector<4x8x4xf32>
      "tpu.trace_stop"() : () -> ()
      %c0_34 = arith.constant 0 : index
      %c0_35 = arith.constant 0 : index
      %c0_36 = arith.constant 0 : index
      %107 = vector.load %arg11[%c0_34, %c0_35, %c0_36] : memref<4x1x4xf32, #tpu.memory_space<vmem>>, vector<4x1x4xf32>
      %108 = vector.broadcast %107 : vector<4x1x4xf32> to vector<4x8x4xf32>
      %109 = arith.addf %106, %108 : vector<4x8x4xf32>
      %cst_37 = arith.constant dense<0xFF800000> : vector<4x8xf32>
      %110 = vector.multi_reduction <maximumf>, %109, %cst_37 [2] : vector<4x8x4xf32> to vector<4x8xf32>
      %111 = vector.shape_cast %110 : vector<4x8xf32> to vector<4x8x1xf32>
      %112 = vector.broadcast %111 : vector<4x8x1xf32> to vector<4x8x4xf32>
      %113 = arith.subf %109, %112 : vector<4x8x4xf32>
      %114 = math.exp %113 : vector<4x8x4xf32>
      %cst_38 = arith.constant dense<0.000000e+00> : vector<4x8xf32>
      %115 = vector.multi_reduction <add>, %114, %cst_38 [2] : vector<4x8x4xf32> to vector<4x8xf32>
      %116 = vector.shape_cast %115 : vector<4x8xf32> to vector<4x8x1xf32>
      %117 = tpu.reciprocal %116 {approx = true} : vector<4x8x1xf32> -> vector<4x8x1xf32>
      %118 = vector.broadcast %117 : vector<4x8x1xf32> to vector<4x8x4xf32>
      %119 = arith.mulf %114, %118 : vector<4x8x4xf32>
      %c0_39 = arith.constant 0 : index
      %c0_40 = arith.constant 0 : index
      %c0_41 = arith.constant 0 : index
      %120 = vector.load %arg4[%c0_39, %c0_40, %c0_41] : memref<1x1x4xf32, #tpu.memory_space<vmem>>, vector<1x1x4xf32>
      %121 = vector.shape_cast %120 : vector<1x1x4xf32> to vector<1x4xf32>
      %122 = vector.shape_cast %121 : vector<1x4xf32> to vector<1x1x4xf32>
      %123 = vector.broadcast %122 : vector<1x1x4xf32> to vector<4x8x4xf32>
      %124 = arith.mulf %119, %123 : vector<4x8x4xf32>
      %cst_42 = arith.constant dense<0.000000e+00> : vector<4x8xf32>
      %125 = vector.multi_reduction <add>, %124, %cst_42 [2] : vector<4x8x4xf32> to vector<4x8xf32>
      %126 = vector.shape_cast %125 : vector<4x8xf32> to vector<4x8x1xf32>
      %cst_43 = arith.constant 9.99999997E-7 : f32
      %127 = vector.broadcast %cst_43 : f32 to vector<4x8x1xf32>
      %128 = arith.addf %126, %127 : vector<4x8x1xf32>
      %129 = vector.broadcast %128 : vector<4x8x1xf32> to vector<4x8x4xf32>
      %130 = arith.divf %124, %129 : vector<4x8x4xf32>
      %c0_44 = arith.constant 0 : index
      %c0_45 = arith.constant 0 : index
      %c0_46 = arith.constant 0 : index
      %131 = vector.load %arg5[%c0_44, %c0_45, %c0_46] : memref<1x4x1xf32, #tpu.memory_space<vmem>>, vector<1x4x1xf32>
      %132 = vector.shape_cast %131 : vector<1x4x1xf32> to vector<4x1xf32>
      %133 = vector.shape_cast %132 : vector<4x1xf32> to vector<4x1x1xf32>
      %134 = vector.broadcast %133 : vector<4x1x1xf32> to vector<4x8x4xf32>
      %135 = arith.mulf %130, %134 : vector<4x8x4xf32>
      %c0_47 = arith.constant 0 : index
      %c0_48 = arith.constant 0 : index
      %c0_49 = arith.constant 0 : index
      %136 = vector.load %arg15[%c0_47, %c0_48, %c0_49] : memref<4x8x4xf32, #tpu.memory_space<vmem>>, vector<4x8x4xf32>
      tpu.vector_store %arg15[%c0_47, %c0_48, %c0_49], %135 {strides = array<i32>} : memref<4x8x4xf32, #tpu.memory_space<vmem>>, vector<4x8x4xf32>,
    } else {
    }
    %c0_4 = arith.constant 0 : index
    %c0_5 = arith.constant 0 : index
    %c0_6 = arith.constant 0 : index
    %6 = vector.load %arg15[%c0_4, %c0_5, %c0_6] : memref<4x8x4xf32, #tpu.memory_space<vmem>>, vector<4x8x4xf32>
    %c0_7 = arith.constant 0 : index
    %c0_8 = arith.constant 0 : index
    %7 = vector.load %arg6[%c0_7, %c0_8] : memref<32x128xbf16, #tpu.memory_space<vmem>>, vector<32x128xbf16>
    %cst = arith.constant dense<0.000000e+00> : vector<32x128xf32>
    %8 = tpu.matmul %2, %7, %cst {dimension_numbers = #tpu.dot_dimension_numbers<[1], [0], [0], [1], [0, 0, 1, 1], [], []>} : vector<32x32xbf16>, vector<32x128xbf16>, vector<32x128xf32> -> vector<32x128xf32>
    %c0_9 = arith.constant 0 : index
    %c0_10 = arith.constant 0 : index
    %9 = vector.load %arg7[%c0_9, %c0_10] : memref<1x128xf32, #tpu.memory_space<vmem>>, vector<1x128xf32>
    %10 = vector.broadcast %9 : vector<1x128xf32> to vector<32x128xf32>
    %11 = arith.addf %8, %10 : vector<32x128xf32>
    %12 = vector.shape_cast %11 : vector<32x128xf32> to vector<4x8x128xf32>
    %c0_11 = arith.constant 0 : index
    %c0_12 = arith.constant 0 : index
    %c0_13 = arith.constant 0 : index
    %13 = vector.load %arg12[%c0_11, %c0_12, %c0_13] : memref<4x32x128xbf16, #tpu.memory_space<vmem>>, vector<4x32x128xbf16>
    "tpu.trace_start"() <{level = 10 : i32, message = "mtc,mch->mth"}> : () -> ()
    %cst_14 = arith.constant dense<0.000000e+00> : vector<4x8x128xf32>
    %14 = tpu.matmul %1, %13, %cst_14 {dimension_numbers = #tpu.dot_dimension_numbers<[2], [1], [1], [2], [0, 0, 0, 1, 1, 2], [0], [0]>} : vector<4x8x32xbf16>, vector<4x32x128xbf16>, vector<4x8x128xf32> -> vector<4x8x128xf32>
    "tpu.trace_stop"() : () -> ()
    %15 = vector.extract_strided_slice %6 {offsets = [0, 0, 0], sizes = [4, 8, 1], strides = [1, 1, 1]} : vector<4x8x4xf32> to vector<4x8x1xf32>
    %16 = vector.extract_strided_slice %14 {offsets = [0, 0, 0], sizes = [1, 8, 128], strides = [1, 1, 1]} : vector<4x8x128xf32> to vector<1x8x128xf32>
    %17 = vector.shape_cast %16 : vector<1x8x128xf32> to vector<8x128xf32>
    %18 = vector.shape_cast %17 : vector<8x128xf32> to vector<1x8x128xf32>
    %19 = vector.broadcast %15 : vector<4x8x1xf32> to vector<4x8x128xf32>
    %20 = vector.broadcast %18 : vector<1x8x128xf32> to vector<4x8x128xf32>
    %21 = arith.mulf %19, %20 : vector<4x8x128xf32>
    %22 = vector.extract_strided_slice %6 {offsets = [0, 0, 1], sizes = [4, 8, 1], strides = [1, 1, 1]} : vector<4x8x4xf32> to vector<4x8x1xf32>
    %23 = vector.extract_strided_slice %14 {offsets = [1, 0, 0], sizes = [1, 8, 128], strides = [1, 1, 1]} : vector<4x8x128xf32> to vector<1x8x128xf32>
    %24 = vector.shape_cast %23 : vector<1x8x128xf32> to vector<8x128xf32>
    %25 = vector.shape_cast %24 : vector<8x128xf32> to vector<1x8x128xf32>
    %26 = vector.broadcast %22 : vector<4x8x1xf32> to vector<4x8x128xf32>
    %27 = vector.broadcast %25 : vector<1x8x128xf32> to vector<4x8x128xf32>
    %28 = arith.mulf %26, %27 : vector<4x8x128xf32>
    %29 = arith.addf %21, %28 : vector<4x8x128xf32>
    %30 = vector.extract_strided_slice %6 {offsets = [0, 0, 2], sizes = [4, 8, 1], strides = [1, 1, 1]} : vector<4x8x4xf32> to vector<4x8x1xf32>
    %31 = vector.extract_strided_slice %14 {offsets = [2, 0, 0], sizes = [1, 8, 128], strides = [1, 1, 1]} : vector<4x8x128xf32> to vector<1x8x128xf32>
    %32 = vector.shape_cast %31 : vector<1x8x128xf32> to vector<8x128xf32>
    %33 = vector.shape_cast %32 : vector<8x128xf32> to vector<1x8x128xf32>
    %34 = vector.broadcast %30 : vector<4x8x1xf32> to vector<4x8x128xf32>
    %35 = vector.broadcast %33 : vector<1x8x128xf32> to vector<4x8x128xf32>
    %36 = arith.mulf %34, %35 : vector<4x8x128xf32>
    %37 = arith.addf %29, %36 : vector<4x8x128xf32>
    %38 = vector.extract_strided_slice %6 {offsets = [0, 0, 3], sizes = [4, 8, 1], strides = [1, 1, 1]} : vector<4x8x4xf32> to vector<4x8x1xf32>
    %39 = vector.extract_strided_slice %14 {offsets = [3, 0, 0], sizes = [1, 8, 128], strides = [1, 1, 1]} : vector<4x8x128xf32> to vector<1x8x128xf32>
    %40 = vector.shape_cast %39 : vector<1x8x128xf32> to vector<8x128xf32>
    %41 = vector.shape_cast %40 : vector<8x128xf32> to vector<1x8x128xf32>
    %42 = vector.broadcast %38 : vector<4x8x1xf32> to vector<4x8x128xf32>
    %43 = vector.broadcast %41 : vector<1x8x128xf32> to vector<4x8x128xf32>
    %44 = arith.mulf %42, %43 : vector<4x8x128xf32>
    %45 = arith.addf %37, %44 : vector<4x8x128xf32>
    %46 = arith.addf %12, %45 : vector<4x8x128xf32>
    %cst_15 = arith.constant 5.000000e-01 : f32
    %47 = vector.broadcast %cst_15 : f32 to vector<4x8x128xf32>
    %48 = arith.mulf %47, %46 : vector<4x8x128xf32>
    %cst_16 = arith.constant 4.471500e-02 : f32
    %49 = vector.broadcast %cst_16 : f32 to vector<4x8x128xf32>
    %50 = arith.mulf %49, %46 : vector<4x8x128xf32>
    %51 = arith.mulf %50, %46 : vector<4x8x128xf32>
    %52 = arith.mulf %51, %46 : vector<4x8x128xf32>
    %53 = arith.addf %46, %52 : vector<4x8x128xf32>
    %cst_17 = arith.constant 0.797884583 : f32
    %54 = vector.broadcast %cst_17 : f32 to vector<4x8x128xf32>
    %55 = arith.mulf %54, %53 : vector<4x8x128xf32>
    %56 = math.tanh %55 : vector<4x8x128xf32>
    %cst_18 = arith.constant 1.000000e+00 : f32
    %57 = vector.broadcast %cst_18 : f32 to vector<4x8x128xf32>
    %58 = arith.addf %57, %56 : vector<4x8x128xf32>
    %59 = arith.mulf %48, %58 : vector<4x8x128xf32>
    %60 = arith.truncf %59 : vector<4x8x128xf32> to vector<4x8x128xbf16>
    %61 = vector.shape_cast %60 : vector<4x8x128xbf16> to vector<32x128xbf16>
    %c0_19 = arith.constant 0 : index
    %c0_20 = arith.constant 0 : index
    %62 = vector.load %arg8[%c0_19, %c0_20] : memref<128x32xbf16, #tpu.memory_space<vmem>>, vector<128x32xbf16>
    %cst_21 = arith.constant dense<0.000000e+00> : vector<32x32xf32>
    %63 = tpu.matmul %61, %62, %cst_21 {dimension_numbers = #tpu.dot_dimension_numbers<[1], [0], [0], [1], [0, 0, 1, 1], [], []>} : vector<32x128xbf16>, vector<128x32xbf16>, vector<32x32xf32> -> vector<32x32xf32>
    %64 = vector.shape_cast %63 : vector<32x32xf32> to vector<4x8x32xf32>
    %c0_22 = arith.constant 0 : index
    %c0_23 = arith.constant 0 : index
    %c0_24 = arith.constant 0 : index
    %65 = vector.load %arg13[%c0_22, %c0_23, %c0_24] : memref<4x128x32xbf16, #tpu.memory_space<vmem>>, vector<4x128x32xbf16>
    "tpu.trace_start"() <{level = 10 : i32, message = "mth,mhc->mtc"}> : () -> ()
    %cst_25 = arith.constant dense<0.000000e+00> : vector<4x8x32xf32>
    %66 = tpu.matmul %60, %65, %cst_25 {dimension_numbers = #tpu.dot_dimension_numbers<[2], [1], [1], [2], [0, 0, 0, 1, 1, 2], [0], [0]>} : vector<4x8x128xbf16>, vector<4x128x32xbf16>, vector<4x8x32xf32> -> vector<4x8x32xf32>
    "tpu.trace_stop"() : () -> ()
    %67 = vector.extract_strided_slice %6 {offsets = [0, 0, 0], sizes = [4, 8, 1], strides = [1, 1, 1]} : vector<4x8x4xf32> to vector<4x8x1xf32>
    %68 = vector.extract_strided_slice %66 {offsets = [0, 0, 0], sizes = [1, 8, 32], strides = [1, 1, 1]} : vector<4x8x32xf32> to vector<1x8x32xf32>
    %69 = vector.shape_cast %68 : vector<1x8x32xf32> to vector<8x32xf32>
    %70 = vector.shape_cast %69 : vector<8x32xf32> to vector<1x8x32xf32>
    %71 = vector.broadcast %67 : vector<4x8x1xf32> to vector<4x8x32xf32>
    %72 = vector.broadcast %70 : vector<1x8x32xf32> to vector<4x8x32xf32>
    %73 = arith.mulf %71, %72 : vector<4x8x32xf32>
    %74 = vector.extract_strided_slice %6 {offsets = [0, 0, 1], sizes = [4, 8, 1], strides = [1, 1, 1]} : vector<4x8x4xf32> to vector<4x8x1xf32>
    %75 = vector.extract_strided_slice %66 {offsets = [1, 0, 0], sizes = [1, 8, 32], strides = [1, 1, 1]} : vector<4x8x32xf32> to vector<1x8x32xf32>
    %76 = vector.shape_cast %75 : vector<1x8x32xf32> to vector<8x32xf32>
    %77 = vector.shape_cast %76 : vector<8x32xf32> to vector<1x8x32xf32>
    %78 = vector.broadcast %74 : vector<4x8x1xf32> to vector<4x8x32xf32>
    %79 = vector.broadcast %77 : vector<1x8x32xf32> to vector<4x8x32xf32>
    %80 = arith.mulf %78, %79 : vector<4x8x32xf32>
    %81 = arith.addf %73, %80 : vector<4x8x32xf32>
    %82 = vector.extract_strided_slice %6 {offsets = [0, 0, 2], sizes = [4, 8, 1], strides = [1, 1, 1]} : vector<4x8x4xf32> to vector<4x8x1xf32>
    %83 = vector.extract_strided_slice %66 {offsets = [2, 0, 0], sizes = [1, 8, 32], strides = [1, 1, 1]} : vector<4x8x32xf32> to vector<1x8x32xf32>
    %84 = vector.shape_cast %83 : vector<1x8x32xf32> to vector<8x32xf32>
    %85 = vector.shape_cast %84 : vector<8x32xf32> to vector<1x8x32xf32>
    %86 = vector.broadcast %82 : vector<4x8x1xf32> to vector<4x8x32xf32>
    %87 = vector.broadcast %85 : vector<1x8x32xf32> to vector<4x8x32xf32>
    %88 = arith.mulf %86, %87 : vector<4x8x32xf32>
    %89 = arith.addf %81, %88 : vector<4x8x32xf32>
    %90 = vector.extract_strided_slice %6 {offsets = [0, 0, 3], sizes = [4, 8, 1], strides = [1, 1, 1]} : vector<4x8x4xf32> to vector<4x8x1xf32>
    %91 = vector.extract_strided_slice %66 {offsets = [3, 0, 0], sizes = [1, 8, 32], strides = [1, 1, 1]} : vector<4x8x32xf32> to vector<1x8x32xf32>
    %92 = vector.shape_cast %91 : vector<1x8x32xf32> to vector<8x32xf32>
    %93 = vector.shape_cast %92 : vector<8x32xf32> to vector<1x8x32xf32>
    %94 = vector.broadcast %90 : vector<4x8x1xf32> to vector<4x8x32xf32>
    %95 = vector.broadcast %93 : vector<1x8x32xf32> to vector<4x8x32xf32>
    %96 = arith.mulf %94, %95 : vector<4x8x32xf32>
    %97 = arith.addf %89, %96 : vector<4x8x32xf32>
    %98 = arith.addf %64, %97 : vector<4x8x32xf32>
    %c0_i32_26 = arith.constant 0 : i32
    %99 = arith.cmpi eq, %arg2, %c0_i32_26 : i32
    %100 = arith.extui %99 : i1 to i32
    %c0_i32_27 = arith.constant 0 : i32
    %101 = arith.cmpi ne, %100, %c0_i32_27 : i32
    scf.if %101 {
      %c0_30 = arith.constant 0 : index
      %c0_31 = arith.constant 0 : index
      %105 = vector.load %arg9[%c0_30, %c0_31] : memref<1x32xf32, #tpu.memory_space<vmem>>, vector<1x32xf32>
      %106 = vector.shape_cast %105 : vector<1x32xf32> to vector<1x1x32xf32>
      %107 = vector.broadcast %106 : vector<1x1x32xf32> to vector<4x8x32xf32>
      %108 = arith.addf %98, %107 : vector<4x8x32xf32>
      %c0_32 = arith.constant 0 : index
      %c0_33 = arith.constant 0 : index
      %c0_34 = arith.constant 0 : index
      %c0_35 = arith.constant 0 : index
      %109 = vector.load %arg14[%c0_32, %c0_33, %c0_34, %c0_35] : memref<4x1x8x32xf32, #tpu.memory_space<vmem>>, vector<4x1x8x32xf32>
      %110 = vector.shape_cast %109 : vector<4x1x8x32xf32> to vector<4x8x32xf32>
      %111 = vector.shape_cast %108 : vector<4x8x32xf32> to vector<4x1x8x32xf32>
      tpu.vector_store %arg14[%c0_32, %c0_33, %c0_34, %c0_35], %111 {strides = array<i32>} : memref<4x1x8x32xf32, #tpu.memory_space<vmem>>, vector<4x1x8x32xf32>,
    } else {
    }
    %c0_i32_28 = arith.constant 0 : i32
    %102 = arith.cmpi ne, %arg2, %c0_i32_28 : i32
    %103 = arith.extui %102 : i1 to i32
    %c0_i32_29 = arith.constant 0 : i32
    %104 = arith.cmpi ne, %103, %c0_i32_29 : i32
    scf.if %104 {
      %c0_30 = arith.constant 0 : index
      %c0_31 = arith.constant 0 : index
      %c0_32 = arith.constant 0 : index
      %c0_33 = arith.constant 0 : index
      %105 = vector.load %arg14[%c0_30, %c0_31, %c0_32, %c0_33] : memref<4x1x8x32xf32, #tpu.memory_space<vmem>>, vector<4x1x8x32xf32>
      %106 = vector.shape_cast %105 : vector<4x1x8x32xf32> to vector<4x8x32xf32>
      %107 = arith.addf %106, %98 : vector<4x8x32xf32>
      %c0_34 = arith.constant 0 : index
      %c0_35 = arith.constant 0 : index
      %c0_36 = arith.constant 0 : index
      %c0_37 = arith.constant 0 : index
      %108 = vector.load %arg14[%c0_34, %c0_35, %c0_36, %c0_37] : memref<4x1x8x32xf32, #tpu.memory_space<vmem>>, vector<4x1x8x32xf32>
      %109 = vector.shape_cast %108 : vector<4x1x8x32xf32> to vector<4x8x32xf32>
      %110 = vector.shape_cast %107 : vector<4x8x32xf32> to vector<4x1x8x32xf32>
      tpu.vector_store %arg14[%c0_34, %c0_35, %c0_36, %c0_37], %110 {strides = array<i32>} : memref<4x1x8x32xf32, #tpu.memory_space<vmem>>, vector<4x1x8x32xf32>,
    } else {
    }
    return
  }
  func.func @transform_0(%arg0: i32, %arg1: i32, %arg2: i32) -> (i32, i32, i32, i32) {
    %c0_i32 = arith.constant 0 : i32
    %c0_i32_0 = arith.constant 0 : i32
    %c0_i32_1 = arith.constant 0 : i32
    return %c0_i32, %arg0, %arg1, %c0_i32_0 : i32, i32, i32, i32
  }
  func.func @transform_1(%arg0: i32, %arg1: i32, %arg2: i32) -> (i32, i32, i32) {
    %c0_i32 = arith.constant 0 : i32
    %c0_i32_0 = arith.constant 0 : i32
    %c0_i32_1 = arith.constant 0 : i32
    return %arg0, %c0_i32, %c0_i32_0 : i32, i32, i32
  }
  func.func @transform_2(%arg0: i32, %arg1: i32, %arg2: i32) -> (i32, i32, i32) {
    %c0_i32 = arith.constant 0 : i32
    %c0_i32_0 = arith.constant 0 : i32
    %c0_i32_1 = arith.constant 0 : i32
    return %arg0, %c0_i32, %c0_i32_0 : i32, i32, i32
  }
  func.func @transform_3(%arg0: i32, %arg1: i32, %arg2: i32) -> (i32, i32) {
    %c0_i32 = arith.constant 0 : i32
    %c0_i32_0 = arith.constant 0 : i32
    return %c0_i32, %arg2 : i32, i32
  }
  func.func @transform_4(%arg0: i32, %arg1: i32, %arg2: i32) -> (i32, i32) {
    %c0_i32 = arith.constant 0 : i32
    %c0_i32_0 = arith.constant 0 : i32
    return %c0_i32, %arg2 : i32, i32
  }
  func.func @transform_5(%arg0: i32, %arg1: i32, %arg2: i32) -> (i32, i32) {
    %c0_i32 = arith.constant 0 : i32
    %c0_i32_0 = arith.constant 0 : i32
    return %arg2, %c0_i32 : i32, i32
  }
  func.func @transform_6(%arg0: i32, %arg1: i32, %arg2: i32) -> (i32, i32) {
    %c0_i32 = arith.constant 0 : i32
    %c0_i32_0 = arith.constant 0 : i32
    %c0_i32_1 = arith.constant 0 : i32
    return %c0_i32, %c0_i32_0 : i32, i32
  }
  func.func @transform_7(%arg0: i32, %arg1: i32, %arg2: i32) -> (i32, i32, i32) {
    %c0_i32 = arith.constant 0 : i32
    %c0_i32_0 = arith.constant 0 : i32
    %c0_i32_1 = arith.constant 0 : i32
    %c0_i32_2 = arith.constant 0 : i32
    return %c0_i32, %c0_i32_0, %c0_i32_1 : i32, i32, i32
  }
  func.func @transform_8(%arg0: i32, %arg1: i32, %arg2: i32) -> (i32, i32, i32) {
    %c0_i32 = arith.constant 0 : i32
    %c0_i32_0 = arith.constant 0 : i32
    %c0_i32_1 = arith.constant 0 : i32
    %c0_i32_2 = arith.constant 0 : i32
    return %c0_i32, %c0_i32_0, %c0_i32_1 : i32, i32, i32
  }
  func.func @transform_9(%arg0: i32, %arg1: i32, %arg2: i32) -> (i32, i32, i32) {
    %c0_i32 = arith.constant 0 : i32
    %c0_i32_0 = arith.constant 0 : i32
    %c0_i32_1 = arith.constant 0 : i32
    return %c0_i32, %c0_i32_0, %arg2 : i32, i32, i32
  }
  func.func @transform_10(%arg0: i32, %arg1: i32, %arg2: i32) -> (i32, i32, i32) {
    %c0_i32 = arith.constant 0 : i32
    %c0_i32_0 = arith.constant 0 : i32
    %c0_i32_1 = arith.constant 0 : i32
    return %c0_i32, %arg2, %c0_i32_0 : i32, i32, i32
  }
  func.func @transform_11(%arg0: i32, %arg1: i32, %arg2: i32) -> (i32, i32, i32, i32) {
    %c0_i32 = arith.constant 0 : i32
    %c0_i32_0 = arith.constant 0 : i32
    %c0_i32_1 = arith.constant 0 : i32
    return %c0_i32, %arg0, %arg1, %c0_i32_0 : i32, i32, i32, i32
  }
}

</mosaic_0001>

<llo_original>
// kernel: tpu_custom_call.1
$region0: #{tpu_custom_call.1}
  #allocation0 [shape = 'u32[]', space=smem, size = 0x4, offset = 0x4, fixed_abs, tag = 'smem constant byte address 0x4 - core index']
  #allocation1 [shape = 'u32[144,128]{1,0:T(1,128)}', space=vmem, size = 0x12000, scoped, tag = 'internal scratch']
  #allocation2 [shape = 'f32[4,8,4]{2,1,0:T(8,128)}', space=vmem, size = 0x4000, scoped, tag = 'scratch operand']
  %s0 = inlined_call_operand.vmem [shape: bf16[4,2,16,32], index: 0, kind: input, shape index: {}]
  %s1 = inlined_call_operand.vmem [shape: f32[2,1,4], index: 1, kind: input, shape index: {}]
  %s2 = inlined_call_operand.vmem [shape: f32[2,4,1], index: 2, kind: input, shape index: {}]
  %s3 = inlined_call_operand.vmem [shape: bf16[32,256], index: 3, kind: input, shape index: {}]
  %s4 = inlined_call_operand.vmem [shape: f32[1,256], index: 4, kind: input, shape index: {}]
  %s5 = inlined_call_operand.vmem [shape: bf16[256,32], index: 5, kind: input, shape index: {}]
  %s6 = inlined_call_operand.vmem [shape: f32[1,32], index: 6, kind: input, shape index: {}]
  %s7 = inlined_call_operand.vmem [shape: bf16[4,32,4], index: 7, kind: input, shape index: {}]
  %s8 = inlined_call_operand.vmem [shape: f32[4,1,4], index: 8, kind: input, shape index: {}]
  %s9 = inlined_call_operand.vmem [shape: bf16[4,32,256], index: 9, kind: input, shape index: {}]
  %s10 = inlined_call_operand.vmem [shape: bf16[4,256,32], index: 10, kind: input, shape index: {}]
  %s11 = inlined_call_operand.hbm [shape: f32[4,2,16,32], index: 11, kind: output, shape index: {}]
  %s12 = sld [smem:[#allocation0]]
  $region253: #{tpu_custom_call.1} parent=0
    _
  %s14 = ssub.s32 1, %s12
  %s15 = scalar_select 0, %s14, %s12
  $region1: #{tpu_custom_call.1} parent=0
    #allocation3 [shape = 'u8[16384]{0}', space=vmem, size = 0x4000, scoped, tag = 'input window, operand 0']
    #allocation4 [shape = 'u8[16384]{0}', space=vmem, size = 0x4000, scoped, tag = 'input window, operand 3']
    #allocation5 [shape = 'u8[65536]{0}', space=vmem, size = 0x10000, scoped, tag = 'input window, operand 9']
    #allocation6 [shape = 'u8[262144]{0}', space=vmem, size = 0x40000, scoped, tag = 'input window, operand 10']
    #allocation7 [shape = 'u8[32768]{0}', space=vmem, size = 0x8000, scoped, tag = 'output window, operand 0']
    #allocation8 [shape = 's32[2]{0}', space=sflag, size = 0x8, scoped, tag = 'scoped memory for tpu_custom_call.1']
    %16 = vsyncpa [#allocation8], 0
    %s17 = scalar_lea.sflag [#allocation8], 1
    %18 = vsyncpa %s17, 0
    loop: start=0, step=1, limit=10
    $region2: #{tpu_custom_call.1} parent=1 // loop_pre_header
      _
    $region3: #{tpu_custom_call.1} parent=1 // loop_header
      %s20 = sphi 0, %s24
      %p21 = scmp.ge.s32.totalorder %s20, 10
      %s27 = sphi 0, %s46
      %s28 = sphi 0, %s42
      %s29 = sphi 0, %s38
      %s30 = sphi 0, %s27
      %s31 = sphi 0, %s28
      %s32 = sphi 0, %s29
      %s33 = sphi 0, %s30
      %s34 = sphi 0, %s31
      %s35 = sphi 0, %s32
      %s51 = sphi 0, %s53
      %s54 = sphi 0, %s51
      %s55 = sphi 0, %s54
      %s71 = sphi 0, %s55
      %s77 = sphi 0, %s79
      %s80 = sphi 0, %s77
      %s81 = sphi 0, %s80
      %s97 = sphi 0, %s81
      %s103 = sphi 0, %s105
      %s106 = sphi 0, %s103
      %s107 = sphi 0, %s106
      %s123 = sphi 0, %s107
      %s129 = sphi 0, %s131
      %s132 = sphi 0, %s129
      %s133 = sphi 0, %s132
      %s149 = sphi 0, %s133
      %s155 = sphi 0, %s157
      %s158 = sphi 0, %s155
      %s159 = sphi 0, %s158
      %s175 = sphi 0, %s159
      %s181 = sphi 0, %s183
      %s184 = sphi 0, %s181
      %s185 = sphi 0, %s184
      %s201 = sphi 0, %s185
      %s205 = sphi 0, %s205
      %s207 = sphi 0, %s205
      %s208 = sphi 0, %s207
      %s222 = sphi 0, %s208
      %s226 = sphi 0, %s226
      %s228 = sphi 0, %s226
      %s229 = sphi 0, %s228
      %s243 = sphi 0, %s229
      %s247 = sphi 0, %s247
      %s249 = sphi 0, %s247
      %s250 = sphi 0, %s249
      %s264 = sphi 0, %s250
      %s270 = sphi 0, %s272
      %s273 = sphi 0, %s270
      %s274 = sphi 0, %s273
      %s290 = sphi 0, %s274
      %s296 = sphi 0, %s298
      %s299 = sphi 0, %s296
      %s300 = sphi 0, %s299
      %s316 = sphi 0, %s300
      %s324 = sphi 0, %s326
      %s327 = sphi 0, %s324
      %s328 = sphi 0, %s327
      %s344 = sphi 0, %s328
    $region4: #{tpu_custom_call.1} parent=1 // loop_header_branch
      %23 = sbr.rel (%p21) target = $region8
    $region5: #{tpu_custom_call.1} parent=1 // loop_body
      %s25 = ssub.s32 %s20, 1
      %s26 = ssub.s32 %s20, 2
      %s36 = sadd.s32 1, %s29
      %p37 = scmp.ge.s32.totalorder %s36, 2
      %s38 = scalar_select %p37, 0, %s36
      %s39 = sadd.s32 1, %s28
      %s40 = scalar_select %p37, %s39, %s28
      %p41 = scmp.ge.s32.totalorder %s40, 2
      %s42 = scalar_select %p41, 0, %s40
      %s43 = sadd.s32 1, %s27
      %s44 = scalar_select %p41, %s43, %s27
      %p45 = scmp.ge.s32.totalorder %s44, 2
      %s46 = scalar_select %p45, 0, %s44
      %s47 = ssub.s32 %s27, %s46
      %s48 = ssub.s32 %s28, %s42
      %s49 = sor.u32 %s47, %s48
      %p50 = scmp.eq.s32.totalorder %s49, 0
      %s52 = sadd.s32 %s51, 1
      %s53 = scalar_select %p50, %s51, %s52
      %p56 = pneg %p50
      %p57 = scmp.eq.s32.totalorder %s20, 7
      %p58 = por %p56, %p57
      %p59 = scmp.ne.s32.totalorder %s51, %s54
      %p60 = scmp.eq.s32.totalorder %s20, 0
      %p61 = por %p59, %p60
      %p62 = scmp.ne.s32.totalorder %s51, %s54
      %p63 = scmp.eq.s32.totalorder %s25, 7
      %p64 = por %p62, %p63
      %p65 = scmp.ne.s32.totalorder %s54, %s55
      %p66 = scmp.eq.s32.totalorder %s25, 0
      %p67 = por %p65, %p66
      %p68 = scmp.ne.s32.totalorder %s54, %s55
      %p69 = scmp.eq.s32.totalorder %s26, 7
      %p70 = por %p68, %p69
      %p72 = scmp.ne.s32.totalorder %s55, %s71
      %p73 = scmp.eq.s32.totalorder %s26, 0
      %p74 = por %p72, %p73
      %s75 = ssub.s32 %s27, %s46
      %p76 = scmp.eq.s32.totalorder %s75, 0
      %s78 = sadd.s32 %s77, 1
      %s79 = scalar_select %p76, %s77, %s78
      %p82 = pneg %p76
      %p83 = scmp.eq.s32.totalorder %s20, 7
      %p84 = por %p82, %p83
      %p85 = scmp.ne.s32.totalorder %s77, %s80
      %p86 = scmp.eq.s32.totalorder %s20, 0
      %p87 = por %p85, %p86
      %p88 = scmp.ne.s32.totalorder %s77, %s80
      %p89 = scmp.eq.s32.totalorder %s25, 7
      %p90 = por %p88, %p89
      %p91 = scmp.ne.s32.totalorder %s80, %s81
      %p92 = scmp.eq.s32.totalorder %s25, 0
      %p93 = por %p91, %p92
      %p94 = scmp.ne.s32.totalorder %s80, %s81
      %p95 = scmp.eq.s32.totalorder %s26, 7
      %p96 = por %p94, %p95
      %p98 = scmp.ne.s32.totalorder %s81, %s97
      %p99 = scmp.eq.s32.totalorder %s26, 0
      %p100 = por %p98, %p99
      %s101 = ssub.s32 %s27, %s46
      %p102 = scmp.eq.s32.totalorder %s101, 0
      %s104 = sadd.s32 %s103, 1
      %s105 = scalar_select %p102, %s103, %s104
      %p108 = pneg %p102
      %p109 = scmp.eq.s32.totalorder %s20, 7
      %p110 = por %p108, %p109
      %p111 = scmp.ne.s32.totalorder %s103, %s106
      %p112 = scmp.eq.s32.totalorder %s20, 0
      %p113 = por %p111, %p112
      %p114 = scmp.ne.s32.totalorder %s103, %s106
      %p115 = scmp.eq.s32.totalorder %s25, 7
      %p116 = por %p114, %p115
      %p117 = scmp.ne.s32.totalorder %s106, %s107
      %p118 = scmp.eq.s32.totalorder %s25, 0
      %p119 = por %p117, %p118
      %p120 = scmp.ne.s32.totalorder %s106, %s107
      %p121 = scmp.eq.s32.totalorder %s26, 7
      %p122 = por %p120, %p121
      %p124 = scmp.ne.s32.totalorder %s107, %s123
      %p125 = scmp.eq.s32.totalorder %s26, 0
      %p126 = por %p124, %p125
      %s127 = ssub.s32 %s29, %s38
      %p128 = scmp.eq.s32.totalorder %s127, 0
      %s130 = sadd.s32 %s129, 1
      %s131 = scalar_select %p128, %s129, %s130
      %p134 = pneg %p128
      %p135 = scmp.eq.s32.totalorder %s20, 7
      %p136 = por %p134, %p135
      %p137 = scmp.ne.s32.totalorder %s129, %s132
      %p138 = scmp.eq.s32.totalorder %s20, 0
      %p139 = por %p137, %p138
      %p140 = scmp.ne.s32.totalorder %s129, %s132
      %p141 = scmp.eq.s32.totalorder %s25, 7
      %p142 = por %p140, %p141
      %p143 = scmp.ne.s32.totalorder %s132, %s133
      %p144 = scmp.eq.s32.totalorder %s25, 0
      %p145 = por %p143, %p144
      %p146 = scmp.ne.s32.totalorder %s132, %s133
      %p147 = scmp.eq.s32.totalorder %s26, 7
      %p148 = por %p146, %p147
      %p150 = scmp.ne.s32.totalorder %s133, %s149
      %p151 = scmp.eq.s32.totalorder %s26, 0
      %p152 = por %p150, %p151
      %s153 = ssub.s32 %s29, %s38
      %p154 = scmp.eq.s32.totalorder %s153, 0
      %s156 = sadd.s32 %s155, 1
      %s157 = scalar_select %p154, %s155, %s156
      %p160 = pneg %p154
      %p161 = scmp.eq.s32.totalorder %s20, 7
      %p162 = por %p160, %p161
      %p163 = scmp.ne.s32.totalorder %s155, %s158
      %p164 = scmp.eq.s32.totalorder %s20, 0
      %p165 = por %p163, %p164
      %p166 = scmp.ne.s32.totalorder %s155, %s158
      %p167 = scmp.eq.s32.totalorder %s25, 7
      %p168 = por %p166, %p167
      %p169 = scmp.ne.s32.totalorder %s158, %s159
      %p170 = scmp.eq.s32.totalorder %s25, 0
      %p171 = por %p169, %p170
      %p172 = scmp.ne.s32.totalorder %s158, %s159
      %p173 = scmp.eq.s32.totalorder %s26, 7
      %p174 = por %p172, %p173
      %p176 = scmp.ne.s32.totalorder %s159, %s175
      %p177 = scmp.eq.s32.totalorder %s26, 0
      %p178 = por %p176, %p177
      %s179 = ssub.s32 %s29, %s38
      %p180 = scmp.eq.s32.totalorder %s179, 0
      %s182 = sadd.s32 %s181, 1
      %s183 = scalar_select %p180, %s181, %s182
      %p186 = pneg %p180
      %p187 = scmp.eq.s32.totalorder %s20, 7
      %p188 = por %p186, %p187
      %p189 = scmp.ne.s32.totalorder %s181, %s184
      %p190 = scmp.eq.s32.totalorder %s20, 0
      %p191 = por %p189, %p190
      %p192 = scmp.ne.s32.totalorder %s181, %s184
      %p193 = scmp.eq.s32.totalorder %s25, 7
      %p194 = por %p192, %p193
      %p195 = scmp.ne.s32.totalorder %s184, %s185
      %p196 = scmp.eq.s32.totalorder %s25, 0
      %p197 = por %p195, %p196
      %p198 = scmp.ne.s32.totalorder %s184, %s185
      %p199 = scmp.eq.s32.totalorder %s26, 7
      %p200 = por %p198, %p199
      %p202 = scmp.ne.s32.totalorder %s185, %s201
      %p203 = scmp.eq.s32.totalorder %s26, 0
      %p204 = por %p202, %p203
      %s206 = sadd.s32 %s205, 1
      %p209 = scmp.eq.s32.totalorder %s20, 7
      %p210 = scmp.ne.s32.totalorder %s205, %s207
      %p211 = scmp.eq.s32.totalorder %s20, 0
      %p212 = por %p210, %p211
      %p213 = scmp.ne.s32.totalorder %s205, %s207
      %p214 = scmp.eq.s32.totalorder %s25, 7
      %p215 = por %p213, %p214
      %p216 = scmp.ne.s32.totalorder %s207, %s208
      %p217 = scmp.eq.s32.totalorder %s25, 0
      %p218 = por %p216, %p217
      %p219 = scmp.ne.s32.totalorder %s207, %s208
      %p220 = scmp.eq.s32.totalorder %s26, 7
      %p221 = por %p219, %p220
      %p223 = scmp.ne.s32.totalorder %s208, %s222
      %p224 = scmp.eq.s32.totalorder %s26, 0
      %p225 = por %p223, %p224
      %s227 = sadd.s32 %s226, 1
      %p230 = scmp.eq.s32.totalorder %s20, 7
      %p231 = scmp.ne.s32.totalorder %s226, %s228
      %p232 = scmp.eq.s32.totalorder %s20, 0
      %p233 = por %p231, %p232
      %p234 = scmp.ne.s32.totalorder %s226, %s228
      %p235 = scmp.eq.s32.totalorder %s25, 7
      %p236 = por %p234, %p235
      %p237 = scmp.ne.s32.totalorder %s228, %s229
      %p238 = scmp.eq.s32.totalorder %s25, 0
      %p239 = por %p237, %p238
      %p240 = scmp.ne.s32.totalorder %s228, %s229
      %p241 = scmp.eq.s32.totalorder %s26, 7
      %p242 = por %p240, %p241
      %p244 = scmp.ne.s32.totalorder %s229, %s243
      %p245 = scmp.eq.s32.totalorder %s26, 0
      %p246 = por %p244, %p245
      %s248 = sadd.s32 %s247, 1
      %p251 = scmp.eq.s32.totalorder %s20, 7
      %p252 = scmp.ne.s32.totalorder %s247, %s249
      %p253 = scmp.eq.s32.totalorder %s20, 0
      %p254 = por %p252, %p253
      %p255 = scmp.ne.s32.totalorder %s247, %s249
      %p256 = scmp.eq.s32.totalorder %s25, 7
      %p257 = por %p255, %p256
      %p258 = scmp.ne.s32.totalorder %s249, %s250
      %p259 = scmp.eq.s32.totalorder %s25, 0
      %p260 = por %p258, %p259
      %p261 = scmp.ne.s32.totalorder %s249, %s250
      %p262 = scmp.eq.s32.totalorder %s26, 7
      %p263 = por %p261, %p262
      %p265 = scmp.ne.s32.totalorder %s250, %s264
      %p266 = scmp.eq.s32.totalorder %s26, 0
      %p267 = por %p265, %p266
      %s268 = ssub.s32 %s29, %s38
      %p269 = scmp.eq.s32.totalorder %s268, 0
      %s271 = sadd.s32 %s270, 1
      %s272 = scalar_select %p269, %s270, %s271
      %p275 = pneg %p269
      %p276 = scmp.eq.s32.totalorder %s20, 7
      %p277 = por %p275, %p276
      %p278 = scmp.ne.s32.totalorder %s270, %s273
      %p279 = scmp.eq.s32.totalorder %s20, 0
      %p280 = por %p278, %p279
      %p281 = scmp.ne.s32.totalorder %s270, %s273
      %p282 = scmp.eq.s32.totalorder %s25, 7
      %p283 = por %p281, %p282
      %p284 = scmp.ne.s32.totalorder %s273, %s274
      %p285 = scmp.eq.s32.totalorder %s25, 0
      %p286 = por %p284, %p285
      %p287 = scmp.ne.s32.totalorder %s273, %s274
      %p288 = scmp.eq.s32.totalorder %s26, 7
      %p289 = por %p287, %p288
      %p291 = scmp.ne.s32.totalorder %s274, %s290
      %p292 = scmp.eq.s32.totalorder %s26, 0
      %p293 = por %p291, %p292
      %s294 = ssub.s32 %s29, %s38
      %p295 = scmp.eq.s32.totalorder %s294, 0
      %s297 = sadd.s32 %s296, 1
      %s298 = scalar_select %p295, %s296, %s297
      %p301 = pneg %p295
      %p302 = scmp.eq.s32.totalorder %s20, 7
      %p303 = por %p301, %p302
      %p304 = scmp.ne.s32.totalorder %s296, %s299
      %p305 = scmp.eq.s32.totalorder %s20, 0
      %p306 = por %p304, %p305
      %p307 = scmp.ne.s32.totalorder %s296, %s299
      %p308 = scmp.eq.s32.totalorder %s25, 7
      %p309 = por %p307, %p308
      %p310 = scmp.ne.s32.totalorder %s299, %s300
      %p311 = scmp.eq.s32.totalorder %s25, 0
      %p312 = por %p310, %p311
      %p313 = scmp.ne.s32.totalorder %s299, %s300
      %p314 = scmp.eq.s32.totalorder %s26, 7
      %p315 = por %p313, %p314
      %p317 = scmp.ne.s32.totalorder %s300, %s316
      %p318 = scmp.eq.s32.totalorder %s26, 0
      %p319 = por %p317, %p318
      %s320 = ssub.s32 %s27, %s46
      %s321 = ssub.s32 %s28, %s42
      %s322 = sor.u32 %s320, %s321
      %p323 = scmp.eq.s32.totalorder %s322, 0
      %s325 = sadd.s32 %s324, 1
      %s326 = scalar_select %p323, %s324, %s325
      %p329 = pneg %p323
      %p330 = scmp.eq.s32.totalorder %s20, 7
      %p331 = por %p329, %p330
      %p332 = scmp.ne.s32.totalorder %s324, %s327
      %p333 = scmp.eq.s32.totalorder %s20, 0
      %p334 = por %p332, %p333
      %p335 = scmp.ne.s32.totalorder %s324, %s327
      %p336 = scmp.eq.s32.totalorder %s25, 7
      %p337 = por %p335, %p336
      %p338 = scmp.ne.s32.totalorder %s327, %s328
      %p339 = scmp.eq.s32.totalorder %s25, 0
      %p340 = por %p338, %p339
      %p341 = scmp.ne.s32.totalorder %s327, %s328
      %p342 = scmp.eq.s32.totalorder %s26, 7
      %p343 = por %p341, %p342
      %p345 = scmp.ne.s32.totalorder %s328, %s344
      %p346 = scmp.eq.s32.totalorder %s26, 0
      %p347 = por %p345, %p346
      %p348 = scmp.le.s32.totalorder 1, %s20
      %p349 = scmp.lt.s32.totalorder %s20, 9
      %p350 = pnand %p348, %p349
      %p351 = pneg %p350
      // Predicated region
      $region9: #{tpu_custom_call.1} parent=5 // pred_check
        _
      $region10: #{tpu_custom_call.1} parent=5 // pred_check_branch
        %353 = sbr.rel (%p350) target = $region12
      $region11: #{tpu_custom_call.1} parent=5 // pred_region
        %s354 = ssub.s32 %s20, 1
        // Predicated region
        $region13: #{tpu_custom_call.1} parent=11 // pred_check
          %p355 = pneg %p218
        $region14: #{tpu_custom_call.1} parent=11 // pred_check_branch
          %357 = sbr.rel (%p355) target = $region16
        $region15: #{tpu_custom_call.1} parent=11 // pred_region
          _
        $region16: #{tpu_custom_call.1} parent=11 // pred_fallthru
          _
        // Predicated region
        $region17: #{tpu_custom_call.1} parent=11 // pred_check
          %p358 = pneg %p239
        $region18: #{tpu_custom_call.1} parent=11 // pred_check_branch
          %360 = sbr.rel (%p358) target = $region20
        $region19: #{tpu_custom_call.1} parent=11 // pred_region
          _
        $region20: #{tpu_custom_call.1} parent=11 // pred_fallthru
          _
        // Predicated region
        $region21: #{tpu_custom_call.1} parent=11 // pred_check
          %p361 = pneg %p260
        $region22: #{tpu_custom_call.1} parent=11 // pred_check_branch
          %363 = sbr.rel (%p361) target = $region24
        $region23: #{tpu_custom_call.1} parent=11 // pred_region
          _
        $region24: #{tpu_custom_call.1} parent=11 // pred_fallthru
          _
      $region12: #{tpu_custom_call.1} parent=5 // pred_fallthru
        _
      %p364 = scmp.lt.s32.totalorder %s20, 8
      // Predicated region
      $region25: #{tpu_custom_call.1} parent=5 // pred_check
        %p365 = pneg %p364
      $region26: #{tpu_custom_call.1} parent=5 // pred_check_branch
        %367 = sbr.rel (%p365) target = $region28
      $region27: #{tpu_custom_call.1} parent=5 // pred_region
        // Predicated region
        $region29: #{tpu_custom_call.1} parent=27 // pred_check
          %p368 = pneg %p61
        $region30: #{tpu_custom_call.1} parent=27 // pred_check_branch
          %370 = sbr.rel (%p368) target = $region32
        $region31: #{tpu_custom_call.1} parent=27 // pred_region
          %s371 = sand.u32 %s51, 1
          %s372 = sand.u32 %s51, 1
          %s373 = smul.addr %s372, 16
          %s374 = scalar_lea.vmem [#allocation3], %s373
          %s375 = smul.addr %s27, 2
          %s376 = sadd.s32 %s28, %s375
          %s377 = smul.addr %s376, 4
          %s378 = scalar_lea.vmem %s0, %s377
          // Predicated region
          $region33: #{tpu_custom_call.1} parent=31 // pred_check
            _
          $region34: #{tpu_custom_call.1} parent=31 // pred_check_branch
            %380 = sbr.rel (0) target = $region36
          $region35: #{tpu_custom_call.1} parent=31 // pred_region
            // Predicated region
            $region37: #{tpu_custom_call.1} parent=35 // pred_check
              _
            $region38: #{tpu_custom_call.1} parent=35 // pred_check_branch
              %382 = sbr.rel target = $region40
            $region39: #{tpu_custom_call.1} parent=35 // pred_region
              // Predicated region
              $region52: #{tpu_custom_call.1} parent=39 // pred_check
                _
              $region53: #{tpu_custom_call.1} parent=39 // pred_check_branch
                %404 = sbr.rel (0) target = $region55
              $region54: #{tpu_custom_call.1} parent=39 // pred_region
                loop: start=0, step=1, limit=1
                $region56: #{tpu_custom_call.1} parent=54 // loop_pre_header
                  _
                $region57: #{tpu_custom_call.1} parent=54 // loop_header
                  %s406 = sphi 0, %s410
                  %p407 = scmp.ge.s32.totalorder %s406, 1
                  %s411 = sphi %s378, %s378
                  %s412 = sphi %s374, %s374
                $region58: #{tpu_custom_call.1} parent=54 // loop_header_branch
                  %409 = sbr.rel (%p407) target = $region62
                $region59: #{tpu_custom_call.1} parent=54 // loop_body
                  _
                $region60: #{tpu_custom_call.1} parent=54 // loop_footer
                  %s410 = sadd.s32 1, %s406
                $region61: #{tpu_custom_call.1} parent=54 // loop_footer_branch
                  %405 = sbr.rel target = $region57
                $region62: #{tpu_custom_call.1} parent=54 // loop_exit
                  _
                %s414 = ssub.s32 16, 1
                loop: start=0, step=1, limit=1
                $region63: #{tpu_custom_call.1} parent=54 // loop_pre_header
                  _
                $region64: #{tpu_custom_call.1} parent=54 // loop_header
                  %s416 = sphi 0, %s420
                  %p417 = scmp.ge.s32.totalorder %s416, 1
                  %s421 = sphi %s378, %s378
                  %s422 = sphi %s374, %s374
                $region65: #{tpu_custom_call.1} parent=54 // loop_header_branch
                  %419 = sbr.rel (%p417) target = $region69
                $region66: #{tpu_custom_call.1} parent=54 // loop_body
                  %v423 = vld [vmem:[%s421] sm:%s414]
                  %424 = vst [vmem:[%s422] sm:%s414] %v423
                  %v425 = vld [vmem:[%s421 + $0x10] sm:%s414]
                  %426 = vst [vmem:[%s422 + $0x4] sm:%s414] %v425
                  %v427 = vld [vmem:[%s421 + $0x20] sm:%s414]
                  %428 = vst [vmem:[%s422 + $0x8] sm:%s414] %v427
                  %v429 = vld [vmem:[%s421 + $0x30] sm:%s414]
                  %430 = vst [vmem:[%s422 + $0xc] sm:%s414] %v429
                $region67: #{tpu_custom_call.1} parent=54 // loop_footer
                  %s420 = sadd.s32 1, %s416
                $region68: #{tpu_custom_call.1} parent=54 // loop_footer_branch
                  %415 = sbr.rel target = $region64
                $region69: #{tpu_custom_call.1} parent=54 // loop_exit
                  _
              $region55: #{tpu_custom_call.1} parent=39 // pred_fallthru
                _
            $region40: #{tpu_custom_call.1} parent=35 // pred_fallthru
              _
            // Predicated region
            $region41: #{tpu_custom_call.1} parent=35 // pred_check
              _
            $region42: #{tpu_custom_call.1} parent=35 // pred_check_branch
              %384 = sbr.rel (0) target = $region44
            $region43: #{tpu_custom_call.1} parent=35 // pred_region
              %s386 = ssub.s32 16, 1
              loop: start=0, step=1, limit=1
              $region45: #{tpu_custom_call.1} parent=43 // loop_pre_header
                _
              $region46: #{tpu_custom_call.1} parent=43 // loop_header
                %s388 = sphi 0, %s392
                %p389 = scmp.ge.s32.totalorder %s388, 1
                %s393 = sphi %s378, %s378
                %s394 = sphi %s374, %s374
              $region47: #{tpu_custom_call.1} parent=43 // loop_header_branch
                %391 = sbr.rel (%p389) target = $region51
              $region48: #{tpu_custom_call.1} parent=43 // loop_body
                %v395 = vld [vmem:[%s393] sm:%s386]
                %396 = vst [vmem:[%s394] sm:%s386] %v395
                %v397 = vld [vmem:[%s393 + $0x10] sm:%s386]
                %398 = vst [vmem:[%s394 + $0x4] sm:%s386] %v397
                %v399 = vld [vmem:[%s393 + $0x20] sm:%s386]
                %400 = vst [vmem:[%s394 + $0x8] sm:%s386] %v399
                %v401 = vld [vmem:[%s393 + $0x30] sm:%s386]
                %402 = vst [vmem:[%s394 + $0xc] sm:%s386] %v401
              $region49: #{tpu_custom_call.1} parent=43 // loop_footer
                %s392 = sadd.s32 1, %s388
              $region50: #{tpu_custom_call.1} parent=43 // loop_footer_branch
                %387 = sbr.rel target = $region46
              $region51: #{tpu_custom_call.1} parent=43 // loop_exit
                _
            $region44: #{tpu_custom_call.1} parent=35 // pred_fallthru
              _
          $region36: #{tpu_custom_call.1} parent=31 // pred_fallthru
            _
          %431 = vnop
        $region32: #{tpu_custom_call.1} parent=27 // pred_fallthru
          _
        // Predicated region
        $region70: #{tpu_custom_call.1} parent=27 // pred_check
          %p432 = pneg %p87
        $region71: #{tpu_custom_call.1} parent=27 // pred_check_branch
          %434 = sbr.rel (%p432) target = $region73
        $region72: #{tpu_custom_call.1} parent=27 // pred_region
          %p435 = scmp.lt.s32.totalorder %s27, 1
          %s436 = scalar_select %p435, %s27, 1
          %s437 = scalar_lea.vmem %s1, %s436
        $region73: #{tpu_custom_call.1} parent=27 // pred_fallthru
          _
        // Predicated region
        $region74: #{tpu_custom_call.1} parent=27 // pred_check
          %p438 = pneg %p113
        $region75: #{tpu_custom_call.1} parent=27 // pred_check_branch
          %440 = sbr.rel (%p438) target = $region77
        $region76: #{tpu_custom_call.1} parent=27 // pred_region
          %p441 = scmp.lt.s32.totalorder %s27, 1
          %s442 = scalar_select %p441, %s27, 1
          %s443 = smul.addr %s442, 4
          %s444 = scalar_lea.vmem %s2, %s443
        $region77: #{tpu_custom_call.1} parent=27 // pred_fallthru
          _
        // Predicated region
        $region78: #{tpu_custom_call.1} parent=27 // pred_check
          %p445 = pneg %p139
        $region79: #{tpu_custom_call.1} parent=27 // pred_check_branch
          %447 = sbr.rel (%p445) target = $region81
        $region80: #{tpu_custom_call.1} parent=27 // pred_region
          %s448 = sand.u32 %s129, 1
          %s449 = sand.u32 %s129, 1
          %s450 = smul.addr %s449, 16
          %s451 = scalar_lea.vmem [#allocation4], %s450
          %s452 = smul.addr %s29, 4
          %s453 = scalar_lea.vmem %s3, %s452
          // Predicated region
          $region82: #{tpu_custom_call.1} parent=80 // pred_check
            _
          $region83: #{tpu_custom_call.1} parent=80 // pred_check_branch
            %455 = sbr.rel (0) target = $region85
          $region84: #{tpu_custom_call.1} parent=80 // pred_region
            // Predicated region
            $region86: #{tpu_custom_call.1} parent=84 // pred_check
              _
            $region87: #{tpu_custom_call.1} parent=84 // pred_check_branch
              %457 = sbr.rel target = $region89
            $region88: #{tpu_custom_call.1} parent=84 // pred_region
              // Predicated region
              $region101: #{tpu_custom_call.1} parent=88 // pred_check
                _
              $region102: #{tpu_custom_call.1} parent=88 // pred_check_branch
                %479 = sbr.rel (0) target = $region104
              $region103: #{tpu_custom_call.1} parent=88 // pred_region
                loop: start=0, step=1, limit=1
                $region105: #{tpu_custom_call.1} parent=103 // loop_pre_header
                  _
                $region106: #{tpu_custom_call.1} parent=103 // loop_header
                  %s481 = sphi 0, %s485
                  %p482 = scmp.ge.s32.totalorder %s481, 1
                  %s486 = sphi %s453, %s453
                  %s487 = sphi %s451, %s451
                $region107: #{tpu_custom_call.1} parent=103 // loop_header_branch
                  %484 = sbr.rel (%p482) target = $region111
                $region108: #{tpu_custom_call.1} parent=103 // loop_body
                  _
                $region109: #{tpu_custom_call.1} parent=103 // loop_footer
                  %s485 = sadd.s32 1, %s481
                $region110: #{tpu_custom_call.1} parent=103 // loop_footer_branch
                  %480 = sbr.rel target = $region106
                $region111: #{tpu_custom_call.1} parent=103 // loop_exit
                  _
                %s489 = ssub.s32 16, 1
                loop: start=0, step=1, limit=1
                $region112: #{tpu_custom_call.1} parent=103 // loop_pre_header
                  _
                $region113: #{tpu_custom_call.1} parent=103 // loop_header
                  %s491 = sphi 0, %s495
                  %p492 = scmp.ge.s32.totalorder %s491, 1
                  %s496 = sphi %s453, %s453
                  %s497 = sphi %s451, %s451
                $region114: #{tpu_custom_call.1} parent=103 // loop_header_branch
                  %494 = sbr.rel (%p492) target = $region118
                $region115: #{tpu_custom_call.1} parent=103 // loop_body
                  %v498 = vld [vmem:[%s496] sm:%s489]
                  %499 = vst [vmem:[%s497] sm:%s489] %v498
                  %v500 = vld [vmem:[%s496 + $0x8] sm:%s489]
                  %501 = vst [vmem:[%s497 + $0x4] sm:%s489] %v500
                  %v502 = vld [vmem:[%s496 + $0x10] sm:%s489]
                  %503 = vst [vmem:[%s497 + $0x8] sm:%s489] %v502
                  %v504 = vld [vmem:[%s496 + $0x18] sm:%s489]
                  %505 = vst [vmem:[%s497 + $0xc] sm:%s489] %v504
                $region116: #{tpu_custom_call.1} parent=103 // loop_footer
                  %s495 = sadd.s32 1, %s491
                $region117: #{tpu_custom_call.1} parent=103 // loop_footer_branch
                  %490 = sbr.rel target = $region113
                $region118: #{tpu_custom_call.1} parent=103 // loop_exit
                  _
              $region104: #{tpu_custom_call.1} parent=88 // pred_fallthru
                _
            $region89: #{tpu_custom_call.1} parent=84 // pred_fallthru
              _
            // Predicated region
            $region90: #{tpu_custom_call.1} parent=84 // pred_check
              _
            $region91: #{tpu_custom_call.1} parent=84 // pred_check_branch
              %459 = sbr.rel (0) target = $region93
            $region92: #{tpu_custom_call.1} parent=84 // pred_region
              %s461 = ssub.s32 16, 1
              loop: start=0, step=1, limit=1
              $region94: #{tpu_custom_call.1} parent=92 // loop_pre_header
                _
              $region95: #{tpu_custom_call.1} parent=92 // loop_header
                %s463 = sphi 0, %s467
                %p464 = scmp.ge.s32.totalorder %s463, 1
                %s468 = sphi %s453, %s453
                %s469 = sphi %s451, %s451
              $region96: #{tpu_custom_call.1} parent=92 // loop_header_branch
                %466 = sbr.rel (%p464) target = $region100
              $region97: #{tpu_custom_call.1} parent=92 // loop_body
                %v470 = vld [vmem:[%s468] sm:%s461]
                %471 = vst [vmem:[%s469] sm:%s461] %v470
                %v472 = vld [vmem:[%s468 + $0x8] sm:%s461]
                %473 = vst [vmem:[%s469 + $0x4] sm:%s461] %v472
                %v474 = vld [vmem:[%s468 + $0x10] sm:%s461]
                %475 = vst [vmem:[%s469 + $0x8] sm:%s461] %v474
                %v476 = vld [vmem:[%s468 + $0x18] sm:%s461]
                %477 = vst [vmem:[%s469 + $0xc] sm:%s461] %v476
              $region98: #{tpu_custom_call.1} parent=92 // loop_footer
                %s467 = sadd.s32 1, %s463
              $region99: #{tpu_custom_call.1} parent=92 // loop_footer_branch
                %462 = sbr.rel target = $region95
              $region100: #{tpu_custom_call.1} parent=92 // loop_exit
                _
            $region93: #{tpu_custom_call.1} parent=84 // pred_fallthru
              _
          $region85: #{tpu_custom_call.1} parent=80 // pred_fallthru
            _
          %506 = vnop
        $region81: #{tpu_custom_call.1} parent=27 // pred_fallthru
          _
        // Predicated region
        $region119: #{tpu_custom_call.1} parent=27 // pred_check
          %p507 = pneg %p165
        $region120: #{tpu_custom_call.1} parent=27 // pred_check_branch
          %509 = sbr.rel (%p507) target = $region122
        $region121: #{tpu_custom_call.1} parent=27 // pred_region
          %p510 = scmp.lt.s32.totalorder %s29, 1
          %s511 = scalar_select %p510, %s29, 1
          %s512 = scalar_lea.vmem %s4, %s511
        $region122: #{tpu_custom_call.1} parent=27 // pred_fallthru
          _
        // Predicated region
        $region123: #{tpu_custom_call.1} parent=27 // pred_check
          %p513 = pneg %p191
        $region124: #{tpu_custom_call.1} parent=27 // pred_check_branch
          %515 = sbr.rel (%p513) target = $region126
        $region125: #{tpu_custom_call.1} parent=27 // pred_region
          %s516 = smul.u32 16, %s29
          %p517 = scmp.lt.s32.totalorder %s516, 31
          %s518 = scalar_select %p517, %s516, 31
          %s519 = smul.addr %s518, 4
          %s520 = scalar_lea.vmem %s5, %s519
          %s521 = smul.u32 16, %s29
        $region126: #{tpu_custom_call.1} parent=27 // pred_fallthru
          _
        // Predicated region
        $region127: #{tpu_custom_call.1} parent=27 // pred_check
          %p522 = pneg %p280
        $region128: #{tpu_custom_call.1} parent=27 // pred_check_branch
          %524 = sbr.rel (%p522) target = $region130
        $region129: #{tpu_custom_call.1} parent=27 // pred_region
          %s525 = sand.u32 %s270, 1
          %s526 = sand.u32 %s270, 1
          %s527 = smul.addr %s526, 64
          %s528 = scalar_lea.vmem [#allocation5], %s527
          %s529 = smul.addr %s29, 4
          %s530 = scalar_lea.vmem %s9, %s529
          // Predicated region
          $region131: #{tpu_custom_call.1} parent=129 // pred_check
            _
          $region132: #{tpu_custom_call.1} parent=129 // pred_check_branch
            %532 = sbr.rel (0) target = $region134
          $region133: #{tpu_custom_call.1} parent=129 // pred_region
            // Predicated region
            $region135: #{tpu_custom_call.1} parent=133 // pred_check
              _
            $region136: #{tpu_custom_call.1} parent=133 // pred_check_branch
              %534 = sbr.rel target = $region138
            $region137: #{tpu_custom_call.1} parent=133 // pred_region
              // Predicated region
              $region150: #{tpu_custom_call.1} parent=137 // pred_check
                _
              $region151: #{tpu_custom_call.1} parent=137 // pred_check_branch
                %580 = sbr.rel (0) target = $region153
              $region152: #{tpu_custom_call.1} parent=137 // pred_region
                loop: start=0, step=1, limit=1
                $region154: #{tpu_custom_call.1} parent=152 // loop_pre_header
                  _
                $region155: #{tpu_custom_call.1} parent=152 // loop_header
                  %s582 = sphi 0, %s586
                  %p583 = scmp.ge.s32.totalorder %s582, 1
                  %s587 = sphi %s530, %s530
                  %s588 = sphi %s528, %s528
                $region156: #{tpu_custom_call.1} parent=152 // loop_header_branch
                  %585 = sbr.rel (%p583) target = $region160
                $region157: #{tpu_custom_call.1} parent=152 // loop_body
                  _
                $region158: #{tpu_custom_call.1} parent=152 // loop_footer
                  %s586 = sadd.s32 1, %s582
                $region159: #{tpu_custom_call.1} parent=152 // loop_footer_branch
                  %581 = sbr.rel target = $region155
                $region160: #{tpu_custom_call.1} parent=152 // loop_exit
                  _
                %s590 = ssub.s32 16, 1
                loop: start=0, step=1, limit=1
                $region161: #{tpu_custom_call.1} parent=152 // loop_pre_header
                  _
                $region162: #{tpu_custom_call.1} parent=152 // loop_header
                  %s592 = sphi 0, %s596
                  %p593 = scmp.ge.s32.totalorder %s592, 1
                  %s597 = sphi %s530, %s530
                  %s598 = sphi %s528, %s528
                $region163: #{tpu_custom_call.1} parent=152 // loop_header_branch
                  %595 = sbr.rel (%p593) target = $region167
                $region164: #{tpu_custom_call.1} parent=152 // loop_body
                  %v599 = vld [vmem:[%s597] sm:%s590]
                  %600 = vst [vmem:[%s598] sm:%s590] %v599
                  %v601 = vld [vmem:[%s597 + $0x8] sm:%s590]
                  %602 = vst [vmem:[%s598 + $0x4] sm:%s590] %v601
                  %v603 = vld [vmem:[%s597 + $0x10] sm:%s590]
                  %604 = vst [vmem:[%s598 + $0x8] sm:%s590] %v603
                  %v605 = vld [vmem:[%s597 + $0x18] sm:%s590]
                  %606 = vst [vmem:[%s598 + $0xc] sm:%s590] %v605
                  %v607 = vld [vmem:[%s597 + $0x20] sm:%s590]
                  %608 = vst [vmem:[%s598 + $0x10] sm:%s590] %v607
                  %v609 = vld [vmem:[%s597 + $0x28] sm:%s590]
                  %610 = vst [vmem:[%s598 + $0x14] sm:%s590] %v609
                  %v611 = vld [vmem:[%s597 + $0x30] sm:%s590]
                  %612 = vst [vmem:[%s598 + $0x18] sm:%s590] %v611
                  %v613 = vld [vmem:[%s597 + $0x38] sm:%s590]
                  %614 = vst [vmem:[%s598 + $0x1c] sm:%s590] %v613
                  %v615 = vld [vmem:[%s597 + $0x40] sm:%s590]
                  %616 = vst [vmem:[%s598 + $0x20] sm:%s590] %v615
                  %v617 = vld [vmem:[%s597 + $0x48] sm:%s590]
                  %618 = vst [vmem:[%s598 + $0x24] sm:%s590] %v617
                  %v619 = vld [vmem:[%s597 + $0x50] sm:%s590]
                  %620 = vst [vmem:[%s598 + $0x28] sm:%s590] %v619
                  %v621 = vld [vmem:[%s597 + $0x58] sm:%s590]
                  %622 = vst [vmem:[%s598 + $0x2c] sm:%s590] %v621
                  %v623 = vld [vmem:[%s597 + $0x60] sm:%s590]
                  %624 = vst [vmem:[%s598 + $0x30] sm:%s590] %v623
                  %v625 = vld [vmem:[%s597 + $0x68] sm:%s590]
                  %626 = vst [vmem:[%s598 + $0x34] sm:%s590] %v625
                  %v627 = vld [vmem:[%s597 + $0x70] sm:%s590]
                  %628 = vst [vmem:[%s598 + $0x38] sm:%s590] %v627
                  %v629 = vld [vmem:[%s597 + $0x78] sm:%s590]
                  %630 = vst [vmem:[%s598 + $0x3c] sm:%s590] %v629
                $region165: #{tpu_custom_call.1} parent=152 // loop_footer
                  %s596 = sadd.s32 1, %s592
                $region166: #{tpu_custom_call.1} parent=152 // loop_footer_branch
                  %591 = sbr.rel target = $region162
                $region167: #{tpu_custom_call.1} parent=152 // loop_exit
                  _
              $region153: #{tpu_custom_call.1} parent=137 // pred_fallthru
                _
            $region138: #{tpu_custom_call.1} parent=133 // pred_fallthru
              _
            // Predicated region
            $region139: #{tpu_custom_call.1} parent=133 // pred_check
              _
            $region140: #{tpu_custom_call.1} parent=133 // pred_check_branch
              %536 = sbr.rel (0) target = $region142
            $region141: #{tpu_custom_call.1} parent=133 // pred_region
              %s538 = ssub.s32 16, 1
              loop: start=0, step=1, limit=1
              $region143: #{tpu_custom_call.1} parent=141 // loop_pre_header
                _
              $region144: #{tpu_custom_call.1} parent=141 // loop_header
                %s540 = sphi 0, %s544
                %p541 = scmp.ge.s32.totalorder %s540, 1
                %s545 = sphi %s530, %s530
                %s546 = sphi %s528, %s528
              $region145: #{tpu_custom_call.1} parent=141 // loop_header_branch
                %543 = sbr.rel (%p541) target = $region149
              $region146: #{tpu_custom_call.1} parent=141 // loop_body
                %v547 = vld [vmem:[%s545] sm:%s538]
                %548 = vst [vmem:[%s546] sm:%s538] %v547
                %v549 = vld [vmem:[%s545 + $0x8] sm:%s538]
                %550 = vst [vmem:[%s546 + $0x4] sm:%s538] %v549
                %v551 = vld [vmem:[%s545 + $0x10] sm:%s538]
                %552 = vst [vmem:[%s546 + $0x8] sm:%s538] %v551
                %v553 = vld [vmem:[%s545 + $0x18] sm:%s538]
                %554 = vst [vmem:[%s546 + $0xc] sm:%s538] %v553
                %v555 = vld [vmem:[%s545 + $0x20] sm:%s538]
                %556 = vst [vmem:[%s546 + $0x10] sm:%s538] %v555
                %v557 = vld [vmem:[%s545 + $0x28] sm:%s538]
                %558 = vst [vmem:[%s546 + $0x14] sm:%s538] %v557
                %v559 = vld [vmem:[%s545 + $0x30] sm:%s538]
                %560 = vst [vmem:[%s546 + $0x18] sm:%s538] %v559
                %v561 = vld [vmem:[%s545 + $0x38] sm:%s538]
                %562 = vst [vmem:[%s546 + $0x1c] sm:%s538] %v561
                %v563 = vld [vmem:[%s545 + $0x40] sm:%s538]
                %564 = vst [vmem:[%s546 + $0x20] sm:%s538] %v563
                %v565 = vld [vmem:[%s545 + $0x48] sm:%s538]
                %566 = vst [vmem:[%s546 + $0x24] sm:%s538] %v565
                %v567 = vld [vmem:[%s545 + $0x50] sm:%s538]
                %568 = vst [vmem:[%s546 + $0x28] sm:%s538] %v567
                %v569 = vld [vmem:[%s545 + $0x58] sm:%s538]
                %570 = vst [vmem:[%s546 + $0x2c] sm:%s538] %v569
                %v571 = vld [vmem:[%s545 + $0x60] sm:%s538]
                %572 = vst [vmem:[%s546 + $0x30] sm:%s538] %v571
                %v573 = vld [vmem:[%s545 + $0x68] sm:%s538]
                %574 = vst [vmem:[%s546 + $0x34] sm:%s538] %v573
                %v575 = vld [vmem:[%s545 + $0x70] sm:%s538]
                %576 = vst [vmem:[%s546 + $0x38] sm:%s538] %v575
                %v577 = vld [vmem:[%s545 + $0x78] sm:%s538]
                %578 = vst [vmem:[%s546 + $0x3c] sm:%s538] %v577
              $region147: #{tpu_custom_call.1} parent=141 // loop_footer
                %s544 = sadd.s32 1, %s540
              $region148: #{tpu_custom_call.1} parent=141 // loop_footer_branch
                %539 = sbr.rel target = $region144
              $region149: #{tpu_custom_call.1} parent=141 // loop_exit
                _
            $region142: #{tpu_custom_call.1} parent=133 // pred_fallthru
              _
          $region134: #{tpu_custom_call.1} parent=129 // pred_fallthru
            _
          %631 = vnop
        $region130: #{tpu_custom_call.1} parent=27 // pred_fallthru
          _
        // Predicated region
        $region168: #{tpu_custom_call.1} parent=27 // pred_check
          %p632 = pneg %p306
        $region169: #{tpu_custom_call.1} parent=27 // pred_check_branch
          %634 = sbr.rel (%p632) target = $region171
        $region170: #{tpu_custom_call.1} parent=27 // pred_region
          %s635 = sand.u32 %s296, 1
          %s636 = sand.u32 %s296, 1
          %s637 = smul.addr %s636, 256
          %s638 = scalar_lea.vmem [#allocation6], %s637
          %s639 = smul.u32 16, %s29
          %s640 = smul.addr %s639, 4
          %s641 = scalar_lea.vmem %s10, %s640
          // Predicated region
          $region172: #{tpu_custom_call.1} parent=170 // pred_check
            _
          $region173: #{tpu_custom_call.1} parent=170 // pred_check_branch
            %643 = sbr.rel (0) target = $region175
          $region174: #{tpu_custom_call.1} parent=170 // pred_region
            // Predicated region
            $region176: #{tpu_custom_call.1} parent=174 // pred_check
              _
            $region177: #{tpu_custom_call.1} parent=174 // pred_check_branch
              %645 = sbr.rel target = $region179
            $region178: #{tpu_custom_call.1} parent=174 // pred_region
              // Predicated region
              $region191: #{tpu_custom_call.1} parent=178 // pred_check
                _
              $region192: #{tpu_custom_call.1} parent=178 // pred_check_branch
                %787 = sbr.rel (0) target = $region194
              $region193: #{tpu_custom_call.1} parent=178 // pred_region
                loop: start=0, step=1, limit=1
                $region195: #{tpu_custom_call.1} parent=193 // loop_pre_header
                  _
                $region196: #{tpu_custom_call.1} parent=193 // loop_header
                  %s789 = sphi 0, %s793
                  %p790 = scmp.ge.s32.totalorder %s789, 1
                  %s794 = sphi %s641, %s641
                  %s795 = sphi %s638, %s638
                $region197: #{tpu_custom_call.1} parent=193 // loop_header_branch
                  %792 = sbr.rel (%p790) target = $region201
                $region198: #{tpu_custom_call.1} parent=193 // loop_body
                  _
                $region199: #{tpu_custom_call.1} parent=193 // loop_footer
                  %s793 = sadd.s32 1, %s789
                $region200: #{tpu_custom_call.1} parent=193 // loop_footer_branch
                  %788 = sbr.rel target = $region196
                $region201: #{tpu_custom_call.1} parent=193 // loop_exit
                  _
                %s797 = ssub.s32 16, 1
                loop: start=0, step=1, limit=1
                $region202: #{tpu_custom_call.1} parent=193 // loop_pre_header
                  _
                $region203: #{tpu_custom_call.1} parent=193 // loop_header
                  %s799 = sphi 0, %s803
                  %p800 = scmp.ge.s32.totalorder %s799, 1
                  %s804 = sphi %s641, %s641
                  %s805 = sphi %s638, %s638
                $region204: #{tpu_custom_call.1} parent=193 // loop_header_branch
                  %802 = sbr.rel (%p800) target = $region208
                $region205: #{tpu_custom_call.1} parent=193 // loop_body
                  %v806 = vld [vmem:[%s804] sm:%s797]
                  %807 = vst [vmem:[%s805] sm:%s797] %v806
                  %v808 = vld [vmem:[%s804 + $0x4] sm:%s797]
                  %809 = vst [vmem:[%s805 + $0x4] sm:%s797] %v808
                  %v810 = vld [vmem:[%s804 + $0x8] sm:%s797]
                  %811 = vst [vmem:[%s805 + $0x8] sm:%s797] %v810
                  %v812 = vld [vmem:[%s804 + $0xc] sm:%s797]
                  %813 = vst [vmem:[%s805 + $0xc] sm:%s797] %v812
                  %v814 = vld [vmem:[%s804 + $0x10] sm:%s797]
                  %815 = vst [vmem:[%s805 + $0x10] sm:%s797] %v814
                  %v816 = vld [vmem:[%s804 + $0x14] sm:%s797]
                  %817 = vst [vmem:[%s805 + $0x14] sm:%s797] %v816
                  %v818 = vld [vmem:[%s804 + $0x18] sm:%s797]
                  %819 = vst [vmem:[%s805 + $0x18] sm:%s797] %v818
                  %v820 = vld [vmem:[%s804 + $0x1c] sm:%s797]
                  %821 = vst [vmem:[%s805 + $0x1c] sm:%s797] %v820
                  %v822 = vld [vmem:[%s804 + $0x20] sm:%s797]
                  %823 = vst [vmem:[%s805 + $0x20] sm:%s797] %v822
                  %v824 = vld [vmem:[%s804 + $0x24] sm:%s797]
                  %825 = vst [vmem:[%s805 + $0x24] sm:%s797] %v824
                  %v826 = vld [vmem:[%s804 + $0x28] sm:%s797]
                  %827 = vst [vmem:[%s805 + $0x28] sm:%s797] %v826
                  %v828 = vld [vmem:[%s804 + $0x2c] sm:%s797]
                  %829 = vst [vmem:[%s805 + $0x2c] sm:%s797] %v828
                  %v830 = vld [vmem:[%s804 + $0x30] sm:%s797]
                  %831 = vst [vmem:[%s805 + $0x30] sm:%s797] %v830
                  %v832 = vld [vmem:[%s804 + $0x34] sm:%s797]
                  %833 = vst [vmem:[%s805 + $0x34] sm:%s797] %v832
                  %v834 = vld [vmem:[%s804 + $0x38] sm:%s797]
                  %835 = vst [vmem:[%s805 + $0x38] sm:%s797] %v834
                  %v836 = vld [vmem:[%s804 + $0x3c] sm:%s797]
                  %837 = vst [vmem:[%s805 + $0x3c] sm:%s797] %v836
                  %v838 = vld [vmem:[%s804 + $0x80] sm:%s797]
                  %839 = vst [vmem:[%s805 + $0x40] sm:%s797] %v838
                  %v840 = vld [vmem:[%s804 + $0x84] sm:%s797]
                  %841 = vst [vmem:[%s805 + $0x44] sm:%s797] %v840
                  %v842 = vld [vmem:[%s804 + $0x88] sm:%s797]
                  %843 = vst [vmem:[%s805 + $0x48] sm:%s797] %v842
                  %v844 = vld [vmem:[%s804 + $0x8c] sm:%s797]
                  %845 = vst [vmem:[%s805 + $0x4c] sm:%s797] %v844
                  %v846 = vld [vmem:[%s804 + $0x90] sm:%s797]
                  %847 = vst [vmem:[%s805 + $0x50] sm:%s797] %v846
                  %v848 = vld [vmem:[%s804 + $0x94] sm:%s797]
                  %849 = vst [vmem:[%s805 + $0x54] sm:%s797] %v848
                  %v850 = vld [vmem:[%s804 + $0x98] sm:%s797]
                  %851 = vst [vmem:[%s805 + $0x58] sm:%s797] %v850
                  %v852 = vld [vmem:[%s804 + $0x9c] sm:%s797]
                  %853 = vst [vmem:[%s805 + $0x5c] sm:%s797] %v852
                  %v854 = vld [vmem:[%s804 + $0xa0] sm:%s797]
                  %855 = vst [vmem:[%s805 + $0x60] sm:%s797] %v854
                  %v856 = vld [vmem:[%s804 + $0xa4] sm:%s797]
                  %857 = vst [vmem:[%s805 + $0x64] sm:%s797] %v856
                  %v858 = vld [vmem:[%s804 + $0xa8] sm:%s797]
                  %859 = vst [vmem:[%s805 + $0x68] sm:%s797] %v858
                  %v860 = vld [vmem:[%s804 + $0xac] sm:%s797]
                  %861 = vst [vmem:[%s805 + $0x6c] sm:%s797] %v860
                  %v862 = vld [vmem:[%s804 + $0xb0] sm:%s797]
                  %863 = vst [vmem:[%s805 + $0x70] sm:%s797] %v862
                  %v864 = vld [vmem:[%s804 + $0xb4] sm:%s797]
                  %865 = vst [vmem:[%s805 + $0x74] sm:%s797] %v864
                  %v866 = vld [vmem:[%s804 + $0xb8] sm:%s797]
                  %867 = vst [vmem:[%s805 + $0x78] sm:%s797] %v866
                  %v868 = vld [vmem:[%s804 + $0xbc] sm:%s797]
                  %869 = vst [vmem:[%s805 + $0x7c] sm:%s797] %v868
                  %v870 = vld [vmem:[%s804 + $0x100] sm:%s797]
                  %871 = vst [vmem:[%s805 + $0x80] sm:%s797] %v870
                  %v872 = vld [vmem:[%s804 + $0x104] sm:%s797]
                  %873 = vst [vmem:[%s805 + $0x84] sm:%s797] %v872
                  %v874 = vld [vmem:[%s804 + $0x108] sm:%s797]
                  %875 = vst [vmem:[%s805 + $0x88] sm:%s797] %v874
                  %v876 = vld [vmem:[%s804 + $0x10c] sm:%s797]
                  %877 = vst [vmem:[%s805 + $0x8c] sm:%s797] %v876
                  %v878 = vld [vmem:[%s804 + $0x110] sm:%s797]
                  %879 = vst [vmem:[%s805 + $0x90] sm:%s797] %v878
                  %v880 = vld [vmem:[%s804 + $0x114] sm:%s797]
                  %881 = vst [vmem:[%s805 + $0x94] sm:%s797] %v880
                  %v882 = vld [vmem:[%s804 + $0x118] sm:%s797]
                  %883 = vst [vmem:[%s805 + $0x98] sm:%s797] %v882
                  %v884 = vld [vmem:[%s804 + $0x11c] sm:%s797]
                  %885 = vst [vmem:[%s805 + $0x9c] sm:%s797] %v884
                  %v886 = vld [vmem:[%s804 + $0x120] sm:%s797]
                  %887 = vst [vmem:[%s805 + $0xa0] sm:%s797] %v886
                  %v888 = vld [vmem:[%s804 + $0x124] sm:%s797]
                  %889 = vst [vmem:[%s805 + $0xa4] sm:%s797] %v888
                  %v890 = vld [vmem:[%s804 + $0x128] sm:%s797]
                  %891 = vst [vmem:[%s805 + $0xa8] sm:%s797] %v890
                  %v892 = vld [vmem:[%s804 + $0x12c] sm:%s797]
                  %893 = vst [vmem:[%s805 + $0xac] sm:%s797] %v892
                  %v894 = vld [vmem:[%s804 + $0x130] sm:%s797]
                  %895 = vst [vmem:[%s805 + $0xb0] sm:%s797] %v894
                  %v896 = vld [vmem:[%s804 + $0x134] sm:%s797]
                  %897 = vst [vmem:[%s805 + $0xb4] sm:%s797] %v896
                  %v898 = vld [vmem:[%s804 + $0x138] sm:%s797]
                  %899 = vst [vmem:[%s805 + $0xb8] sm:%s797] %v898
                  %v900 = vld [vmem:[%s804 + $0x13c] sm:%s797]
                  %901 = vst [vmem:[%s805 + $0xbc] sm:%s797] %v900
                  %v902 = vld [vmem:[%s804 + $0x180] sm:%s797]
                  %903 = vst [vmem:[%s805 + $0xc0] sm:%s797] %v902
                  %v904 = vld [vmem:[%s804 + $0x184] sm:%s797]
                  %905 = vst [vmem:[%s805 + $0xc4] sm:%s797] %v904
                  %v906 = vld [vmem:[%s804 + $0x188] sm:%s797]
                  %907 = vst [vmem:[%s805 + $0xc8] sm:%s797] %v906
                  %v908 = vld [vmem:[%s804 + $0x18c] sm:%s797]
                  %909 = vst [vmem:[%s805 + $0xcc] sm:%s797] %v908
                  %v910 = vld [vmem:[%s804 + $0x190] sm:%s797]
                  %911 = vst [vmem:[%s805 + $0xd0] sm:%s797] %v910
                  %v912 = vld [vmem:[%s804 + $0x194] sm:%s797]
                  %913 = vst [vmem:[%s805 + $0xd4] sm:%s797] %v912
                  %v914 = vld [vmem:[%s804 + $0x198] sm:%s797]
                  %915 = vst [vmem:[%s805 + $0xd8] sm:%s797] %v914
                  %v916 = vld [vmem:[%s804 + $0x19c] sm:%s797]
                  %917 = vst [vmem:[%s805 + $0xdc] sm:%s797] %v916
                  %v918 = vld [vmem:[%s804 + $0x1a0] sm:%s797]
                  %919 = vst [vmem:[%s805 + $0xe0] sm:%s797] %v918
                  %v920 = vld [vmem:[%s804 + $0x1a4] sm:%s797]
                  %921 = vst [vmem:[%s805 + $0xe4] sm:%s797] %v920
                  %v922 = vld [vmem:[%s804 + $0x1a8] sm:%s797]
                  %923 = vst [vmem:[%s805 + $0xe8] sm:%s797] %v922
                  %v924 = vld [vmem:[%s804 + $0x1ac] sm:%s797]
                  %925 = vst [vmem:[%s805 + $0xec] sm:%s797] %v924
                  %v926 = vld [vmem:[%s804 + $0x1b0] sm:%s797]
                  %927 = vst [vmem:[%s805 + $0xf0] sm:%s797] %v926
                  %v928 = vld [vmem:[%s804 + $0x1b4] sm:%s797]
                  %929 = vst [vmem:[%s805 + $0xf4] sm:%s797] %v928
                  %v930 = vld [vmem:[%s804 + $0x1b8] sm:%s797]
                  %931 = vst [vmem:[%s805 + $0xf8] sm:%s797] %v930
                  %v932 = vld [vmem:[%s804 + $0x1bc] sm:%s797]
                  %933 = vst [vmem:[%s805 + $0xfc] sm:%s797] %v932
                $region206: #{tpu_custom_call.1} parent=193 // loop_footer
                  %s803 = sadd.s32 1, %s799
                $region207: #{tpu_custom_call.1} parent=193 // loop_footer_branch
                  %798 = sbr.rel target = $region203
                $region208: #{tpu_custom_call.1} parent=193 // loop_exit
                  _
              $region194: #{tpu_custom_call.1} parent=178 // pred_fallthru
                _
            $region179: #{tpu_custom_call.1} parent=174 // pred_fallthru
              _
            // Predicated region
            $region180: #{tpu_custom_call.1} parent=174 // pred_check
              _
            $region181: #{tpu_custom_call.1} parent=174 // pred_check_branch
              %647 = sbr.rel (0) target = $region183
            $region182: #{tpu_custom_call.1} parent=174 // pred_region
              %s649 = ssub.s32 16, 1
              loop: start=0, step=1, limit=1
              $region184: #{tpu_custom_call.1} parent=182 // loop_pre_header
                _
              $region185: #{tpu_custom_call.1} parent=182 // loop_header
                %s651 = sphi 0, %s655
                %p652 = scmp.ge.s32.totalorder %s651, 1
                %s656 = sphi %s641, %s641
                %s657 = sphi %s638, %s638
              $region186: #{tpu_custom_call.1} parent=182 // loop_header_branch
                %654 = sbr.rel (%p652) target = $region190
              $region187: #{tpu_custom_call.1} parent=182 // loop_body
                %v658 = vld [vmem:[%s656] sm:%s649]
                %659 = vst [vmem:[%s657] sm:%s649] %v658
                %v660 = vld [vmem:[%s656 + $0x4] sm:%s649]
                %661 = vst [vmem:[%s657 + $0x4] sm:%s649] %v660
                %v662 = vld [vmem:[%s656 + $0x8] sm:%s649]
                %663 = vst [vmem:[%s657 + $0x8] sm:%s649] %v662
                %v664 = vld [vmem:[%s656 + $0xc] sm:%s649]
                %665 = vst [vmem:[%s657 + $0xc] sm:%s649] %v664
                %v666 = vld [vmem:[%s656 + $0x10] sm:%s649]
                %667 = vst [vmem:[%s657 + $0x10] sm:%s649] %v666
                %v668 = vld [vmem:[%s656 + $0x14] sm:%s649]
                %669 = vst [vmem:[%s657 + $0x14] sm:%s649] %v668
                %v670 = vld [vmem:[%s656 + $0x18] sm:%s649]
                %671 = vst [vmem:[%s657 + $0x18] sm:%s649] %v670
                %v672 = vld [vmem:[%s656 + $0x1c] sm:%s649]
                %673 = vst [vmem:[%s657 + $0x1c] sm:%s649] %v672
                %v674 = vld [vmem:[%s656 + $0x20] sm:%s649]
                %675 = vst [vmem:[%s657 + $0x20] sm:%s649] %v674
                %v676 = vld [vmem:[%s656 + $0x24] sm:%s649]
                %677 = vst [vmem:[%s657 + $0x24] sm:%s649] %v676
                %v678 = vld [vmem:[%s656 + $0x28] sm:%s649]
                %679 = vst [vmem:[%s657 + $0x28] sm:%s649] %v678
                %v680 = vld [vmem:[%s656 + $0x2c] sm:%s649]
                %681 = vst [vmem:[%s657 + $0x2c] sm:%s649] %v680
                %v682 = vld [vmem:[%s656 + $0x30] sm:%s649]
                %683 = vst [vmem:[%s657 + $0x30] sm:%s649] %v682
                %v684 = vld [vmem:[%s656 + $0x34] sm:%s649]
                %685 = vst [vmem:[%s657 + $0x34] sm:%s649] %v684
                %v686 = vld [vmem:[%s656 + $0x38] sm:%s649]
                %687 = vst [vmem:[%s657 + $0x38] sm:%s649] %v686
                %v688 = vld [vmem:[%s656 + $0x3c] sm:%s649]
                %689 = vst [vmem:[%s657 + $0x3c] sm:%s649] %v688
                %v690 = vld [vmem:[%s656 + $0x80] sm:%s649]
                %691 = vst [vmem:[%s657 + $0x40] sm:%s649] %v690
                %v692 = vld [vmem:[%s656 + $0x84] sm:%s649]
                %693 = vst [vmem:[%s657 + $0x44] sm:%s649] %v692
                %v694 = vld [vmem:[%s656 + $0x88] sm:%s649]
                %695 = vst [vmem:[%s657 + $0x48] sm:%s649] %v694
                %v696 = vld [vmem:[%s656 + $0x8c] sm:%s649]
                %697 = vst [vmem:[%s657 + $0x4c] sm:%s649] %v696
                %v698 = vld [vmem:[%s656 + $0x90] sm:%s649]
                %699 = vst [vmem:[%s657 + $0x50] sm:%s649] %v698
                %v700 = vld [vmem:[%s656 + $0x94] sm:%s649]
                %701 = vst [vmem:[%s657 + $0x54] sm:%s649] %v700
                %v702 = vld [vmem:[%s656 + $0x98] sm:%s649]
                %703 = vst [vmem:[%s657 + $0x58] sm:%s649] %v702
                %v704 = vld [vmem:[%s656 + $0x9c] sm:%s649]
                %705 = vst [vmem:[%s657 + $0x5c] sm:%s649] %v704
                %v706 = vld [vmem:[%s656 + $0xa0] sm:%s649]
                %707 = vst [vmem:[%s657 + $0x60] sm:%s649] %v706
                %v708 = vld [vmem:[%s656 + $0xa4] sm:%s649]
                %709 = vst [vmem:[%s657 + $0x64] sm:%s649] %v708
                %v710 = vld [vmem:[%s656 + $0xa8] sm:%s649]
                %711 = vst [vmem:[%s657 + $0x68] sm:%s649] %v710
                %v712 = vld [vmem:[%s656 + $0xac] sm:%s649]
                %713 = vst [vmem:[%s657 + $0x6c] sm:%s649] %v712
                %v714 = vld [vmem:[%s656 + $0xb0] sm:%s649]
                %715 = vst [vmem:[%s657 + $0x70] sm:%s649] %v714
                %v716 = vld [vmem:[%s656 + $0xb4] sm:%s649]
                %717 = vst [vmem:[%s657 + $0x74] sm:%s649] %v716
                %v718 = vld [vmem:[%s656 + $0xb8] sm:%s649]
                %719 = vst [vmem:[%s657 + $0x78] sm:%s649] %v718
                %v720 = vld [vmem:[%s656 + $0xbc] sm:%s649]
                %721 = vst [vmem:[%s657 + $0x7c] sm:%s649] %v720
                %v722 = vld [vmem:[%s656 + $0x100] sm:%s649]
                %723 = vst [vmem:[%s657 + $0x80] sm:%s649] %v722
                %v724 = vld [vmem:[%s656 + $0x104] sm:%s649]
                %725 = vst [vmem:[%s657 + $0x84] sm:%s649] %v724
                %v726 = vld [vmem:[%s656 + $0x108] sm:%s649]
                %727 = vst [vmem:[%s657 + $0x88] sm:%s649] %v726
                %v728 = vld [vmem:[%s656 + $0x10c] sm:%s649]
                %729 = vst [vmem:[%s657 + $0x8c] sm:%s649] %v728
                %v730 = vld [vmem:[%s656 + $0x110] sm:%s649]
                %731 = vst [vmem:[%s657 + $0x90] sm:%s649] %v730
                %v732 = vld [vmem:[%s656 + $0x114] sm:%s649]
                %733 = vst [vmem:[%s657 + $0x94] sm:%s649] %v732
                %v734 = vld [vmem:[%s656 + $0x118] sm:%s649]
                %735 = vst [vmem:[%s657 + $0x98] sm:%s649] %v734
                %v736 = vld [vmem:[%s656 + $0x11c] sm:%s649]
                %737 = vst [vmem:[%s657 + $0x9c] sm:%s649] %v736
                %v738 = vld [vmem:[%s656 + $0x120] sm:%s649]
                %739 = vst [vmem:[%s657 + $0xa0] sm:%s649] %v738
                %v740 = vld [vmem:[%s656 + $0x124] sm:%s649]
                %741 = vst [vmem:[%s657 + $0xa4] sm:%s649] %v740
                %v742 = vld [vmem:[%s656 + $0x128] sm:%s649]
                %743 = vst [vmem:[%s657 + $0xa8] sm:%s649] %v742
                %v744 = vld [vmem:[%s656 + $0x12c] sm:%s649]
                %745 = vst [vmem:[%s657 + $0xac] sm:%s649] %v744
                %v746 = vld [vmem:[%s656 + $0x130] sm:%s649]
                %747 = vst [vmem:[%s657 + $0xb0] sm:%s649] %v746
                %v748 = vld [vmem:[%s656 + $0x134] sm:%s649]
                %749 = vst [vmem:[%s657 + $0xb4] sm:%s649] %v748
                %v750 = vld [vmem:[%s656 + $0x138] sm:%s649]
                %751 = vst [vmem:[%s657 + $0xb8] sm:%s649] %v750
                %v752 = vld [vmem:[%s656 + $0x13c] sm:%s649]
                %753 = vst [vmem:[%s657 + $0xbc] sm:%s649] %v752
                %v754 = vld [vmem:[%s656 + $0x180] sm:%s649]
                %755 = vst [vmem:[%s657 + $0xc0] sm:%s649] %v754
                %v756 = vld [vmem:[%s656 + $0x184] sm:%s649]
                %757 = vst [vmem:[%s657 + $0xc4] sm:%s649] %v756
                %v758 = vld [vmem:[%s656 + $0x188] sm:%s649]
                %759 = vst [vmem:[%s657 + $0xc8] sm:%s649] %v758
                %v760 = vld [vmem:[%s656 + $0x18c] sm:%s649]
                %761 = vst [vmem:[%s657 + $0xcc] sm:%s649] %v760
                %v762 = vld [vmem:[%s656 + $0x190] sm:%s649]
                %763 = vst [vmem:[%s657 + $0xd0] sm:%s649] %v762
                %v764 = vld [vmem:[%s656 + $0x194] sm:%s649]
                %765 = vst [vmem:[%s657 + $0xd4] sm:%s649] %v764
                %v766 = vld [vmem:[%s656 + $0x198] sm:%s649]
                %767 = vst [vmem:[%s657 + $0xd8] sm:%s649] %v766
                %v768 = vld [vmem:[%s656 + $0x19c] sm:%s649]
                %769 = vst [vmem:[%s657 + $0xdc] sm:%s649] %v768
                %v770 = vld [vmem:[%s656 + $0x1a0] sm:%s649]
                %771 = vst [vmem:[%s657 + $0xe0] sm:%s649] %v770
                %v772 = vld [vmem:[%s656 + $0x1a4] sm:%s649]
                %773 = vst [vmem:[%s657 + $0xe4] sm:%s649] %v772
                %v774 = vld [vmem:[%s656 + $0x1a8] sm:%s649]
                %775 = vst [vmem:[%s657 + $0xe8] sm:%s649] %v774
                %v776 = vld [vmem:[%s656 + $0x1ac] sm:%s649]
                %777 = vst [vmem:[%s657 + $0xec] sm:%s649] %v776
                %v778 = vld [vmem:[%s656 + $0x1b0] sm:%s649]
                %779 = vst [vmem:[%s657 + $0xf0] sm:%s649] %v778
                %v780 = vld [vmem:[%s656 + $0x1b4] sm:%s649]
                %781 = vst [vmem:[%s657 + $0xf4] sm:%s649] %v780
                %v782 = vld [vmem:[%s656 + $0x1b8] sm:%s649]
                %783 = vst [vmem:[%s657 + $0xf8] sm:%s649] %v782
                %v784 = vld [vmem:[%s656 + $0x1bc] sm:%s649]
                %785 = vst [vmem:[%s657 + $0xfc] sm:%s649] %v784
              $region188: #{tpu_custom_call.1} parent=182 // loop_footer
                %s655 = sadd.s32 1, %s651
              $region189: #{tpu_custom_call.1} parent=182 // loop_footer_branch
                %650 = sbr.rel target = $region185
              $region190: #{tpu_custom_call.1} parent=182 // loop_exit
                _
            $region183: #{tpu_custom_call.1} parent=174 // pred_fallthru
              _
          $region175: #{tpu_custom_call.1} parent=170 // pred_fallthru
            _
          %934 = vnop
        $region171: #{tpu_custom_call.1} parent=27 // pred_fallthru
          _
      $region28: #{tpu_custom_call.1} parent=5 // pred_fallthru
        _
      %p935 = scmp.le.s32.totalorder 1, %s20
      %p936 = scmp.lt.s32.totalorder %s20, 9
      %p937 = pnand %p935, %p936
      %p938 = pneg %p937
      // Predicated region
      $region209: #{tpu_custom_call.1} parent=5 // pred_check
        _
      $region210: #{tpu_custom_call.1} parent=5 // pred_check_branch
        %940 = sbr.rel (%p937) target = $region212
      $region211: #{tpu_custom_call.1} parent=5 // pred_region
        %s941 = ssub.s32 %s20, 1
        %s942 = sand.u32 %s54, 1
        %s943 = sand.u32 %s54, 1
        %s944 = smul.addr %s943, 16
        %s945 = scalar_lea.vmem [#allocation3], %s944
        // Predicated region
        $region213: #{tpu_custom_call.1} parent=211 // pred_check
          %p946 = pneg %p67
        $region214: #{tpu_custom_call.1} parent=211 // pred_check_branch
          %948 = sbr.rel (%p946) target = $region216
        $region215: #{tpu_custom_call.1} parent=211 // pred_region
          _
        $region216: #{tpu_custom_call.1} parent=211 // pred_fallthru
          _
        %s949 = sand.u32 %s132, 1
        %s950 = sand.u32 %s132, 1
        %s951 = smul.addr %s950, 16
        %s952 = scalar_lea.vmem [#allocation4], %s951
        // Predicated region
        $region217: #{tpu_custom_call.1} parent=211 // pred_check
          %p953 = pneg %p145
        $region218: #{tpu_custom_call.1} parent=211 // pred_check_branch
          %955 = sbr.rel (%p953) target = $region220
        $region219: #{tpu_custom_call.1} parent=211 // pred_region
          _
        $region220: #{tpu_custom_call.1} parent=211 // pred_fallthru
          _
        %s956 = sand.u32 %s273, 1
        %s957 = sand.u32 %s273, 1
        %s958 = smul.addr %s957, 64
        %s959 = scalar_lea.vmem [#allocation5], %s958
        // Predicated region
        $region221: #{tpu_custom_call.1} parent=211 // pred_check
          %p960 = pneg %p286
        $region222: #{tpu_custom_call.1} parent=211 // pred_check_branch
          %962 = sbr.rel (%p960) target = $region224
        $region223: #{tpu_custom_call.1} parent=211 // pred_region
          _
        $region224: #{tpu_custom_call.1} parent=211 // pred_fallthru
          _
        %s963 = sand.u32 %s299, 1
        %s964 = sand.u32 %s299, 1
        %s965 = smul.addr %s964, 256
        %s966 = scalar_lea.vmem [#allocation6], %s965
        // Predicated region
        $region225: #{tpu_custom_call.1} parent=211 // pred_check
          %p967 = pneg %p312
        $region226: #{tpu_custom_call.1} parent=211 // pred_check_branch
          %969 = sbr.rel (%p967) target = $region228
        $region227: #{tpu_custom_call.1} parent=211 // pred_region
          _
        $region228: #{tpu_custom_call.1} parent=211 // pred_fallthru
          _
        %s970 = sand.u32 %s54, 1
        %s971 = sand.u32 %s54, 1
        %s972 = smul.addr %s971, 16
        %s973 = scalar_lea.vmem [#allocation3], %s972
        %p974 = pneg %p67
        %p975 = pneg %p64
        %p976 = scmp.lt.s32.totalorder %s30, 1
        %s977 = scalar_select %p976, %s30, 1
        %s978 = scalar_lea.vmem %s1, %s977
        %p979 = pneg %p93
        %p980 = pneg %p90
        %p981 = scmp.lt.s32.totalorder %s30, 1
        %s982 = scalar_select %p981, %s30, 1
        %s983 = smul.addr %s982, 4
        %s984 = scalar_lea.vmem %s2, %s983
        %p985 = pneg %p119
        %p986 = pneg %p116
        %s987 = sand.u32 %s132, 1
        %s988 = sand.u32 %s132, 1
        %s989 = smul.addr %s988, 16
        %s990 = scalar_lea.vmem [#allocation4], %s989
        %p991 = pneg %p145
        %p992 = pneg %p142
        %p993 = scmp.lt.s32.totalorder %s32, 1
        %s994 = scalar_select %p993, %s32, 1
        %s995 = scalar_lea.vmem %s4, %s994
        %p996 = pneg %p171
        %p997 = pneg %p168
        %s998 = smul.u32 16, %s32
        %p999 = scmp.lt.s32.totalorder %s998, 31
        %s1000 = scalar_select %p999, %s998, 31
        %s1001 = smul.addr %s1000, 4
        %s1002 = scalar_lea.vmem %s5, %s1001
        %p1003 = pneg %p197
        %p1004 = pneg %p194
        %p1005 = pneg %p218
        %p1006 = pneg %p215
        %p1007 = pneg %p239
        %p1008 = pneg %p236
        %p1009 = pneg %p260
        %p1010 = pneg %p257
        %s1011 = sand.u32 %s273, 1
        %s1012 = sand.u32 %s273, 1
        %s1013 = smul.addr %s1012, 64
        %s1014 = scalar_lea.vmem [#allocation5], %s1013
        %p1015 = pneg %p286
        %p1016 = pneg %p283
        %s1017 = sand.u32 %s299, 1
        %s1018 = sand.u32 %s299, 1
        %s1019 = smul.addr %s1018, 256
        %s1020 = scalar_lea.vmem [#allocation6], %s1019
        %p1021 = pneg %p312
        %p1022 = pneg %p309
        %p1023 = pneg %p340
        %p1024 = pneg %p337
        %s1025 = sand.u32 %s327, 1
        %s1026 = scalar_lea.sflag [#allocation8], %s1025
        %s1027 = sand.u32 %s327, 1
        %s1028 = smul.addr %s1027, 32
        %s1029 = scalar_lea.vmem [#allocation7], %s1028
        %p1030 = scmp.lt.s32.totalorder %s30, 1
        %s1031 = scalar_select %p1030, %s30, 1
        %s1032 = scalar_lea.vmem %s1, %s1031
        %p1033 = scmp.lt.s32.totalorder %s30, 1
        %s1034 = scalar_select %p1033, %s30, 1
        %s1035 = smul.addr %s1034, 4
        %s1036 = scalar_lea.vmem %s2, %s1035
        %p1037 = scmp.lt.s32.totalorder %s32, 1
        %s1038 = scalar_select %p1037, %s32, 1
        %s1039 = scalar_lea.vmem %s4, %s1038
        %s1040 = smul.u32 16, %s32
        %p1041 = scmp.lt.s32.totalorder %s1040, 31
        %s1042 = scalar_select %p1041, %s1040, 31
        %s1043 = smul.addr %s1042, 4
        %s1044 = scalar_lea.vmem %s5, %s1043
        %s1045 = smul.u32 16, %s32
        %s1046 = smul.u32 16, %s32
        %v1048 = vld [vmem:[%s945] sm:$0xf]
        %v1049 = vld [vmem:[%s945 + $0x4] sm:$0xf]
        %v1050 = vld [vmem:[%s945 + $0x8] sm:$0xf]
        %v1051 = vld [vmem:[%s945 + $0xc] sm:$0xf]
        %p1052 = scmp.eq.s32.totalorder %s32, 0
        // Predicated region
        $region229: #{tpu_custom_call.1} parent=211 // pred_check
          %p1053 = pneg %p1052
        $region230: #{tpu_custom_call.1} parent=211 // pred_check_branch
          %1055 = sbr.rel (%p1053) target = $region232
        $region231: #{tpu_custom_call.1} parent=211 // pred_region
          %v1056 = vld [vmem:[%s7] sm:$0xf]
          %v1057 = vld [vmem:[%s7 + $0x4] sm:$0xf]
          %v1058 = vld [vmem:[%s7 + $0x8] sm:$0xf]
          %v1059 = vld [vmem:[%s7 + $0xc] sm:$0xf]
          %v1060 = vld [vmem:[%s7 + $0x10] sm:$0xf]
          %v1061 = vld [vmem:[%s7 + $0x14] sm:$0xf]
          %v1062 = vld [vmem:[%s7 + $0x18] sm:$0xf]
          %v1063 = vld [vmem:[%s7 + $0x1c] sm:$0xf]
          %v1064 = vld [vmem:[%s7 + $0x20] sm:$0xf]
          %v1065 = vld [vmem:[%s7 + $0x24] sm:$0xf]
          %v1066 = vld [vmem:[%s7 + $0x28] sm:$0xf]
          %v1067 = vld [vmem:[%s7 + $0x2c] sm:$0xf]
          %v1068 = vld [vmem:[%s7 + $0x30] sm:$0xf]
          %v1069 = vld [vmem:[%s7 + $0x34] sm:$0xf]
          %v1070 = vld [vmem:[%s7 + $0x38] sm:$0xf]
          %v1071 = vld [vmem:[%s7 + $0x3c] sm:$0xf]
          %v1072 = vld [vmem:[%s8] sm:$0x1]
          %v1073 = vld [vmem:[%s8 + $0x1] sm:$0x1]
          %v1074 = vld [vmem:[%s8 + $0x2] sm:$0x1]
          %v1075 = vld [vmem:[%s8 + $0x3] sm:$0x1]
          %v1080 = vlaneseq
          %v1081 = vshrl.u32 %v1080, 7
          %v1082 = vsub.s32 0, %v1081
          %v1083 = vrot.slane %v1072, %v1082
          %v1084 = vlaneseq
          %v1085 = vshrl.u32 %v1084, 7
          %v1086 = vsub.s32 0, %v1085
          %v1087 = vrot.slane %v1073, %v1086
          %v1088 = vlaneseq
          %v1089 = vshrl.u32 %v1088, 7
          %v1090 = vsub.s32 0, %v1089
          %v1091 = vrot.slane %v1074, %v1090
          %v1092 = vlaneseq
          %v1093 = vshrl.u32 %v1092, 7
          %v1094 = vsub.s32 0, %v1093
          %v1095 = vrot.slane %v1075, %v1094
          %v1104 = vunpack.c.l.b16 %v1056
          %v1105 = vunpack.c.l.b16 %v1057
          %v1106 = vunpack.c.l.b16 %v1058
          %v1107 = vunpack.c.l.b16 %v1059
          %v1108 = vpack.c.b16 %v1105, %v1104
          %v1109 = vpack.c.b16 %v1107, %v1106
          %vm1112 = vcmask 261120
          %v1114 = vsel %vm1112, %v1048, 0
          %1116 = vmatprep.subr.bf16.mxu0 0
          %1117 = vmatpush1.bf16.msra.mxu0 0
          %1118 = vmatprep.subr.bf16.mxu0 0
          %1119 = vmatpush1.bf16.msra.mxu0 0
          %1120 = vmatprep.subr.bf16.mxu0 0
          %1121 = vmatpush1.bf16.msra.mxu0 0
          %1122 = vmatprep.subr.bf16.mxu0 0
          %1123 = vmatpush1.bf16.msra.mxu0 0
          %1124 = vmatprep.subr.bf16.mxu0 0
          %1125 = vmatpush1.bf16.msra.mxu0 0
          %1126 = vmatprep.subr.bf16.mxu0 0
          %1127 = vmatpush1.bf16.msra.mxu0 0
          %1128 = vmatprep.subr.bf16.mxu0 0
          %1129 = vmatpush1.bf16.msra.mxu0 %v1109
          %1130 = vmatprep.subr.bf16.mxu0 0
          %1131 = vmatpush1.bf16.msra.mxu0 %v1108
          %1132 = vmatprep.subr.bf16.mxu0 0
          %1133 = vmatpush2.bf16.msra.mxu0 0
          %1134 = vmatprep.subr.bf16.mxu0 0
          %1135 = vmatpush2.bf16.msra.mxu0 0
          %1136 = vmatprep.subr.bf16.mxu0 0
          %1137 = vmatpush2.bf16.msra.mxu0 0
          %1138 = vmatprep.subr.bf16.mxu0 0
          %1139 = vmatpush2.bf16.msra.mxu0 0
          %1140 = vmatprep.subr.bf16.mxu0 0
          %1141 = vmatpush2.bf16.msra.mxu0 0
          %1142 = vmatprep.subr.bf16.mxu0 0
          %1143 = vmatpush2.bf16.msra.mxu0 0
          %1144 = vmatprep.subr.bf16.mxu0 0
          %1145 = vmatpush2.bf16.msra.mxu0 0
          %1146 = vmatprep.subr.bf16.mxu0 0
          %1147 = vmatpush2.bf16.msra.mxu0 0
          %1148 = vmatprep.mubr.bf16.mxu0 0
          %1149 = vmatmul.mubr.bf16.gmra.mxu0 %v1114
          %v1150 = vpop.f32.mrf.mxu0
          %v1151 = vadd.f32 %v1083, %v1150
          %v1152 = vpop.f32.mrf.mxu0
          %v1153 = vpop.f32.mrf.mxu0
          %v1154 = vpop.f32.mrf.mxu0
          %1155 = vdwg.mxu0
          %v1160 = vunpack.c.l.b16 %v1060
          %v1161 = vunpack.c.l.b16 %v1061
          %v1162 = vunpack.c.l.b16 %v1062
          %v1163 = vunpack.c.l.b16 %v1063
          %v1164 = vpack.c.b16 %v1161, %v1160
          %v1165 = vpack.c.b16 %v1163, %v1162
          %v1169 = vsel %vm1112, %v1049, 0
          %1171 = vmatprep.subr.bf16.mxu0 0
          %1172 = vmatpush1.bf16.msra.mxu0 0
          %1173 = vmatprep.subr.bf16.mxu0 0
          %1174 = vmatpush1.bf16.msra.mxu0 0
          %1175 = vmatprep.subr.bf16.mxu0 0
          %1176 = vmatpush1.bf16.msra.mxu0 0
          %1177 = vmatprep.subr.bf16.mxu0 0
          %1178 = vmatpush1.bf16.msra.mxu0 0
          %1179 = vmatprep.subr.bf16.mxu0 0
          %1180 = vmatpush1.bf16.msra.mxu0 0
          %1181 = vmatprep.subr.bf16.mxu0 0
          %1182 = vmatpush1.bf16.msra.mxu0 0
          %1183 = vmatprep.subr.bf16.mxu0 0
          %1184 = vmatpush1.bf16.msra.mxu0 %v1165
          %1185 = vmatprep.subr.bf16.mxu0 0
          %1186 = vmatpush1.bf16.msra.mxu0 %v1164
          %1187 = vmatprep.subr.bf16.mxu0 0
          %1188 = vmatpush2.bf16.msra.mxu0 0
          %1189 = vmatprep.subr.bf16.mxu0 0
          %1190 = vmatpush2.bf16.msra.mxu0 0
          %1191 = vmatprep.subr.bf16.mxu0 0
          %1192 = vmatpush2.bf16.msra.mxu0 0
          %1193 = vmatprep.subr.bf16.mxu0 0
          %1194 = vmatpush2.bf16.msra.mxu0 0
          %1195 = vmatprep.subr.bf16.mxu0 0
          %1196 = vmatpush2.bf16.msra.mxu0 0
          %1197 = vmatprep.subr.bf16.mxu0 0
          %1198 = vmatpush2.bf16.msra.mxu0 0
          %1199 = vmatprep.subr.bf16.mxu0 0
          %1200 = vmatpush2.bf16.msra.mxu0 0
          %1201 = vmatprep.subr.bf16.mxu0 0
          %1202 = vmatpush2.bf16.msra.mxu0 0
          %1203 = vmatprep.mubr.bf16.mxu0 0
          %1204 = vmatmul.mubr.bf16.gmra.mxu0 %v1169
          %v1205 = vpop.f32.mrf.mxu0
          %v1206 = vadd.f32 %v1087, %v1205
          %v1207 = vpop.f32.mrf.mxu0
          %v1208 = vpop.f32.mrf.mxu0
          %v1209 = vpop.f32.mrf.mxu0
          %1210 = vdwg.mxu0
          %v1215 = vunpack.c.l.b16 %v1064
          %v1216 = vunpack.c.l.b16 %v1065
          %v1217 = vunpack.c.l.b16 %v1066
          %v1218 = vunpack.c.l.b16 %v1067
          %v1219 = vpack.c.b16 %v1216, %v1215
          %v1220 = vpack.c.b16 %v1218, %v1217
          %v1224 = vsel %vm1112, %v1050, 0
          %1226 = vmatprep.subr.bf16.mxu0 0
          %1227 = vmatpush1.bf16.msra.mxu0 0
          %1228 = vmatprep.subr.bf16.mxu0 0
          %1229 = vmatpush1.bf16.msra.mxu0 0
          %1230 = vmatprep.subr.bf16.mxu0 0
          %1231 = vmatpush1.bf16.msra.mxu0 0
          %1232 = vmatprep.subr.bf16.mxu0 0
          %1233 = vmatpush1.bf16.msra.mxu0 0
          %1234 = vmatprep.subr.bf16.mxu0 0
          %1235 = vmatpush1.bf16.msra.mxu0 0
          %1236 = vmatprep.subr.bf16.mxu0 0
          %1237 = vmatpush1.bf16.msra.mxu0 0
          %1238 = vmatprep.subr.bf16.mxu0 0
          %1239 = vmatpush1.bf16.msra.mxu0 %v1220
          %1240 = vmatprep.subr.bf16.mxu0 0
          %1241 = vmatpush1.bf16.msra.mxu0 %v1219
          %1242 = vmatprep.subr.bf16.mxu0 0
          %1243 = vmatpush2.bf16.msra.mxu0 0
          %1244 = vmatprep.subr.bf16.mxu0 0
          %1245 = vmatpush2.bf16.msra.mxu0 0
          %1246 = vmatprep.subr.bf16.mxu0 0
          %1247 = vmatpush2.bf16.msra.mxu0 0
          %1248 = vmatprep.subr.bf16.mxu0 0
          %1249 = vmatpush2.bf16.msra.mxu0 0
          %1250 = vmatprep.subr.bf16.mxu0 0
          %1251 = vmatpush2.bf16.msra.mxu0 0
          %1252 = vmatprep.subr.bf16.mxu0 0
          %1253 = vmatpush2.bf16.msra.mxu0 0
          %1254 = vmatprep.subr.bf16.mxu0 0
          %1255 = vmatpush2.bf16.msra.mxu0 0
          %1256 = vmatprep.subr.bf16.mxu0 0
          %1257 = vmatpush2.bf16.msra.mxu0 0
          %1258 = vmatprep.mubr.bf16.mxu0 0
          %1259 = vmatmul.mubr.bf16.gmra.mxu0 %v1224
          %v1260 = vpop.f32.mrf.mxu0
          %v1261 = vadd.f32 %v1091, %v1260
          %v1262 = vpop.f32.mrf.mxu0
          %v1263 = vpop.f32.mrf.mxu0
          %v1264 = vpop.f32.mrf.mxu0
          %1265 = vdwg.mxu0
          %v1270 = vunpack.c.l.b16 %v1068
          %v1271 = vunpack.c.l.b16 %v1069
          %v1272 = vunpack.c.l.b16 %v1070
          %v1273 = vunpack.c.l.b16 %v1071
          %v1274 = vpack.c.b16 %v1271, %v1270
          %v1275 = vpack.c.b16 %v1273, %v1272
          %v1279 = vsel %vm1112, %v1051, 0
          %1281 = vmatprep.subr.bf16.mxu0 0
          %1282 = vmatpush1.bf16.msra.mxu0 0
          %1283 = vmatprep.subr.bf16.mxu0 0
          %1284 = vmatpush1.bf16.msra.mxu0 0
          %1285 = vmatprep.subr.bf16.mxu0 0
          %1286 = vmatpush1.bf16.msra.mxu0 0
          %1287 = vmatprep.subr.bf16.mxu0 0
          %1288 = vmatpush1.bf16.msra.mxu0 0
          %1289 = vmatprep.subr.bf16.mxu0 0
          %1290 = vmatpush1.bf16.msra.mxu0 0
          %1291 = vmatprep.subr.bf16.mxu0 0
          %1292 = vmatpush1.bf16.msra.mxu0 0
          %1293 = vmatprep.subr.bf16.mxu0 0
          %1294 = vmatpush1.bf16.msra.mxu0 %v1275
          %1295 = vmatprep.subr.bf16.mxu0 0
          %1296 = vmatpush1.bf16.msra.mxu0 %v1274
          %1297 = vmatprep.subr.bf16.mxu0 0
          %1298 = vmatpush2.bf16.msra.mxu0 0
          %1299 = vmatprep.subr.bf16.mxu0 0
          %1300 = vmatpush2.bf16.msra.mxu0 0
          %1301 = vmatprep.subr.bf16.mxu0 0
          %1302 = vmatpush2.bf16.msra.mxu0 0
          %1303 = vmatprep.subr.bf16.mxu0 0
          %1304 = vmatpush2.bf16.msra.mxu0 0
          %1305 = vmatprep.subr.bf16.mxu0 0
          %1306 = vmatpush2.bf16.msra.mxu0 0
          %1307 = vmatprep.subr.bf16.mxu0 0
          %1308 = vmatpush2.bf16.msra.mxu0 0
          %1309 = vmatprep.subr.bf16.mxu0 0
          %1310 = vmatpush2.bf16.msra.mxu0 0
          %1311 = vmatprep.subr.bf16.mxu0 0
          %1312 = vmatpush2.bf16.msra.mxu0 0
          %1313 = vmatprep.mubr.bf16.mxu0 0
          %1314 = vmatmul.mubr.bf16.gmra.mxu0 %v1279
          %v1315 = vpop.f32.mrf.mxu0
          %v1316 = vadd.f32 %v1095, %v1315
          %v1317 = vpop.f32.mrf.mxu0
          %v1318 = vpop.f32.mrf.mxu0
          %v1319 = vpop.f32.mrf.mxu0
          %1320 = vdwg.mxu0
          %vm1321 = vcmask 31744
          %v1322 = vsel %vm1321, %v1151, -inf
          %1323 = vmax.xlane.f32.xlu0 %v1322
          %v1324 = vpop.xlane.xlu0 %1323
          %v1325 = vsel %vm1321, %v1206, -inf
          %1326 = vmax.xlane.f32.xlu0 %v1325
          %v1327 = vpop.xlane.xlu0 %1326
          %v1328 = vsel %vm1321, %v1261, -inf
          %1329 = vmax.xlane.f32.xlu0 %v1328
          %v1330 = vpop.xlane.xlu0 %1329
          %v1331 = vsel %vm1321, %v1316, -inf
          %1332 = vmax.xlane.f32.xlu0 %v1331
          %v1333 = vpop.xlane.xlu0 %1332
          %v1334 = vsub.f32 %v1151, %v1324
          %v1335 = vsub.f32 %v1206, %v1327
          %v1336 = vsub.f32 %v1261, %v1330
          %v1337 = vsub.f32 %v1316, %v1333
          %v1338 = vmul.f32 %v1334, 1.442695
          %v1339 = vpow.pop %v1338
          %v1340 = vmul.f32 %v1335, 1.442695
          %v1341 = vpow.pop %v1340
          %v1342 = vmul.f32 %v1336, 1.442695
          %v1343 = vpow.pop %v1342
          %v1344 = vmul.f32 %v1337, 1.442695
          %v1345 = vpow.pop %v1344
          %v1346 = vsel %vm1321, %v1339, 0.0
          %1347 = vadd.xlane.f32.xlu0 %v1346
          %v1348 = vpop.xlane.xlu0 %1347
          %v1349 = vsel %vm1321, %v1341, 0.0
          %1350 = vadd.xlane.f32.xlu0 %v1349
          %v1351 = vpop.xlane.xlu0 %1350
          %v1352 = vsel %vm1321, %v1343, 0.0
          %1353 = vadd.xlane.f32.xlu0 %v1352
          %v1354 = vpop.xlane.xlu0 %1353
          %v1355 = vsel %vm1321, %v1345, 0.0
          %1356 = vadd.xlane.f32.xlu0 %v1355
          %v1357 = vpop.xlane.xlu0 %1356
          %v1358 = vrcp.pop %v1348
          %v1359 = vrcp.pop %v1351
          %v1360 = vrcp.pop %v1354
          %v1361 = vrcp.pop %v1357
          %v1362 = vmul.f32 %v1339, %v1358
          %v1363 = vmul.f32 %v1341, %v1359
          %v1364 = vmul.f32 %v1343, %v1360
          %v1365 = vmul.f32 %v1345, %v1361
          %v1366 = vld [vmem:[%s1032] sm:$0x1]
          %v1368 = vlaneseq
          %v1369 = vshrl.u32 %v1368, 7
          %v1370 = vsub.s32 0, %v1369
          %v1371 = vrot.slane %v1366, %v1370
          %v1373 = vmul.f32 %v1362, %v1371
          %v1374 = vmul.f32 %v1363, %v1371
          %v1375 = vmul.f32 %v1364, %v1371
          %v1376 = vmul.f32 %v1365, %v1371
          %v1377 = vsel %vm1321, %v1373, 0.0
          %1378 = vadd.xlane.f32.xlu0 %v1377
          %v1379 = vpop.xlane.xlu0 %1378
          %v1380 = vsel %vm1321, %v1374, 0.0
          %1381 = vadd.xlane.f32.xlu0 %v1380
          %v1382 = vpop.xlane.xlu0 %1381
          %v1383 = vsel %vm1321, %v1375, 0.0
          %1384 = vadd.xlane.f32.xlu0 %v1383
          %v1385 = vpop.xlane.xlu0 %1384
          %v1386 = vsel %vm1321, %v1376, 0.0
          %1387 = vadd.xlane.f32.xlu0 %v1386
          %v1388 = vpop.xlane.xlu0 %1387
          %v1389 = vadd.f32 %v1379, 1e-06
          %v1390 = vadd.f32 %v1382, 1e-06
          %v1391 = vadd.f32 %v1385, 1e-06
          %v1392 = vadd.f32 %v1388, 1e-06
          %v1393 = vrcp.pop %v1389
          %v1394 = vmul.f32 %v1373, %v1393
          %v1395 = vrcp.pop %v1390
          %v1396 = vmul.f32 %v1374, %v1395
          %v1397 = vrcp.pop %v1391
          %v1398 = vmul.f32 %v1375, %v1397
          %v1399 = vrcp.pop %v1392
          %v1400 = vmul.f32 %v1376, %v1399
          %v1401 = vld [vmem:[%s1036] sm:$0xf]
          %v1404 = vunpack.c.l.s4 1966171168
          %v1405 = vunpack.c.0.s8 %v1404
          %v1406 = vlaneseq
          %v1407 = vshrl.u32 %v1406, 7
          %v1408 = vsub.s32 %v1405, %v1407
          %v1409 = vrot.slane %v1401, %v1408
          %v1410 = vcombine.high %v1409, %v1409
          %v1412 = vunpack.c.l.s4 1966171168
          %v1413 = vunpack.c.0.s8 %v1412
          %v1414 = vlaneseq
          %v1415 = vshrl.u32 %v1414, 7
          %v1416 = vsub.s32 %v1413, %v1415
          %v1417 = vrot.slane %v1409, %v1416
          %v1419 = vunpack.c.l.s4 1966171168
          %v1420 = vunpack.c.0.s8 %v1419
          %v1421 = vlaneseq
          %v1422 = vshrl.u32 %v1421, 7
          %v1423 = vsub.s32 %v1420, %v1422
          %v1424 = vrot.slane %v1410, %v1423
          %v1425 = vcombine.high %v1417, %v1417
          %v1426 = vcombine.high %v1424, %v1424
          %v1427 = vlaneseq
          %v1428 = vshrl.u32 %v1427, 7
          %v1429 = vsub.s32 0, %v1428
          %v1430 = vrot.slane %v1417, %v1429
          %v1431 = vlaneseq
          %v1432 = vshrl.u32 %v1431, 7
          %v1433 = vsub.s32 0, %v1432
          %v1434 = vrot.slane %v1424, %v1433
          %v1435 = vlaneseq
          %v1436 = vshrl.u32 %v1435, 7
          %v1437 = vsub.s32 0, %v1436
          %v1438 = vrot.slane %v1425, %v1437
          %v1439 = vlaneseq
          %v1440 = vshrl.u32 %v1439, 7
          %v1441 = vsub.s32 0, %v1440
          %v1442 = vrot.slane %v1426, %v1441
          %1443 = vset.pattern.permute.xlu0 0
          %1444 = vperm.xlu0 %1443, %v1430
          %v1445 = vpop.permute.xlu0 %1444
          %1447 = vset.pattern.permute.xlu0 0
          %1448 = vperm.xlu0 %1447, %v1434
          %v1449 = vpop.permute.xlu0 %1448
          %1451 = vset.pattern.permute.xlu0 0
          %1452 = vperm.xlu0 %1451, %v1438
          %v1453 = vpop.permute.xlu0 %1452
          %1455 = vset.pattern.permute.xlu0 0
          %1456 = vperm.xlu0 %1455, %v1442
          %v1457 = vpop.permute.xlu0 %1456
          %v1459 = vmul.f32 %v1394, %v1445
          %v1460 = vmul.f32 %v1396, %v1449
          %v1461 = vmul.f32 %v1398, %v1453
          %v1462 = vmul.f32 %v1400, %v1457
          %1463 = vst.msk [vmem:[#allocation2] sm:$0xff] %vm1321, %v1459
          %1464 = vst.msk [vmem:[#allocation2 + $0x8] sm:$0xff] %vm1321, %v1460
          %1465 = vst.msk [vmem:[#allocation2 + $0x10] sm:$0xff] %vm1321, %v1461
          %1466 = vst.msk [vmem:[#allocation2 + $0x18] sm:$0xff] %vm1321, %v1462
        $region232: #{tpu_custom_call.1} parent=211 // pred_fallthru
          _
        %v1467 = vld [vmem:[#allocation2] sm:$0xff]
        %v1468 = vld [vmem:[#allocation2 + $0x8] sm:$0xff]
        %v1469 = vld [vmem:[#allocation2 + $0x10] sm:$0xff]
        %v1470 = vld [vmem:[#allocation2 + $0x18] sm:$0xff]
        %v1471 = vld [vmem:[%s952] sm:$0xf]
        %v1472 = vld [vmem:[%s952 + $0x4] sm:$0xf]
        %v1473 = vld [vmem:[%s952 + $0x8] sm:$0xf]
        %v1474 = vld [vmem:[%s952 + $0xc] sm:$0xf]
        %v1475 = vld [vmem:[%s1039] sm:$0x1]
        %v1477 = vlaneseq
        %v1478 = vshrl.u32 %v1477, 7
        %v1479 = vsub.s32 0, %v1478
        %v1480 = vrot.slane %v1475, %v1479
        %v1486 = vunpack.c.l.b16 %v1048
        %v1487 = vunpack.c.l.b16 %v1049
        %v1488 = vunpack.c.l.b16 %v1050
        %v1489 = vunpack.c.l.b16 %v1051
        %v1490 = vpack.c.b16 %v1487, %v1486
        %v1491 = vpack.c.b16 %v1489, %v1488
        %v1496 = vunpack.c.l.b16 %v1471
        %v1497 = vunpack.c.l.b16 %v1472
        %v1498 = vunpack.c.l.b16 %v1473
        %v1499 = vunpack.c.l.b16 %v1474
        %v1500 = vpack.c.b16 %v1497, %v1496
        %v1501 = vpack.c.b16 %v1499, %v1498
        %vm1504 = vcmask 261120
        %v1506 = vsel %vm1504, %v1490, 0
        %v1509 = vsel %vm1504, %v1491, 0
        %1511 = vmatprep.subr.bf16.mxu0 0
        %1512 = vmatpush1.bf16.msra.mxu0 0
        %1513 = vmatprep.subr.bf16.mxu0 0
        %1514 = vmatpush1.bf16.msra.mxu0 0
        %1515 = vmatprep.subr.bf16.mxu0 0
        %1516 = vmatpush1.bf16.msra.mxu0 0
        %1517 = vmatprep.subr.bf16.mxu0 0
        %1518 = vmatpush1.bf16.msra.mxu0 0
        %1519 = vmatprep.subr.bf16.mxu0 0
        %1520 = vmatpush1.bf16.msra.mxu0 0
        %1521 = vmatprep.subr.bf16.mxu0 0
        %1522 = vmatpush1.bf16.msra.mxu0 0
        %1523 = vmatprep.subr.bf16.mxu0 0
        %1524 = vmatpush1.bf16.msra.mxu0 %v1501
        %1525 = vmatprep.subr.bf16.mxu0 0
        %1526 = vmatpush1.bf16.msra.mxu0 %v1500
        %1527 = vmatprep.subr.bf16.mxu0 0
        %1528 = vmatpush2.bf16.msra.mxu0 0
        %1529 = vmatprep.subr.bf16.mxu0 0
        %1530 = vmatpush2.bf16.msra.mxu0 0
        %1531 = vmatprep.subr.bf16.mxu0 0
        %1532 = vmatpush2.bf16.msra.mxu0 0
        %1533 = vmatprep.subr.bf16.mxu0 0
        %1534 = vmatpush2.bf16.msra.mxu0 0
        %1535 = vmatprep.subr.bf16.mxu0 0
        %1536 = vmatpush2.bf16.msra.mxu0 0
        %1537 = vmatprep.subr.bf16.mxu0 0
        %1538 = vmatpush2.bf16.msra.mxu0 0
        %1539 = vmatprep.subr.bf16.mxu0 0
        %1540 = vmatpush2.bf16.msra.mxu0 0
        %1541 = vmatprep.subr.bf16.mxu0 0
        %1542 = vmatpush2.bf16.msra.mxu0 0
        %1543 = vmatprep.mubr.bf16.mxu0 0
        %1544 = vmatmul.mubr.bf16.gmra.mxu0 %v1506
        %v1545 = vpop.f32.mrf.mxu0
        %v1546 = vadd.f32 %v1480, %v1545
        %v1547 = vpop.f32.mrf.mxu0
        %v1548 = vpop.f32.mrf.mxu0
        %v1549 = vadd.f32 %v1480, %v1548
        %v1550 = vpop.f32.mrf.mxu0
        %1551 = vmatprep.mubr.bf16.mxu0 0
        %1552 = vmatmul.mubr.bf16.gmra.mxu0 %v1509
        %v1553 = vpop.f32.mrf.mxu0
        %v1554 = vadd.f32 %v1480, %v1553
        %v1555 = vpop.f32.mrf.mxu0
        %v1556 = vpop.f32.mrf.mxu0
        %v1557 = vadd.f32 %v1480, %v1556
        %v1558 = vpop.f32.mrf.mxu0
        %1559 = vdwg.mxu0
        %v1560 = vld [vmem:[%s959] sm:$0xf]
        %v1561 = vld [vmem:[%s959 + $0x4] sm:$0xf]
        %v1562 = vld [vmem:[%s959 + $0x8] sm:$0xf]
        %v1563 = vld [vmem:[%s959 + $0xc] sm:$0xf]
        %v1564 = vld [vmem:[%s959 + $0x10] sm:$0xf]
        %v1565 = vld [vmem:[%s959 + $0x14] sm:$0xf]
        %v1566 = vld [vmem:[%s959 + $0x18] sm:$0xf]
        %v1567 = vld [vmem:[%s959 + $0x1c] sm:$0xf]
        %v1568 = vld [vmem:[%s959 + $0x20] sm:$0xf]
        %v1569 = vld [vmem:[%s959 + $0x24] sm:$0xf]
        %v1570 = vld [vmem:[%s959 + $0x28] sm:$0xf]
        %v1571 = vld [vmem:[%s959 + $0x2c] sm:$0xf]
        %v1572 = vld [vmem:[%s959 + $0x30] sm:$0xf]
        %v1573 = vld [vmem:[%s959 + $0x34] sm:$0xf]
        %v1574 = vld [vmem:[%s959 + $0x38] sm:$0xf]
        %v1575 = vld [vmem:[%s959 + $0x3c] sm:$0xf]
        %v1580 = vunpack.c.l.b16 %v1560
        %v1581 = vunpack.c.l.b16 %v1561
        %v1582 = vunpack.c.l.b16 %v1562
        %v1583 = vunpack.c.l.b16 %v1563
        %v1584 = vpack.c.b16 %v1581, %v1580
        %v1585 = vpack.c.b16 %v1583, %v1582
        %v1589 = vsel %vm1504, %v1048, 0
        %1591 = vmatprep.subr.bf16.mxu0 0
        %1592 = vmatpush1.bf16.msra.mxu0 0
        %1593 = vmatprep.subr.bf16.mxu0 0
        %1594 = vmatpush1.bf16.msra.mxu0 0
        %1595 = vmatprep.subr.bf16.mxu0 0
        %1596 = vmatpush1.bf16.msra.mxu0 0
        %1597 = vmatprep.subr.bf16.mxu0 0
        %1598 = vmatpush1.bf16.msra.mxu0 0
        %1599 = vmatprep.subr.bf16.mxu0 0
        %1600 = vmatpush1.bf16.msra.mxu0 0
        %1601 = vmatprep.subr.bf16.mxu0 0
        %1602 = vmatpush1.bf16.msra.mxu0 0
        %1603 = vmatprep.subr.bf16.mxu0 0
        %1604 = vmatpush1.bf16.msra.mxu0 %v1585
        %1605 = vmatprep.subr.bf16.mxu0 0
        %1606 = vmatpush1.bf16.msra.mxu0 %v1584
        %1607 = vmatprep.subr.bf16.mxu0 0
        %1608 = vmatpush2.bf16.msra.mxu0 0
        %1609 = vmatprep.subr.bf16.mxu0 0
        %1610 = vmatpush2.bf16.msra.mxu0 0
        %1611 = vmatprep.subr.bf16.mxu0 0
        %1612 = vmatpush2.bf16.msra.mxu0 0
        %1613 = vmatprep.subr.bf16.mxu0 0
        %1614 = vmatpush2.bf16.msra.mxu0 0
        %1615 = vmatprep.subr.bf16.mxu0 0
        %1616 = vmatpush2.bf16.msra.mxu0 0
        %1617 = vmatprep.subr.bf16.mxu0 0
        %1618 = vmatpush2.bf16.msra.mxu0 0
        %1619 = vmatprep.subr.bf16.mxu0 0
        %1620 = vmatpush2.bf16.msra.mxu0 0
        %1621 = vmatprep.subr.bf16.mxu0 0
        %1622 = vmatpush2.bf16.msra.mxu0 0
        %1623 = vmatprep.mubr.bf16.mxu0 0
        %1624 = vmatmul.mubr.bf16.gmra.mxu0 %v1589
        %v1625 = vpop.f32.mrf.mxu0
        %v1626 = vadd.f32 0.0, %v1625
        %v1627 = vpop.f32.mrf.mxu0
        %v1628 = vpop.f32.mrf.mxu0
        %v1629 = vpop.f32.mrf.mxu0
        %1630 = vdwg.mxu0
        %v1635 = vunpack.c.l.b16 %v1564
        %v1636 = vunpack.c.l.b16 %v1565
        %v1637 = vunpack.c.l.b16 %v1566
        %v1638 = vunpack.c.l.b16 %v1567
        %v1639 = vpack.c.b16 %v1636, %v1635
        %v1640 = vpack.c.b16 %v1638, %v1637
        %v1644 = vsel %vm1504, %v1049, 0
        %1646 = vmatprep.subr.bf16.mxu0 0
        %1647 = vmatpush1.bf16.msra.mxu0 0
        %1648 = vmatprep.subr.bf16.mxu0 0
        %1649 = vmatpush1.bf16.msra.mxu0 0
        %1650 = vmatprep.subr.bf16.mxu0 0
        %1651 = vmatpush1.bf16.msra.mxu0 0
        %1652 = vmatprep.subr.bf16.mxu0 0
        %1653 = vmatpush1.bf16.msra.mxu0 0
        %1654 = vmatprep.subr.bf16.mxu0 0
        %1655 = vmatpush1.bf16.msra.mxu0 0
        %1656 = vmatprep.subr.bf16.mxu0 0
        %1657 = vmatpush1.bf16.msra.mxu0 0
        %1658 = vmatprep.subr.bf16.mxu0 0
        %1659 = vmatpush1.bf16.msra.mxu0 %v1640
        %1660 = vmatprep.subr.bf16.mxu0 0
        %1661 = vmatpush1.bf16.msra.mxu0 %v1639
        %1662 = vmatprep.subr.bf16.mxu0 0
        %1663 = vmatpush2.bf16.msra.mxu0 0
        %1664 = vmatprep.subr.bf16.mxu0 0
        %1665 = vmatpush2.bf16.msra.mxu0 0
        %1666 = vmatprep.subr.bf16.mxu0 0
        %1667 = vmatpush2.bf16.msra.mxu0 0
        %1668 = vmatprep.subr.bf16.mxu0 0
        %1669 = vmatpush2.bf16.msra.mxu0 0
        %1670 = vmatprep.subr.bf16.mxu0 0
        %1671 = vmatpush2.bf16.msra.mxu0 0
        %1672 = vmatprep.subr.bf16.mxu0 0
        %1673 = vmatpush2.bf16.msra.mxu0 0
        %1674 = vmatprep.subr.bf16.mxu0 0
        %1675 = vmatpush2.bf16.msra.mxu0 0
        %1676 = vmatprep.subr.bf16.mxu0 0
        %1677 = vmatpush2.bf16.msra.mxu0 0
        %1678 = vmatprep.mubr.bf16.mxu0 0
        %1679 = vmatmul.mubr.bf16.gmra.mxu0 %v1644
        %v1680 = vpop.f32.mrf.mxu0
        %v1681 = vadd.f32 0.0, %v1680
        %v1682 = vpop.f32.mrf.mxu0
        %v1683 = vpop.f32.mrf.mxu0
        %v1684 = vpop.f32.mrf.mxu0
        %1685 = vdwg.mxu0
        %v1690 = vunpack.c.l.b16 %v1568
        %v1691 = vunpack.c.l.b16 %v1569
        %v1692 = vunpack.c.l.b16 %v1570
        %v1693 = vunpack.c.l.b16 %v1571
        %v1694 = vpack.c.b16 %v1691, %v1690
        %v1695 = vpack.c.b16 %v1693, %v1692
        %v1699 = vsel %vm1504, %v1050, 0
        %1701 = vmatprep.subr.bf16.mxu0 0
        %1702 = vmatpush1.bf16.msra.mxu0 0
        %1703 = vmatprep.subr.bf16.mxu0 0
        %1704 = vmatpush1.bf16.msra.mxu0 0
        %1705 = vmatprep.subr.bf16.mxu0 0
        %1706 = vmatpush1.bf16.msra.mxu0 0
        %1707 = vmatprep.subr.bf16.mxu0 0
        %1708 = vmatpush1.bf16.msra.mxu0 0
        %1709 = vmatprep.subr.bf16.mxu0 0
        %1710 = vmatpush1.bf16.msra.mxu0 0
        %1711 = vmatprep.subr.bf16.mxu0 0
        %1712 = vmatpush1.bf16.msra.mxu0 0
        %1713 = vmatprep.subr.bf16.mxu0 0
        %1714 = vmatpush1.bf16.msra.mxu0 %v1695
        %1715 = vmatprep.subr.bf16.mxu0 0
        %1716 = vmatpush1.bf16.msra.mxu0 %v1694
        %1717 = vmatprep.subr.bf16.mxu0 0
        %1718 = vmatpush2.bf16.msra.mxu0 0
        %1719 = vmatprep.subr.bf16.mxu0 0
        %1720 = vmatpush2.bf16.msra.mxu0 0
        %1721 = vmatprep.subr.bf16.mxu0 0
        %1722 = vmatpush2.bf16.msra.mxu0 0
        %1723 = vmatprep.subr.bf16.mxu0 0
        %1724 = vmatpush2.bf16.msra.mxu0 0
        %1725 = vmatprep.subr.bf16.mxu0 0
        %1726 = vmatpush2.bf16.msra.mxu0 0
        %1727 = vmatprep.subr.bf16.mxu0 0
        %1728 = vmatpush2.bf16.msra.mxu0 0
        %1729 = vmatprep.subr.bf16.mxu0 0
        %1730 = vmatpush2.bf16.msra.mxu0 0
        %1731 = vmatprep.subr.bf16.mxu0 0
        %1732 = vmatpush2.bf16.msra.mxu0 0
        %1733 = vmatprep.mubr.bf16.mxu0 0
        %1734 = vmatmul.mubr.bf16.gmra.mxu0 %v1699
        %v1735 = vpop.f32.mrf.mxu0
        %v1736 = vadd.f32 0.0, %v1735
        %v1737 = vpop.f32.mrf.mxu0
        %v1738 = vpop.f32.mrf.mxu0
        %v1739 = vpop.f32.mrf.mxu0
        %1740 = vdwg.mxu0
        %v1745 = vunpack.c.l.b16 %v1572
        %v1746 = vunpack.c.l.b16 %v1573
        %v1747 = vunpack.c.l.b16 %v1574
        %v1748 = vunpack.c.l.b16 %v1575
        %v1749 = vpack.c.b16 %v1746, %v1745
        %v1750 = vpack.c.b16 %v1748, %v1747
        %v1754 = vsel %vm1504, %v1051, 0
        %1756 = vmatprep.subr.bf16.mxu0 0
        %1757 = vmatpush1.bf16.msra.mxu0 0
        %1758 = vmatprep.subr.bf16.mxu0 0
        %1759 = vmatpush1.bf16.msra.mxu0 0
        %1760 = vmatprep.subr.bf16.mxu0 0
        %1761 = vmatpush1.bf16.msra.mxu0 0
        %1762 = vmatprep.subr.bf16.mxu0 0
        %1763 = vmatpush1.bf16.msra.mxu0 0
        %1764 = vmatprep.subr.bf16.mxu0 0
        %1765 = vmatpush1.bf16.msra.mxu0 0
        %1766 = vmatprep.subr.bf16.mxu0 0
        %1767 = vmatpush1.bf16.msra.mxu0 0
        %1768 = vmatprep.subr.bf16.mxu0 0
        %1769 = vmatpush1.bf16.msra.mxu0 %v1750
        %1770 = vmatprep.subr.bf16.mxu0 0
        %1771 = vmatpush1.bf16.msra.mxu0 %v1749
        %1772 = vmatprep.subr.bf16.mxu0 0
        %1773 = vmatpush2.bf16.msra.mxu0 0
        %1774 = vmatprep.subr.bf16.mxu0 0
        %1775 = vmatpush2.bf16.msra.mxu0 0
        %1776 = vmatprep.subr.bf16.mxu0 0
        %1777 = vmatpush2.bf16.msra.mxu0 0
        %1778 = vmatprep.subr.bf16.mxu0 0
        %1779 = vmatpush2.bf16.msra.mxu0 0
        %1780 = vmatprep.subr.bf16.mxu0 0
        %1781 = vmatpush2.bf16.msra.mxu0 0
        %1782 = vmatprep.subr.bf16.mxu0 0
        %1783 = vmatpush2.bf16.msra.mxu0 0
        %1784 = vmatprep.subr.bf16.mxu0 0
        %1785 = vmatpush2.bf16.msra.mxu0 0
        %1786 = vmatprep.subr.bf16.mxu0 0
        %1787 = vmatpush2.bf16.msra.mxu0 0
        %1788 = vmatprep.mubr.bf16.mxu0 0
        %1789 = vmatmul.mubr.bf16.gmra.mxu0 %v1754
        %v1790 = vpop.f32.mrf.mxu0
        %v1791 = vadd.f32 0.0, %v1790
        %v1792 = vpop.f32.mrf.mxu0
        %v1793 = vpop.f32.mrf.mxu0
        %v1794 = vpop.f32.mrf.mxu0
        %1795 = vdwg.mxu0
        %1797 = vset.pattern.permute.xlu0 0
        %1798 = vperm.xlu0 %1797, %v1467
        %v1799 = vpop.permute.xlu0 %1798
        %1802 = vset.pattern.permute.xlu0 0
        %1803 = vperm.xlu0 %1802, %v1468
        %v1804 = vpop.permute.xlu0 %1803
        %1807 = vset.pattern.permute.xlu0 0
        %1808 = vperm.xlu0 %1807, %v1469
        %v1809 = vpop.permute.xlu0 %1808
        %1812 = vset.pattern.permute.xlu0 0
        %1813 = vperm.xlu0 %1812, %v1470
        %v1814 = vpop.permute.xlu0 %1813
        %v1816 = vmul.f32 %v1799, %v1626
        %v1817 = vmul.f32 %v1804, %v1626
        %v1818 = vmul.f32 %v1809, %v1626
        %v1819 = vmul.f32 %v1814, %v1626
        %1820 = vset.pattern.permute.xlu0 1
        %1821 = vperm.xlu0 %1820, %v1467
        %v1822 = vpop.permute.xlu0 %1821
        %1824 = vset.pattern.permute.xlu0 1
        %1825 = vperm.xlu0 %1824, %v1468
        %v1826 = vpop.permute.xlu0 %1825
        %1828 = vset.pattern.permute.xlu0 1
        %1829 = vperm.xlu0 %1828, %v1469
        %v1830 = vpop.permute.xlu0 %1829
        %1832 = vset.pattern.permute.xlu0 1
        %1833 = vperm.xlu0 %1832, %v1470
        %v1834 = vpop.permute.xlu0 %1833
        %v1836 = vmul.f32 %v1822, %v1681
        %v1837 = vmul.f32 %v1826, %v1681
        %v1838 = vmul.f32 %v1830, %v1681
        %v1839 = vmul.f32 %v1834, %v1681
        %v1840 = vadd.f32 %v1816, %v1836
        %v1841 = vadd.f32 %v1817, %v1837
        %v1842 = vadd.f32 %v1818, %v1838
        %v1843 = vadd.f32 %v1819, %v1839
        %1844 = vset.pattern.permute.xlu0 2
        %1845 = vperm.xlu0 %1844, %v1467
        %v1846 = vpop.permute.xlu0 %1845
        %1848 = vset.pattern.permute.xlu0 2
        %1849 = vperm.xlu0 %1848, %v1468
        %v1850 = vpop.permute.xlu0 %1849
        %1852 = vset.pattern.permute.xlu0 2
        %1853 = vperm.xlu0 %1852, %v1469
        %v1854 = vpop.permute.xlu0 %1853
        %1856 = vset.pattern.permute.xlu0 2
        %1857 = vperm.xlu0 %1856, %v1470
        %v1858 = vpop.permute.xlu0 %1857
        %v1860 = vmul.f32 %v1846, %v1736
        %v1861 = vmul.f32 %v1850, %v1736
        %v1862 = vmul.f32 %v1854, %v1736
        %v1863 = vmul.f32 %v1858, %v1736
        %v1864 = vadd.f32 %v1840, %v1860
        %v1865 = vadd.f32 %v1841, %v1861
        %v1866 = vadd.f32 %v1842, %v1862
        %v1867 = vadd.f32 %v1843, %v1863
        %1868 = vset.pattern.permute.xlu0 3
        %1869 = vperm.xlu0 %1868, %v1467
        %v1870 = vpop.permute.xlu0 %1869
        %1872 = vset.pattern.permute.xlu0 3
        %1873 = vperm.xlu0 %1872, %v1468
        %v1874 = vpop.permute.xlu0 %1873
        %1876 = vset.pattern.permute.xlu0 3
        %1877 = vperm.xlu0 %1876, %v1469
        %v1878 = vpop.permute.xlu0 %1877
        %1880 = vset.pattern.permute.xlu0 3
        %1881 = vperm.xlu0 %1880, %v1470
        %v1882 = vpop.permute.xlu0 %1881
        %v1884 = vmul.f32 %v1870, %v1791
        %v1885 = vmul.f32 %v1874, %v1791
        %v1886 = vmul.f32 %v1878, %v1791
        %v1887 = vmul.f32 %v1882, %v1791
        %v1888 = vadd.f32 %v1864, %v1884
        %v1889 = vadd.f32 %v1865, %v1885
        %v1890 = vadd.f32 %v1866, %v1886
        %v1891 = vadd.f32 %v1867, %v1887
        %v1892 = vadd.f32 %v1546, %v1888
        %v1893 = vadd.f32 %v1549, %v1889
        %v1894 = vadd.f32 %v1554, %v1890
        %v1895 = vadd.f32 %v1557, %v1891
        %v1896 = vmul.f32 %v1892, 0.5
        %v1897 = vmul.f32 %v1893, 0.5
        %v1898 = vmul.f32 %v1894, 0.5
        %v1899 = vmul.f32 %v1895, 0.5
        %v1900 = vmul.f32 %v1892, 0.044715
        %v1901 = vmul.f32 %v1893, 0.044715
        %v1902 = vmul.f32 %v1894, 0.044715
        %v1903 = vmul.f32 %v1895, 0.044715
        %v1904 = vmul.f32 %v1900, %v1892
        %v1905 = vmul.f32 %v1901, %v1893
        %v1906 = vmul.f32 %v1902, %v1894
        %v1907 = vmul.f32 %v1903, %v1895
        %v1908 = vmul.f32 %v1904, %v1892
        %v1909 = vmul.f32 %v1905, %v1893
        %v1910 = vmul.f32 %v1906, %v1894
        %v1911 = vmul.f32 %v1907, %v1895
        %v1912 = vadd.f32 %v1892, %v1908
        %v1913 = vadd.f32 %v1893, %v1909
        %v1914 = vadd.f32 %v1894, %v1910
        %v1915 = vadd.f32 %v1895, %v1911
        %v1916 = vmul.f32 %v1912, 0.7978846
        %v1917 = vmul.f32 %v1913, 0.7978846
        %v1918 = vmul.f32 %v1914, 0.7978846
        %v1919 = vmul.f32 %v1915, 0.7978846
        %v1920 = vtanh.pop %v1916
        %v1921 = vtanh.pop %v1917
        %v1922 = vtanh.pop %v1918
        %v1923 = vtanh.pop %v1919
        %v1924 = vadd.f32 %v1920, 1.0
        %v1925 = vadd.f32 %v1921, 1.0
        %v1926 = vadd.f32 %v1922, 1.0
        %v1927 = vadd.f32 %v1923, 1.0
        %v1928 = vmul.f32 %v1896, %v1924
        %v1929 = vmul.f32 %v1897, %v1925
        %v1930 = vmul.f32 %v1898, %v1926
        %v1931 = vmul.f32 %v1899, %v1927
        %v1932 = vpack.c.bf16 %v1928, %v1928
        %v1933 = vpack.c.bf16 %v1929, %v1929
        %v1934 = vpack.c.bf16 %v1930, %v1930
        %v1935 = vpack.c.bf16 %v1931, %v1931
        %v1936 = vld [vmem:[%s1044] sm:$0xf]
        %v1937 = vld [vmem:[%s1044 + $0x4] sm:$0xf]
        %v1938 = vld [vmem:[%s1044 + $0x8] sm:$0xf]
        %v1939 = vld [vmem:[%s1044 + $0xc] sm:$0xf]
        %v1940 = vld [vmem:[%s1044 + $0x10] sm:$0xf]
        %v1941 = vld [vmem:[%s1044 + $0x14] sm:$0xf]
        %v1942 = vld [vmem:[%s1044 + $0x18] sm:$0xf]
        %v1943 = vld [vmem:[%s1044 + $0x1c] sm:$0xf]
        %v1944 = vld [vmem:[%s1044 + $0x20] sm:$0xf]
        %v1945 = vld [vmem:[%s1044 + $0x24] sm:$0xf]
        %v1946 = vld [vmem:[%s1044 + $0x28] sm:$0xf]
        %v1947 = vld [vmem:[%s1044 + $0x2c] sm:$0xf]
        %v1948 = vld [vmem:[%s1044 + $0x30] sm:$0xf]
        %v1949 = vld [vmem:[%s1044 + $0x34] sm:$0xf]
        %v1950 = vld [vmem:[%s1044 + $0x38] sm:$0xf]
        %v1951 = vld [vmem:[%s1044 + $0x3c] sm:$0xf]
        %v1956 = vunpack.c.l.b16 %v1932
        %v1957 = vunpack.c.l.b16 %v1933
        %v1958 = vunpack.c.l.b16 %v1934
        %v1959 = vunpack.c.l.b16 %v1935
        %v1960 = vpack.c.b16 %v1957, %v1956
        %v1961 = vpack.c.b16 %v1959, %v1958
        %v1980 = vunpack.c.l.b16 %v1936
        %v1981 = vunpack.c.l.b16 %v1937
        %v1982 = vunpack.c.l.b16 %v1938
        %v1983 = vunpack.c.l.b16 %v1939
        %v1984 = vunpack.c.l.b16 %v1940
        %v1985 = vunpack.c.l.b16 %v1941
        %v1986 = vunpack.c.l.b16 %v1942
        %v1987 = vunpack.c.l.b16 %v1943
        %v1988 = vunpack.c.l.b16 %v1944
        %v1989 = vunpack.c.l.b16 %v1945
        %v1990 = vunpack.c.l.b16 %v1946
        %v1991 = vunpack.c.l.b16 %v1947
        %v1992 = vunpack.c.l.b16 %v1948
        %v1993 = vunpack.c.l.b16 %v1949
        %v1994 = vunpack.c.l.b16 %v1950
        %v1995 = vunpack.c.l.b16 %v1951
        %v1996 = vpack.c.b16 %v1981, %v1980
        %v1997 = vpack.c.b16 %v1983, %v1982
        %v1998 = vpack.c.b16 %v1985, %v1984
        %v1999 = vpack.c.b16 %v1987, %v1986
        %v2000 = vpack.c.b16 %v1989, %v1988
        %v2001 = vpack.c.b16 %v1991, %v1990
        %v2002 = vpack.c.b16 %v1993, %v1992
        %v2003 = vpack.c.b16 %v1995, %v1994
        %2012 = vmatprep.subr.bf16.mxu0 0
        %2013 = vmatpush1.bf16.msra.mxu0 %v2003
        %2014 = vmatprep.subr.bf16.mxu0 0
        %2015 = vmatpush1.bf16.msra.mxu0 %v2002
        %2016 = vmatprep.subr.bf16.mxu0 0
        %2017 = vmatpush1.bf16.msra.mxu0 %v2001
        %2018 = vmatprep.subr.bf16.mxu0 0
        %2019 = vmatpush1.bf16.msra.mxu0 %v2000
        %2020 = vmatprep.subr.bf16.mxu0 0
        %2021 = vmatpush1.bf16.msra.mxu0 %v1999
        %2022 = vmatprep.subr.bf16.mxu0 0
        %2023 = vmatpush1.bf16.msra.mxu0 %v1998
        %2024 = vmatprep.subr.bf16.mxu0 0
        %2025 = vmatpush1.bf16.msra.mxu0 %v1997
        %2026 = vmatprep.subr.bf16.mxu0 0
        %2027 = vmatpush1.bf16.msra.mxu0 %v1996
        %2028 = vmatprep.subr.bf16.mxu0 0
        %2029 = vmatpush2.bf16.msra.mxu0 0
        %2030 = vmatprep.subr.bf16.mxu0 0
        %2031 = vmatpush2.bf16.msra.mxu0 0
        %2032 = vmatprep.subr.bf16.mxu0 0
        %2033 = vmatpush2.bf16.msra.mxu0 0
        %2034 = vmatprep.subr.bf16.mxu0 0
        %2035 = vmatpush2.bf16.msra.mxu0 0
        %2036 = vmatprep.subr.bf16.mxu0 0
        %2037 = vmatpush2.bf16.msra.mxu0 0
        %2038 = vmatprep.subr.bf16.mxu0 0
        %2039 = vmatpush2.bf16.msra.mxu0 0
        %2040 = vmatprep.subr.bf16.mxu0 0
        %2041 = vmatpush2.bf16.msra.mxu0 0
        %2042 = vmatprep.subr.bf16.mxu0 0
        %2043 = vmatpush2.bf16.msra.mxu0 0
        %2044 = vmatprep.mubr.bf16.mxu0 0
        %2045 = vmatmul.mubr.bf16.gmra.mxu0 %v1960
        %v2046 = vpop.f32.mrf.mxu0
        %v2047 = vadd.f32 0.0, %v2046
        %v2048 = vpop.f32.mrf.mxu0
        %v2049 = vpop.f32.mrf.mxu0
        %v2050 = vadd.f32 0.0, %v2049
        %v2051 = vpop.f32.mrf.mxu0
        %2052 = vmatprep.mubr.bf16.mxu0 0
        %2053 = vmatmul.mubr.bf16.gmra.mxu0 %v1961
        %v2054 = vpop.f32.mrf.mxu0
        %v2055 = vadd.f32 0.0, %v2054
        %v2056 = vpop.f32.mrf.mxu0
        %v2057 = vpop.f32.mrf.mxu0
        %v2058 = vadd.f32 0.0, %v2057
        %v2059 = vpop.f32.mrf.mxu0
        %2060 = vdwg.mxu0
        %v2061 = vld [vmem:[%s966] sm:$0xf]
        %v2062 = vld [vmem:[%s966 + $0x4] sm:$0xf]
        %v2063 = vld [vmem:[%s966 + $0x8] sm:$0xf]
        %v2064 = vld [vmem:[%s966 + $0xc] sm:$0xf]
        %v2065 = vld [vmem:[%s966 + $0x10] sm:$0xf]
        %v2066 = vld [vmem:[%s966 + $0x14] sm:$0xf]
        %v2067 = vld [vmem:[%s966 + $0x18] sm:$0xf]
        %v2068 = vld [vmem:[%s966 + $0x1c] sm:$0xf]
        %v2069 = vld [vmem:[%s966 + $0x20] sm:$0xf]
        %v2070 = vld [vmem:[%s966 + $0x24] sm:$0xf]
        %v2071 = vld [vmem:[%s966 + $0x28] sm:$0xf]
        %v2072 = vld [vmem:[%s966 + $0x2c] sm:$0xf]
        %v2073 = vld [vmem:[%s966 + $0x30] sm:$0xf]
        %v2074 = vld [vmem:[%s966 + $0x34] sm:$0xf]
        %v2075 = vld [vmem:[%s966 + $0x38] sm:$0xf]
        %v2076 = vld [vmem:[%s966 + $0x3c] sm:$0xf]
        %v2077 = vld [vmem:[%s966 + $0x40] sm:$0xf]
        %v2078 = vld [vmem:[%s966 + $0x44] sm:$0xf]
        %v2079 = vld [vmem:[%s966 + $0x48] sm:$0xf]
        %v2080 = vld [vmem:[%s966 + $0x4c] sm:$0xf]
        %v2081 = vld [vmem:[%s966 + $0x50] sm:$0xf]
        %v2082 = vld [vmem:[%s966 + $0x54] sm:$0xf]
        %v2083 = vld [vmem:[%s966 + $0x58] sm:$0xf]
        %v2084 = vld [vmem:[%s966 + $0x5c] sm:$0xf]
        %v2085 = vld [vmem:[%s966 + $0x60] sm:$0xf]
        %v2086 = vld [vmem:[%s966 + $0x64] sm:$0xf]
        %v2087 = vld [vmem:[%s966 + $0x68] sm:$0xf]
        %v2088 = vld [vmem:[%s966 + $0x6c] sm:$0xf]
        %v2089 = vld [vmem:[%s966 + $0x70] sm:$0xf]
        %v2090 = vld [vmem:[%s966 + $0x74] sm:$0xf]
        %v2091 = vld [vmem:[%s966 + $0x78] sm:$0xf]
        %v2092 = vld [vmem:[%s966 + $0x7c] sm:$0xf]
        %v2093 = vld [vmem:[%s966 + $0x80] sm:$0xf]
        %v2094 = vld [vmem:[%s966 + $0x84] sm:$0xf]
        %v2095 = vld [vmem:[%s966 + $0x88] sm:$0xf]
        %v2096 = vld [vmem:[%s966 + $0x8c] sm:$0xf]
        %v2097 = vld [vmem:[%s966 + $0x90] sm:$0xf]
        %v2098 = vld [vmem:[%s966 + $0x94] sm:$0xf]
        %v2099 = vld [vmem:[%s966 + $0x98] sm:$0xf]
        %v2100 = vld [vmem:[%s966 + $0x9c] sm:$0xf]
        %v2101 = vld [vmem:[%s966 + $0xa0] sm:$0xf]
        %v2102 = vld [vmem:[%s966 + $0xa4] sm:$0xf]
        %v2103 = vld [vmem:[%s966 + $0xa8] sm:$0xf]
        %v2104 = vld [vmem:[%s966 + $0xac] sm:$0xf]
        %v2105 = vld [vmem:[%s966 + $0xb0] sm:$0xf]
        %v2106 = vld [vmem:[%s966 + $0xb4] sm:$0xf]
        %v2107 = vld [vmem:[%s966 + $0xb8] sm:$0xf]
        %v2108 = vld [vmem:[%s966 + $0xbc] sm:$0xf]
        %v2109 = vld [vmem:[%s966 + $0xc0] sm:$0xf]
        %v2110 = vld [vmem:[%s966 + $0xc4] sm:$0xf]
        %v2111 = vld [vmem:[%s966 + $0xc8] sm:$0xf]
        %v2112 = vld [vmem:[%s966 + $0xcc] sm:$0xf]
        %v2113 = vld [vmem:[%s966 + $0xd0] sm:$0xf]
        %v2114 = vld [vmem:[%s966 + $0xd4] sm:$0xf]
        %v2115 = vld [vmem:[%s966 + $0xd8] sm:$0xf]
        %v2116 = vld [vmem:[%s966 + $0xdc] sm:$0xf]
        %v2117 = vld [vmem:[%s966 + $0xe0] sm:$0xf]
        %v2118 = vld [vmem:[%s966 + $0xe4] sm:$0xf]
        %v2119 = vld [vmem:[%s966 + $0xe8] sm:$0xf]
        %v2120 = vld [vmem:[%s966 + $0xec] sm:$0xf]
        %v2121 = vld [vmem:[%s966 + $0xf0] sm:$0xf]
        %v2122 = vld [vmem:[%s966 + $0xf4] sm:$0xf]
        %v2123 = vld [vmem:[%s966 + $0xf8] sm:$0xf]
        %v2124 = vld [vmem:[%s966 + $0xfc] sm:$0xf]
        %v2141 = vunpack.c.l.b16 %v2061
        %v2142 = vunpack.c.l.b16 %v2062
        %v2143 = vunpack.c.l.b16 %v2063
        %v2144 = vunpack.c.l.b16 %v2064
        %v2145 = vunpack.c.l.b16 %v2065
        %v2146 = vunpack.c.l.b16 %v2066
        %v2147 = vunpack.c.l.b16 %v2067
        %v2148 = vunpack.c.l.b16 %v2068
        %v2149 = vunpack.c.l.b16 %v2069
        %v2150 = vunpack.c.l.b16 %v2070
        %v2151 = vunpack.c.l.b16 %v2071
        %v2152 = vunpack.c.l.b16 %v2072
        %v2153 = vunpack.c.l.b16 %v2073
        %v2154 = vunpack.c.l.b16 %v2074
        %v2155 = vunpack.c.l.b16 %v2075
        %v2156 = vunpack.c.l.b16 %v2076
        %v2157 = vpack.c.b16 %v2142, %v2141
        %v2158 = vpack.c.b16 %v2144, %v2143
        %v2159 = vpack.c.b16 %v2146, %v2145
        %v2160 = vpack.c.b16 %v2148, %v2147
        %v2161 = vpack.c.b16 %v2150, %v2149
        %v2162 = vpack.c.b16 %v2152, %v2151
        %v2163 = vpack.c.b16 %v2154, %v2153
        %v2164 = vpack.c.b16 %v2156, %v2155
        %2173 = vmatprep.subr.bf16.mxu0 0
        %2174 = vmatpush1.bf16.msra.mxu0 %v2164
        %2175 = vmatprep.subr.bf16.mxu0 0
        %2176 = vmatpush1.bf16.msra.mxu0 %v2163
        %2177 = vmatprep.subr.bf16.mxu0 0
        %2178 = vmatpush1.bf16.msra.mxu0 %v2162
        %2179 = vmatprep.subr.bf16.mxu0 0
        %2180 = vmatpush1.bf16.msra.mxu0 %v2161
        %2181 = vmatprep.subr.bf16.mxu0 0
        %2182 = vmatpush1.bf16.msra.mxu0 %v2160
        %2183 = vmatprep.subr.bf16.mxu0 0
        %2184 = vmatpush1.bf16.msra.mxu0 %v2159
        %2185 = vmatprep.subr.bf16.mxu0 0
        %2186 = vmatpush1.bf16.msra.mxu0 %v2158
        %2187 = vmatprep.subr.bf16.mxu0 0
        %2188 = vmatpush1.bf16.msra.mxu0 %v2157
        %2189 = vmatprep.subr.bf16.mxu0 0
        %2190 = vmatpush2.bf16.msra.mxu0 0
        %2191 = vmatprep.subr.bf16.mxu0 0
        %2192 = vmatpush2.bf16.msra.mxu0 0
        %2193 = vmatprep.subr.bf16.mxu0 0
        %2194 = vmatpush2.bf16.msra.mxu0 0
        %2195 = vmatprep.subr.bf16.mxu0 0
        %2196 = vmatpush2.bf16.msra.mxu0 0
        %2197 = vmatprep.subr.bf16.mxu0 0
        %2198 = vmatpush2.bf16.msra.mxu0 0
        %2199 = vmatprep.subr.bf16.mxu0 0
        %2200 = vmatpush2.bf16.msra.mxu0 0
        %2201 = vmatprep.subr.bf16.mxu0 0
        %2202 = vmatpush2.bf16.msra.mxu0 0
        %2203 = vmatprep.subr.bf16.mxu0 0
        %2204 = vmatpush2.bf16.msra.mxu0 0
        %2205 = vmatprep.mubr.bf16.mxu0 0
        %2206 = vmatmul.mubr.bf16.gmra.mxu0 %v1932
        %v2207 = vpop.f32.mrf.mxu0
        %v2208 = vadd.f32 0.0, %v2207
        %v2209 = vpop.f32.mrf.mxu0
        %v2210 = vpop.f32.mrf.mxu0
        %v2211 = vpop.f32.mrf.mxu0
        %2212 = vdwg.mxu0
        %v2229 = vunpack.c.l.b16 %v2077
        %v2230 = vunpack.c.l.b16 %v2078
        %v2231 = vunpack.c.l.b16 %v2079
        %v2232 = vunpack.c.l.b16 %v2080
        %v2233 = vunpack.c.l.b16 %v2081
        %v2234 = vunpack.c.l.b16 %v2082
        %v2235 = vunpack.c.l.b16 %v2083
        %v2236 = vunpack.c.l.b16 %v2084
        %v2237 = vunpack.c.l.b16 %v2085
        %v2238 = vunpack.c.l.b16 %v2086
        %v2239 = vunpack.c.l.b16 %v2087
        %v2240 = vunpack.c.l.b16 %v2088
        %v2241 = vunpack.c.l.b16 %v2089
        %v2242 = vunpack.c.l.b16 %v2090
        %v2243 = vunpack.c.l.b16 %v2091
        %v2244 = vunpack.c.l.b16 %v2092
        %v2245 = vpack.c.b16 %v2230, %v2229
        %v2246 = vpack.c.b16 %v2232, %v2231
        %v2247 = vpack.c.b16 %v2234, %v2233
        %v2248 = vpack.c.b16 %v2236, %v2235
        %v2249 = vpack.c.b16 %v2238, %v2237
        %v2250 = vpack.c.b16 %v2240, %v2239
        %v2251 = vpack.c.b16 %v2242, %v2241
        %v2252 = vpack.c.b16 %v2244, %v2243
        %2261 = vmatprep.subr.bf16.mxu0 0
        %2262 = vmatpush1.bf16.msra.mxu0 %v2252
        %2263 = vmatprep.subr.bf16.mxu0 0
        %2264 = vmatpush1.bf16.msra.mxu0 %v2251
        %2265 = vmatprep.subr.bf16.mxu0 0
        %2266 = vmatpush1.bf16.msra.mxu0 %v2250
        %2267 = vmatprep.subr.bf16.mxu0 0
        %2268 = vmatpush1.bf16.msra.mxu0 %v2249
        %2269 = vmatprep.subr.bf16.mxu0 0
        %2270 = vmatpush1.bf16.msra.mxu0 %v2248
        %2271 = vmatprep.subr.bf16.mxu0 0
        %2272 = vmatpush1.bf16.msra.mxu0 %v2247
        %2273 = vmatprep.subr.bf16.mxu0 0
        %2274 = vmatpush1.bf16.msra.mxu0 %v2246
        %2275 = vmatprep.subr.bf16.mxu0 0
        %2276 = vmatpush1.bf16.msra.mxu0 %v2245
        %2277 = vmatprep.subr.bf16.mxu0 0
        %2278 = vmatpush2.bf16.msra.mxu0 0
        %2279 = vmatprep.subr.bf16.mxu0 0
        %2280 = vmatpush2.bf16.msra.mxu0 0
        %2281 = vmatprep.subr.bf16.mxu0 0
        %2282 = vmatpush2.bf16.msra.mxu0 0
        %2283 = vmatprep.subr.bf16.mxu0 0
        %2284 = vmatpush2.bf16.msra.mxu0 0
        %2285 = vmatprep.subr.bf16.mxu0 0
        %2286 = vmatpush2.bf16.msra.mxu0 0
        %2287 = vmatprep.subr.bf16.mxu0 0
        %2288 = vmatpush2.bf16.msra.mxu0 0
        %2289 = vmatprep.subr.bf16.mxu0 0
        %2290 = vmatpush2.bf16.msra.mxu0 0
        %2291 = vmatprep.subr.bf16.mxu0 0
        %2292 = vmatpush2.bf16.msra.mxu0 0
        %2293 = vmatprep.mubr.bf16.mxu0 0
        %2294 = vmatmul.mubr.bf16.gmra.mxu0 %v1933
        %v2295 = vpop.f32.mrf.mxu0
        %v2296 = vadd.f32 0.0, %v2295
        %v2297 = vpop.f32.mrf.mxu0
        %v2298 = vpop.f32.mrf.mxu0
        %v2299 = vpop.f32.mrf.mxu0
        %2300 = vdwg.mxu0
        %v2317 = vunpack.c.l.b16 %v2093
        %v2318 = vunpack.c.l.b16 %v2094
        %v2319 = vunpack.c.l.b16 %v2095
        %v2320 = vunpack.c.l.b16 %v2096
        %v2321 = vunpack.c.l.b16 %v2097
        %v2322 = vunpack.c.l.b16 %v2098
        %v2323 = vunpack.c.l.b16 %v2099
        %v2324 = vunpack.c.l.b16 %v2100
        %v2325 = vunpack.c.l.b16 %v2101
        %v2326 = vunpack.c.l.b16 %v2102
        %v2327 = vunpack.c.l.b16 %v2103
        %v2328 = vunpack.c.l.b16 %v2104
        %v2329 = vunpack.c.l.b16 %v2105
        %v2330 = vunpack.c.l.b16 %v2106
        %v2331 = vunpack.c.l.b16 %v2107
        %v2332 = vunpack.c.l.b16 %v2108
        %v2333 = vpack.c.b16 %v2318, %v2317
        %v2334 = vpack.c.b16 %v2320, %v2319
        %v2335 = vpack.c.b16 %v2322, %v2321
        %v2336 = vpack.c.b16 %v2324, %v2323
        %v2337 = vpack.c.b16 %v2326, %v2325
        %v2338 = vpack.c.b16 %v2328, %v2327
        %v2339 = vpack.c.b16 %v2330, %v2329
        %v2340 = vpack.c.b16 %v2332, %v2331
        %2349 = vmatprep.subr.bf16.mxu0 0
        %2350 = vmatpush1.bf16.msra.mxu0 %v2340
        %2351 = vmatprep.subr.bf16.mxu0 0
        %2352 = vmatpush1.bf16.msra.mxu0 %v2339
        %2353 = vmatprep.subr.bf16.mxu0 0
        %2354 = vmatpush1.bf16.msra.mxu0 %v2338
        %2355 = vmatprep.subr.bf16.mxu0 0
        %2356 = vmatpush1.bf16.msra.mxu0 %v2337
        %2357 = vmatprep.subr.bf16.mxu0 0
        %2358 = vmatpush1.bf16.msra.mxu0 %v2336
        %2359 = vmatprep.subr.bf16.mxu0 0
        %2360 = vmatpush1.bf16.msra.mxu0 %v2335
        %2361 = vmatprep.subr.bf16.mxu0 0
        %2362 = vmatpush1.bf16.msra.mxu0 %v2334
        %2363 = vmatprep.subr.bf16.mxu0 0
        %2364 = vmatpush1.bf16.msra.mxu0 %v2333
        %2365 = vmatprep.subr.bf16.mxu0 0
        %2366 = vmatpush2.bf16.msra.mxu0 0
        %2367 = vmatprep.subr.bf16.mxu0 0
        %2368 = vmatpush2.bf16.msra.mxu0 0
        %2369 = vmatprep.subr.bf16.mxu0 0
        %2370 = vmatpush2.bf16.msra.mxu0 0
        %2371 = vmatprep.subr.bf16.mxu0 0
        %2372 = vmatpush2.bf16.msra.mxu0 0
        %2373 = vmatprep.subr.bf16.mxu0 0
        %2374 = vmatpush2.bf16.msra.mxu0 0
        %2375 = vmatprep.subr.bf16.mxu0 0
        %2376 = vmatpush2.bf16.msra.mxu0 0
        %2377 = vmatprep.subr.bf16.mxu0 0
        %2378 = vmatpush2.bf16.msra.mxu0 0
        %2379 = vmatprep.subr.bf16.mxu0 0
        %2380 = vmatpush2.bf16.msra.mxu0 0
        %2381 = vmatprep.mubr.bf16.mxu0 0
        %2382 = vmatmul.mubr.bf16.gmra.mxu0 %v1934
        %v2383 = vpop.f32.mrf.mxu0
        %v2384 = vadd.f32 0.0, %v2383
        %v2385 = vpop.f32.mrf.mxu0
        %v2386 = vpop.f32.mrf.mxu0
        %v2387 = vpop.f32.mrf.mxu0
        %2388 = vdwg.mxu0
        %v2405 = vunpack.c.l.b16 %v2109
        %v2406 = vunpack.c.l.b16 %v2110
        %v2407 = vunpack.c.l.b16 %v2111
        %v2408 = vunpack.c.l.b16 %v2112
        %v2409 = vunpack.c.l.b16 %v2113
        %v2410 = vunpack.c.l.b16 %v2114
        %v2411 = vunpack.c.l.b16 %v2115
        %v2412 = vunpack.c.l.b16 %v2116
        %v2413 = vunpack.c.l.b16 %v2117
        %v2414 = vunpack.c.l.b16 %v2118
        %v2415 = vunpack.c.l.b16 %v2119
        %v2416 = vunpack.c.l.b16 %v2120
        %v2417 = vunpack.c.l.b16 %v2121
        %v2418 = vunpack.c.l.b16 %v2122
        %v2419 = vunpack.c.l.b16 %v2123
        %v2420 = vunpack.c.l.b16 %v2124
        %v2421 = vpack.c.b16 %v2406, %v2405
        %v2422 = vpack.c.b16 %v2408, %v2407
        %v2423 = vpack.c.b16 %v2410, %v2409
        %v2424 = vpack.c.b16 %v2412, %v2411
        %v2425 = vpack.c.b16 %v2414, %v2413
        %v2426 = vpack.c.b16 %v2416, %v2415
        %v2427 = vpack.c.b16 %v2418, %v2417
        %v2428 = vpack.c.b16 %v2420, %v2419
        %2437 = vmatprep.subr.bf16.mxu0 0
        %2438 = vmatpush1.bf16.msra.mxu0 %v2428
        %2439 = vmatprep.subr.bf16.mxu0 0
        %2440 = vmatpush1.bf16.msra.mxu0 %v2427
        %2441 = vmatprep.subr.bf16.mxu0 0
        %2442 = vmatpush1.bf16.msra.mxu0 %v2426
        %2443 = vmatprep.subr.bf16.mxu0 0
        %2444 = vmatpush1.bf16.msra.mxu0 %v2425
        %2445 = vmatprep.subr.bf16.mxu0 0
        %2446 = vmatpush1.bf16.msra.mxu0 %v2424
        %2447 = vmatprep.subr.bf16.mxu0 0
        %2448 = vmatpush1.bf16.msra.mxu0 %v2423
        %2449 = vmatprep.subr.bf16.mxu0 0
        %2450 = vmatpush1.bf16.msra.mxu0 %v2422
        %2451 = vmatprep.subr.bf16.mxu0 0
        %2452 = vmatpush1.bf16.msra.mxu0 %v2421
        %2453 = vmatprep.subr.bf16.mxu0 0
        %2454 = vmatpush2.bf16.msra.mxu0 0
        %2455 = vmatprep.subr.bf16.mxu0 0
        %2456 = vmatpush2.bf16.msra.mxu0 0
        %2457 = vmatprep.subr.bf16.mxu0 0
        %2458 = vmatpush2.bf16.msra.mxu0 0
        %2459 = vmatprep.subr.bf16.mxu0 0
        %2460 = vmatpush2.bf16.msra.mxu0 0
        %2461 = vmatprep.subr.bf16.mxu0 0
        %2462 = vmatpush2.bf16.msra.mxu0 0
        %2463 = vmatprep.subr.bf16.mxu0 0
        %2464 = vmatpush2.bf16.msra.mxu0 0
        %2465 = vmatprep.subr.bf16.mxu0 0
        %2466 = vmatpush2.bf16.msra.mxu0 0
        %2467 = vmatprep.subr.bf16.mxu0 0
        %2468 = vmatpush2.bf16.msra.mxu0 0
        %2469 = vmatprep.mubr.bf16.mxu0 0
        %2470 = vmatmul.mubr.bf16.gmra.mxu0 %v1935
        %v2471 = vpop.f32.mrf.mxu0
        %v2472 = vadd.f32 0.0, %v2471
        %v2473 = vpop.f32.mrf.mxu0
        %v2474 = vpop.f32.mrf.mxu0
        %v2475 = vpop.f32.mrf.mxu0
        %2476 = vdwg.mxu0
        %v2477 = vmul.f32 %v1799, %v2208
        %v2478 = vmul.f32 %v1804, %v2208
        %v2479 = vmul.f32 %v1809, %v2208
        %v2480 = vmul.f32 %v1814, %v2208
        %v2481 = vmul.f32 %v1822, %v2296
        %v2482 = vmul.f32 %v1826, %v2296
        %v2483 = vmul.f32 %v1830, %v2296
        %v2484 = vmul.f32 %v1834, %v2296
        %v2485 = vadd.f32 %v2477, %v2481
        %v2486 = vadd.f32 %v2478, %v2482
        %v2487 = vadd.f32 %v2479, %v2483
        %v2488 = vadd.f32 %v2480, %v2484
        %v2489 = vmul.f32 %v1846, %v2384
        %v2490 = vmul.f32 %v1850, %v2384
        %v2491 = vmul.f32 %v1854, %v2384
        %v2492 = vmul.f32 %v1858, %v2384
        %v2493 = vadd.f32 %v2485, %v2489
        %v2494 = vadd.f32 %v2486, %v2490
        %v2495 = vadd.f32 %v2487, %v2491
        %v2496 = vadd.f32 %v2488, %v2492
        %v2497 = vmul.f32 %v1870, %v2472
        %v2498 = vmul.f32 %v1874, %v2472
        %v2499 = vmul.f32 %v1878, %v2472
        %v2500 = vmul.f32 %v1882, %v2472
        %v2501 = vadd.f32 %v2493, %v2497
        %v2502 = vadd.f32 %v2494, %v2498
        %v2503 = vadd.f32 %v2495, %v2499
        %v2504 = vadd.f32 %v2496, %v2500
        %v2505 = vadd.f32 %v2047, %v2501
        %v2506 = vadd.f32 %v2050, %v2502
        %v2507 = vadd.f32 %v2055, %v2503
        %v2508 = vadd.f32 %v2058, %v2504
        // Predicated region
        $region233: #{tpu_custom_call.1} parent=211 // pred_check
          %p2509 = pneg %p1052
        $region234: #{tpu_custom_call.1} parent=211 // pred_check_branch
          %2511 = sbr.rel (%p2509) target = $region236
        $region235: #{tpu_custom_call.1} parent=211 // pred_region
          %v2512 = vld [vmem:[%s6] sm:$0x1]
          %v2514 = vlaneseq
          %v2515 = vshrl.u32 %v2514, 7
          %v2516 = vsub.s32 0, %v2515
          %v2517 = vrot.slane %v2512, %v2516
          %v2519 = vadd.f32 %v2505, %v2517
          %v2520 = vadd.f32 %v2506, %v2517
          %v2521 = vadd.f32 %v2507, %v2517
          %v2522 = vadd.f32 %v2508, %v2517
          %2523 = vst.msk [vmem:[%s1029] sm:$0xff] %vm1504, %v2519
          %2524 = vst.msk [vmem:[%s1029 + $0x8] sm:$0xff] %vm1504, %v2520
          %2525 = vst.msk [vmem:[%s1029 + $0x10] sm:$0xff] %vm1504, %v2521
          %2526 = vst.msk [vmem:[%s1029 + $0x18] sm:$0xff] %vm1504, %v2522
        $region236: #{tpu_custom_call.1} parent=211 // pred_fallthru
          _
        %p2527 = scmp.ne.s32.totalorder %s32, 0
        // Predicated region
        $region237: #{tpu_custom_call.1} parent=211 // pred_check
          %p2528 = pneg %p2527
        $region238: #{tpu_custom_call.1} parent=211 // pred_check_branch
          %2530 = sbr.rel (%p2528) target = $region240
        $region239: #{tpu_custom_call.1} parent=211 // pred_region
          %v2531 = vld [vmem:[%s1029] sm:$0xff]
          %v2532 = vld [vmem:[%s1029 + $0x8] sm:$0xff]
          %v2533 = vld [vmem:[%s1029 + $0x10] sm:$0xff]
          %v2534 = vld [vmem:[%s1029 + $0x18] sm:$0xff]
          %v2535 = vadd.f32 %v2531, %v2505
          %v2536 = vadd.f32 %v2532, %v2506
          %v2537 = vadd.f32 %v2533, %v2507
          %v2538 = vadd.f32 %v2534, %v2508
          %2539 = vst.msk [vmem:[%s1029] sm:$0xff] %vm1504, %v2535
          %2540 = vst.msk [vmem:[%s1029 + $0x8] sm:$0xff] %vm1504, %v2536
          %2541 = vst.msk [vmem:[%s1029 + $0x10] sm:$0xff] %vm1504, %v2537
          %2542 = vst.msk [vmem:[%s1029 + $0x18] sm:$0xff] %vm1504, %v2538
        $region240: #{tpu_custom_call.1} parent=211 // pred_fallthru
          _
        %s2543 = sand.u32 %s327, 1
        %s2544 = scalar_lea.sflag [#allocation8], %s2543
        %s2545 = sand.u32 %s327, 1
        %s2546 = smul.addr %s2545, 32
        %s2547 = scalar_lea.vmem [#allocation7], %s2546
        // Predicated region
        $region241: #{tpu_custom_call.1} parent=211 // pred_check
          %p2548 = pneg %p337
        $region242: #{tpu_custom_call.1} parent=211 // pred_check_branch
          %2550 = sbr.rel (%p2548) target = $region244
        $region243: #{tpu_custom_call.1} parent=211 // pred_region
          %s2552 = ssub.s32 512, 512
          %2553 = vsyncadd %s2544, %s2552
          %s2554 = smul.addr %s30, 2
          %s2555 = sadd.s32 %s31, %s2554
          %s2556 = smul.addr %s2555, 128
          %s2557 = scalar_lea.hbm %s11, %s2556
          %s2558 = sshll.u32 %s2547, 4
          %s2559 = int_to_ptr.vmem [resolvable:$true] %s2558
          %2564 = dma.vmem_to_hbm [thread:$0]  %s2559, 512, %s2557, %s2544, 128, 512, 8
        $region244: #{tpu_custom_call.1} parent=211 // pred_fallthru
          _
      $region212: #{tpu_custom_call.1} parent=5 // pred_fallthru
        _
      %p2565 = scmp.le.s32.totalorder 2, %s20
      // Predicated region
      $region245: #{tpu_custom_call.1} parent=5 // pred_check
        %p2566 = pneg %p2565
      $region246: #{tpu_custom_call.1} parent=5 // pred_check_branch
        %2568 = sbr.rel (%p2566) target = $region248
      $region247: #{tpu_custom_call.1} parent=5 // pred_region
        %s2569 = ssub.s32 %s20, 2
        // Predicated region
        $region249: #{tpu_custom_call.1} parent=247 // pred_check
          %p2570 = pneg %p343
        $region250: #{tpu_custom_call.1} parent=247 // pred_check_branch
          %2572 = sbr.rel (%p2570) target = $region252
        $region251: #{tpu_custom_call.1} parent=247 // pred_region
          %s2573 = sand.u32 %s328, 1
          %s2574 = scalar_lea.sflag [#allocation8], %s2573
          %s2575 = sand.u32 %s328, 1
          %s2576 = smul.addr %s2575, 32
          %s2577 = scalar_lea.vmem [#allocation7], %s2576
          %2578 = dma.done %s2574, 512
        $region252: #{tpu_custom_call.1} parent=247 // pred_fallthru
          _
      $region248: #{tpu_custom_call.1} parent=5 // pred_fallthru
        _
    $region6: #{tpu_custom_call.1} parent=1 // loop_footer
      %s24 = sadd.s32 1, %s20
    $region7: #{tpu_custom_call.1} parent=1 // loop_footer_branch
      %19 = sbr.rel target = $region3
    $region8: #{tpu_custom_call.1} parent=1 // loop_exit
      _
    %2579 = vsyncpa [#allocation8], 1
    %s2580 = scalar_lea.sflag [#allocation8], 1
    %2581 = vsyncpa %s2580, 1

</llo_original>
